<compile_context>
chip_gen: v7x
topology: tpu7x:2x2x1
jax: 0.10.0
libtpu: 0.0.40
codegen_flags: <defaults>
</compile_context>

<pallas_src>
import jax
import jax.numpy as jnp
from jax.experimental import pallas as pl
from jax.experimental.pallas import tpu as pltpu


# ----------------------------------------------------------------------------
# Fused kernel: adjacency build + GATConv1 (8 heads) + GATConv2 + MLP + sigmoid
# ----------------------------------------------------------------------------
def gat_critic_kernel(x_ref, esrc_ref, edst_ref,
                      w1_ref, as1_ref, ad1_ref, b1_ref,
                      w2_ref, as2_ref, ad2_ref, b2_ref,
                      sel_ref, wm1_ref, bm1_ref, wm2_ref, bm2_ref,
                      wo_ref, bo_ref, out_ref):
    f32 = jnp.float32
    N = x_ref.shape[0]              # total nodes = B * num_nodes
    E = esrc_ref.shape[0]           # total edges after batching
    heads = w1_ref.shape[0]
    embed = w2_ref.shape[2]
    nn_nodes = sel_ref.shape[0]
    B = sel_ref.shape[1]
    hidden = wm1_ref.shape[2]

    # ---- dense adjacency (with self loops) built on the MXU from edge list
    src = esrc_ref[...]                                           # (E, 1) i32
    dst = edst_ref[...]                                           # (1, E) i32
    src_oh = (jax.lax.broadcasted_iota(jnp.int32, (E, N), 1) == src).astype(f32)
    dst_ohT = (jax.lax.broadcasted_iota(jnp.int32, (N, E), 0) == dst).astype(f32)
    adj_cnt = jnp.dot(dst_ohT, src_oh, preferred_element_type=f32)  # (N, N)
    row_i = jax.lax.broadcasted_iota(jnp.int32, (N, N), 0)
    col_j = jax.lax.broadcasted_iota(jnp.int32, (N, N), 1)
    adj = jnp.logical_or(adj_cnt > 0.5, row_i == col_j)           # bool (N, N)

    def masked_softmax(scores):
        s = jnp.maximum(scores, 0.2 * scores)                     # LeakyReLU(0.2)
        s = jnp.where(adj, s, -1e30)
        s = s - jnp.max(s, axis=-1, keepdims=True)
        p = jnp.exp(s)
        return p / jnp.sum(p, axis=-1, keepdims=True)

    x = x_ref[...]                                                # (N, 3)
    as1 = as1_ref[...]                                            # (heads, H)
    ad1 = ad1_ref[...]                                            # (heads, H)
    b1 = b1_ref[...]                                              # (heads, H)

    # ---- GATConv 1 (8 heads, concat) fused with conv2's input projection:
    #      x2 = sum_h elu(head_h + bias1_h) @ W2[h]
    x2 = jnp.zeros((N, embed), f32)
    for h in range(heads):
        xh = jnp.dot(x, w1_ref[h], preferred_element_type=f32)     # (N, H)
        a_dst = jnp.sum(xh * ad1[h:h + 1, :], axis=-1, keepdims=True)   # (N, 1)
        a_src = jax.lax.dot_general(as1[h:h + 1, :], xh,
                                    (((1,), (1,)), ((), ())),
                                    preferred_element_type=f32)     # (1, N)
        alpha = masked_softmax(a_dst + a_src)                       # (N, N)
        head = jnp.dot(alpha, xh, preferred_element_type=f32) + b1[h:h + 1, :]
        head = jnp.where(head > 0, head, jnp.exp(head) - 1.0)       # ELU
        x2 = x2 + jnp.dot(head, w2_ref[h], preferred_element_type=f32)

    # ---- GATConv 2 (1 head, concat=False)
    a_dst2 = jnp.sum(x2 * ad2_ref[...], axis=-1, keepdims=True)     # (N, 1)
    a_src2 = jax.lax.dot_general(as2_ref[...], x2,
                                 (((1,), (1,)), ((), ())),
                                 preferred_element_type=f32)        # (1, N)
    alpha2 = masked_softmax(a_dst2 + a_src2)
    g = jnp.dot(alpha2, x2, preferred_element_type=f32) + b2_ref[...]
    g = jnp.where(g > 0, g, jnp.exp(g) - 1.0)                       # ELU

    # ---- MLP head; (N, embed) -> (B, nn*embed) flatten via selection matmuls
    acc = jnp.zeros((B, hidden), f32) + bm1_ref[...]
    for n in range(nn_nodes):
        g_n = jnp.dot(sel_ref[n], g, preferred_element_type=f32)    # (B, embed)
        acc = acc + jnp.dot(g_n, wm1_ref[n], preferred_element_type=f32)
    hid = jnp.maximum(acc, 0.0)
    hid = jnp.maximum(
        jnp.dot(hid, wm2_ref[...], preferred_element_type=f32) + bm2_ref[...],
        0.0)
    z = jnp.dot(hid, wo_ref[...], preferred_element_type=f32) + bo_ref[...]
    out_ref[...] = 1.0 / (1.0 + jnp.exp(-z))                        # sigmoid


def gat_critic_pallas(m, x, esrc, edst, sel):
    B = sel.shape[1]
    nn_nodes = sel.shape[0]
    vmem = pl.BlockSpec(memory_space=pltpu.MemorySpace.VMEM)
    return pl.pallas_call(
        gat_critic_kernel,
        out_shape=jax.ShapeDtypeStruct((B, nn_nodes), jnp.float32),
        in_specs=[vmem] * 18,
        out_specs=vmem,
    )(x, esrc, edst,
      m.w1, m.as1, m.ad1, m.b1,
      m.w2, m.as2, m.ad2, m.b2,
      sel, m.wm1, m.bm1, m.wm2, m.bm2,
      m.wo, m.bo)


# ----------------------------------------------------------------------------
# Module wrapper (parameters + cheap index/stack glue in plain JAX)
# ----------------------------------------------------------------------------
class GATCriticPallas:
    def __init__(self, embed_size, hidden_size, num_nodes, num_conv_layers=2,
                 num_mlp_layers=2, dropout=0.6, key=None):
        # TODO(synk): only the default num_mlp_layers=2 is unrolled here.
        assert num_mlp_layers == 2
        heads = 8
        self.num_nodes = num_nodes
        if key is None:
            key = jax.random.PRNGKey(0)
        ks = jax.random.split(key, 16)
        s = 0.3
        # conv1: GATConv(3, hidden, heads=8, concat=True)
        self.w1 = s * jax.random.normal(ks[0], (heads, 3, hidden_size), jnp.float32)
        self.as1 = s * jax.random.normal(ks[1], (heads, hidden_size), jnp.float32)
        self.ad1 = s * jax.random.normal(ks[2], (heads, hidden_size), jnp.float32)
        self.b1 = s * jax.random.normal(ks[3], (heads, hidden_size), jnp.float32)
        # conv2: GATConv(8*hidden, embed, heads=1, concat=False)
        self.w2 = s * jax.random.normal(ks[4], (heads, hidden_size, embed_size), jnp.float32)
        self.as2 = s * jax.random.normal(ks[5], (1, embed_size), jnp.float32)
        self.ad2 = s * jax.random.normal(ks[6], (1, embed_size), jnp.float32)
        self.b2 = s * jax.random.normal(ks[7], (1, embed_size), jnp.float32)
        # MLP: Linear(nn*embed, hidden), Linear(hidden, hidden), Linear(hidden, nn)
        self.wm1 = s * jax.random.normal(ks[8], (num_nodes, embed_size, hidden_size), jnp.float32)
        self.bm1 = s * jax.random.normal(ks[9], (1, hidden_size), jnp.float32)
        self.wm2 = s * jax.random.normal(ks[10], (hidden_size, hidden_size), jnp.float32)
        self.bm2 = s * jax.random.normal(ks[11], (1, hidden_size), jnp.float32)
        self.wo = s * jax.random.normal(ks[12], (hidden_size, num_nodes), jnp.float32)
        self.bo = s * jax.random.normal(ks[13], (1, num_nodes), jnp.float32)

    def __call__(self, actions, node_features, edge_index):
        B, _, nn_nodes = node_features.shape
        assert nn_nodes == self.num_nodes
        N = B * nn_nodes
        nf = jnp.squeeze(node_features.astype(jnp.float32))          # (B, nn)
        x = jnp.stack([actions[:, :, 0].astype(jnp.float32),
                       actions[:, :, 1].astype(jnp.float32), nf], axis=2)
        x = x.reshape(N, 3)
        # same per-batch offset + (2, B*E) reshape as the torch code
        offs = (jnp.arange(B, dtype=edge_index.dtype) * nn_nodes)[:, None, None]
        eib = (edge_index + offs).reshape(2, B * edge_index.shape[2])
        esrc = eib[0].astype(jnp.int32).reshape(-1, 1)                # (E_tot, 1)
        edst = eib[1].astype(jnp.int32).reshape(1, -1)                # (1, E_tot)
        # constant one-hot selection matrices: sel[n, b, b*nn + n] = 1
        sel = (jnp.arange(N)[None, None, :] ==
               (jnp.arange(B)[None, :, None] * nn_nodes +
                jnp.arange(nn_nodes)[:, None, None])).astype(jnp.float32)
        return gat_critic_pallas(self, x, esrc, edst, sel)


# ----------------------------------------------------------------------------
# Pure-JAX reference (independent path: scatter-built adjacency, reshapes)
# ----------------------------------------------------------------------------
def reference_forward(m, actions, node_features, edge_index):
    B, _, nn_nodes = node_features.shape
    heads, _, H = m.w1.shape
    embed = m.w2.shape[2]
    hidden = m.wm2.shape[0]
    N = B * nn_nodes
    nf = jnp.squeeze(node_features.astype(jnp.float32))
    x = jnp.stack([actions[:, :, 0].astype(jnp.float32),
                   actions[:, :, 1].astype(jnp.float32), nf], axis=2).reshape(N, 3)
    offs = (jnp.arange(B, dtype=edge_index.dtype) * nn_nodes)[:, None, None]
    eib = (edge_index + offs).reshape(2, -1)
    adj = jnp.zeros((N, N), dtype=bool).at[eib[1], eib[0]].set(True)
    adj = jnp.logical_or(adj, jnp.eye(N, dtype=bool))

    def attention(xh, a_src_vec, a_dst_vec):
        s = (xh @ a_dst_vec)[:, None] + (xh @ a_src_vec)[None, :]
        s = jnp.where(s > 0, s, 0.2 * s)
        s = jnp.where(adj, s, -1e30)
        s = s - s.max(axis=-1, keepdims=True)
        p = jnp.exp(s)
        return p / p.sum(axis=-1, keepdims=True)

    outs = []
    for h in range(heads):
        xh = x @ m.w1[h]
        outs.append(attention(xh, m.as1[h], m.ad1[h]) @ xh)
    h1 = jnp.concatenate(outs, axis=-1) + m.b1.reshape(1, heads * H)
    h1 = jnp.where(h1 > 0, h1, jnp.exp(h1) - 1.0)

    x2 = h1 @ m.w2.reshape(heads * H, embed)
    g = attention(x2, m.as2[0], m.ad2[0]) @ x2 + m.b2
    g = jnp.where(g > 0, g, jnp.exp(g) - 1.0)

    flat = g.reshape(B, nn_nodes * embed)
    hdd = jnp.maximum(flat @ m.wm1.reshape(nn_nodes * embed, hidden) + m.bm1, 0.0)
    hdd = jnp.maximum(hdd @ m.wm2 + m.bm2, 0.0)
    z = hdd @ m.wo + m.bo
    return 1.0 / (1.0 + jnp.exp(-z))


if __name__ == "__main__":
    embed_size, hidden_size, num_nodes = 32, 32, 8
    B, E = 2, 8

    key = jax.random.PRNGKey(0)
    k_par, k_act, k_nf = jax.random.split(key, 3)

    model = GATCriticPallas(embed_size, hidden_size, num_nodes,
                            num_conv_layers=2, num_mlp_layers=2, dropout=0.6,
                            key=k_par)

    actions = jax.random.uniform(k_act, (B, num_nodes, 2), jnp.float32)
    node_features = jax.random.normal(k_nf, (B, 1, num_nodes), jnp.float32)
    # deterministic, duplicate-free edge lists: ring (+1) for batch 0, ring (+3) for batch 1
    base = jnp.arange(num_nodes, dtype=jnp.int32)
    e0 = jnp.stack([base, (base + 1) % num_nodes])
    e1 = jnp.stack([base, (base + 3) % num_nodes])
    edge_index = jnp.stack([e0, e1])                       # (B, 2, E) int32

    out = model(actions, node_features, edge_index)
    out = jax.block_until_ready(out)

    ref = reference_forward(model, actions, node_features, edge_index)
    assert out.shape == (B, num_nodes), out.shape
    assert bool(jnp.all(jnp.isfinite(out)))
    assert jnp.allclose(out, ref, atol=1e-3, rtol=1e-3), (out, ref)

    print("KERNEL_OK")
</pallas_src>

<mosaic_0001>
module attributes {stable_mosaic.version = 11 : i64} {
  func.func @gat_critic_kernel(%arg0: memref<16x3xf32, #tpu.memory_space<vmem>>, %arg1: memref<16x1xi32, #tpu.memory_space<vmem>>, %arg2: memref<1x16xi32, #tpu.memory_space<vmem>>, %arg3: memref<8x3x32xf32, #tpu.memory_space<vmem>>, %arg4: memref<8x32xf32, #tpu.memory_space<vmem>>, %arg5: memref<8x32xf32, #tpu.memory_space<vmem>>, %arg6: memref<8x32xf32, #tpu.memory_space<vmem>>, %arg7: memref<8x32x32xf32, #tpu.memory_space<vmem>>, %arg8: memref<1x32xf32, #tpu.memory_space<vmem>>, %arg9: memref<1x32xf32, #tpu.memory_space<vmem>>, %arg10: memref<1x32xf32, #tpu.memory_space<vmem>>, %arg11: memref<8x2x16xf32, #tpu.memory_space<vmem>>, %arg12: memref<8x32x32xf32, #tpu.memory_space<vmem>>, %arg13: memref<1x32xf32, #tpu.memory_space<vmem>>, %arg14: memref<32x32xf32, #tpu.memory_space<vmem>>, %arg15: memref<1x32xf32, #tpu.memory_space<vmem>>, %arg16: memref<32x8xf32, #tpu.memory_space<vmem>>, %arg17: memref<1x8xf32, #tpu.memory_space<vmem>>, %arg18: memref<2x8xf32, #tpu.memory_space<vmem>>) attributes {dimension_semantics = [], scalar_prefetch = 0 : i64, scratch_operands = 0 : i64, tpu.core_type = #tpu.core_type<tc>} {
    %c0 = arith.constant 0 : index
    %c0_0 = arith.constant 0 : index
    %0 = vector.load %arg1[%c0, %c0_0] : memref<16x1xi32, #tpu.memory_space<vmem>>, vector<16x1xi32>
    %c0_1 = arith.constant 0 : index
    %c0_2 = arith.constant 0 : index
    %1 = vector.load %arg2[%c0_1, %c0_2] : memref<1x16xi32, #tpu.memory_space<vmem>>, vector<1x16xi32>
    %2 = tpu.iota {dimensions = array<i32: 1>} : vector<16x16xi32>
    %3 = vector.broadcast %0 : vector<16x1xi32> to vector<16x16xi32>
    %4 = arith.cmpi eq, %2, %3 : vector<16x16xi32>
    %5 = arith.extui %4 : vector<16x16xi1> to vector<16x16xi32>
    %6 = arith.sitofp %5 : vector<16x16xi32> to vector<16x16xf32>
    %7 = tpu.iota {dimensions = array<i32: 0>} : vector<16x16xi32>
    %8 = vector.broadcast %1 : vector<1x16xi32> to vector<16x16xi32>
    %9 = arith.cmpi eq, %7, %8 : vector<16x16xi32>
    %10 = arith.extui %9 : vector<16x16xi1> to vector<16x16xi32>
    %11 = arith.sitofp %10 : vector<16x16xi32> to vector<16x16xf32>
    %cst = arith.constant dense<0.000000e+00> : vector<16x16xf32>
    %12 = tpu.matmul %11, %6, %cst {dimension_numbers = #tpu.dot_dimension_numbers<[1], [0], [0], [1], [0, 0, 1, 1], [], []>} : vector<16x16xf32>, vector<16x16xf32>, vector<16x16xf32> -> vector<16x16xf32>
    %13 = tpu.iota {dimensions = array<i32: 0>} : vector<16x16xi32>
    %14 = tpu.iota {dimensions = array<i32: 1>} : vector<16x16xi32>
    %cst_3 = arith.constant 5.000000e-01 : f32
    %15 = vector.broadcast %cst_3 : f32 to vector<16x16xf32>
    %16 = arith.cmpf ogt, %12, %15 : vector<16x16xf32>
    %17 = arith.cmpi eq, %13, %14 : vector<16x16xi32>
    %18 = arith.ori %16, %17 : vector<16x16xi1>
    %c0_4 = arith.constant 0 : index
    %c0_5 = arith.constant 0 : index
    %19 = vector.load %arg0[%c0_4, %c0_5] : memref<16x3xf32, #tpu.memory_space<vmem>>, vector<16x3xf32>
    %c0_6 = arith.constant 0 : index
    %c0_7 = arith.constant 0 : index
    %20 = vector.load %arg4[%c0_6, %c0_7] : memref<8x32xf32, #tpu.memory_space<vmem>>, vector<8x32xf32>
    %c0_8 = arith.constant 0 : index
    %c0_9 = arith.constant 0 : index
    %21 = vector.load %arg5[%c0_8, %c0_9] : memref<8x32xf32, #tpu.memory_space<vmem>>, vector<8x32xf32>
    %c0_10 = arith.constant 0 : index
    %c0_11 = arith.constant 0 : index
    %22 = vector.load %arg6[%c0_10, %c0_11] : memref<8x32xf32, #tpu.memory_space<vmem>>, vector<8x32xf32>
    %cst_12 = arith.constant 0.000000e+00 : f32
    %23 = vector.broadcast %cst_12 : f32 to vector<16x32xf32>
    %c0_13 = arith.constant 0 : index
    %c0_14 = arith.constant 0 : index
    %c0_15 = arith.constant 0 : index
    %24 = vector.load %arg3[%c0_13, %c0_14, %c0_15] : memref<8x3x32xf32, #tpu.memory_space<vmem>>, vector<1x3x32xf32>
    %25 = vector.shape_cast %24 : vector<1x3x32xf32> to vector<3x32xf32>
    %cst_16 = arith.constant dense<0.000000e+00> : vector<16x32xf32>
    %26 = tpu.matmul %19, %25, %cst_16 {dimension_numbers = #tpu.dot_dimension_numbers<[1], [0], [0], [1], [0, 0, 1, 1], [], []>} : vector<16x3xf32>, vector<3x32xf32>, vector<16x32xf32> -> vector<16x32xf32>
    %27 = vector.extract_strided_slice %21 {offsets = [0, 0], sizes = [1, 32], strides = [1, 1]} : vector<8x32xf32> to vector<1x32xf32>
    %28 = vector.broadcast %27 : vector<1x32xf32> to vector<16x32xf32>
    %29 = arith.mulf %26, %28 : vector<16x32xf32>
    %cst_17 = arith.constant dense<0.000000e+00> : vector<16xf32>
    %30 = vector.multi_reduction <add>, %29, %cst_17 [1] : vector<16x32xf32> to vector<16xf32>
    %31 = vector.shape_cast %30 : vector<16xf32> to vector<16x1xf32>
    %32 = vector.extract_strided_slice %20 {offsets = [0, 0], sizes = [1, 32], strides = [1, 1]} : vector<8x32xf32> to vector<1x32xf32>
    %cst_18 = arith.constant dense<0.000000e+00> : vector<1x16xf32>
    %33 = tpu.matmul %32, %26, %cst_18 {dimension_numbers = #tpu.dot_dimension_numbers<[1], [1], [0], [0], [0, 0, 1, 0], [], []>} : vector<1x32xf32>, vector<16x32xf32>, vector<1x16xf32> -> vector<1x16xf32>
    %34 = vector.broadcast %31 : vector<16x1xf32> to vector<16x16xf32>
    %35 = vector.broadcast %33 : vector<1x16xf32> to vector<16x16xf32>
    %36 = arith.addf %34, %35 : vector<16x16xf32>
    %cst_19 = arith.constant 2.000000e-01 : f32
    %37 = vector.broadcast %cst_19 : f32 to vector<16x16xf32>
    %38 = arith.mulf %37, %36 : vector<16x16xf32>
    %39 = arith.maximumf %36, %38 : vector<16x16xf32>
    %cst_20 = arith.constant -1.000000e+30 : f32
    %40 = vector.broadcast %cst_20 : f32 to vector<16x16xf32>
    %41 = arith.select %18, %39, %40 : vector<16x16xi1>, vector<16x16xf32>
    %cst_21 = arith.constant dense<0xFF800000> : vector<16xf32>
    %42 = vector.multi_reduction <maximumf>, %41, %cst_21 [1] : vector<16x16xf32> to vector<16xf32>
    %43 = vector.shape_cast %42 : vector<16xf32> to vector<16x1xf32>
    %44 = vector.broadcast %43 : vector<16x1xf32> to vector<16x16xf32>
    %45 = arith.subf %41, %44 : vector<16x16xf32>
    %46 = math.exp %45 : vector<16x16xf32>
    %cst_22 = arith.constant dense<0.000000e+00> : vector<16xf32>
    %47 = vector.multi_reduction <add>, %46, %cst_22 [1] : vector<16x16xf32> to vector<16xf32>
    %48 = vector.shape_cast %47 : vector<16xf32> to vector<16x1xf32>
    %49 = vector.broadcast %48 : vector<16x1xf32> to vector<16x16xf32>
    %50 = arith.divf %46, %49 : vector<16x16xf32>
    %cst_23 = arith.constant dense<0.000000e+00> : vector<16x32xf32>
    %51 = tpu.matmul %50, %26, %cst_23 {dimension_numbers = #tpu.dot_dimension_numbers<[1], [0], [0], [1], [0, 0, 1, 1], [], []>} : vector<16x16xf32>, vector<16x32xf32>, vector<16x32xf32> -> vector<16x32xf32>
    %52 = vector.extract_strided_slice %22 {offsets = [0, 0], sizes = [1, 32], strides = [1, 1]} : vector<8x32xf32> to vector<1x32xf32>
    %53 = vector.broadcast %52 : vector<1x32xf32> to vector<16x32xf32>
    %54 = arith.addf %51, %53 : vector<16x32xf32>
    %cst_24 = arith.constant 0.000000e+00 : f32
    %55 = vector.broadcast %cst_24 : f32 to vector<16x32xf32>
    %56 = arith.cmpf ogt, %54, %55 : vector<16x32xf32>
    %57 = math.exp %54 : vector<16x32xf32>
    %cst_25 = arith.constant 1.000000e+00 : f32
    %58 = vector.broadcast %cst_25 : f32 to vector<16x32xf32>
    %59 = arith.subf %57, %58 : vector<16x32xf32>
    %60 = arith.select %56, %54, %59 : vector<16x32xi1>, vector<16x32xf32>
    %c0_26 = arith.constant 0 : index
    %c0_27 = arith.constant 0 : index
    %c0_28 = arith.constant 0 : index
    %61 = vector.load %arg7[%c0_26, %c0_27, %c0_28] : memref<8x32x32xf32, #tpu.memory_space<vmem>>, vector<1x32x32xf32>
    %62 = vector.shape_cast %61 : vector<1x32x32xf32> to vector<32x32xf32>
    %cst_29 = arith.constant dense<0.000000e+00> : vector<16x32xf32>
    %63 = tpu.matmul %60, %62, %cst_29 {dimension_numbers = #tpu.dot_dimension_numbers<[1], [0], [0], [1], [0, 0, 1, 1], [], []>} : vector<16x32xf32>, vector<32x32xf32>, vector<16x32xf32> -> vector<16x32xf32>
    %64 = arith.addf %23, %63 : vector<16x32xf32>
    %c1 = arith.constant 1 : index
    %c0_30 = arith.constant 0 : index
    %c0_31 = arith.constant 0 : index
    %65 = vector.load %arg3[%c1, %c0_30, %c0_31] : memref<8x3x32xf32, #tpu.memory_space<vmem>>, vector<1x3x32xf32>
    %66 = vector.shape_cast %65 : vector<1x3x32xf32> to vector<3x32xf32>
    %cst_32 = arith.constant dense<0.000000e+00> : vector<16x32xf32>
    %67 = tpu.matmul %19, %66, %cst_32 {dimension_numbers = #tpu.dot_dimension_numbers<[1], [0], [0], [1], [0, 0, 1, 1], [], []>} : vector<16x3xf32>, vector<3x32xf32>, vector<16x32xf32> -> vector<16x32xf32>
    %68 = vector.extract_strided_slice %21 {offsets = [1, 0], sizes = [1, 32], strides = [1, 1]} : vector<8x32xf32> to vector<1x32xf32>
    %69 = vector.broadcast %68 : vector<1x32xf32> to vector<16x32xf32>
    %70 = arith.mulf %67, %69 : vector<16x32xf32>
    %cst_33 = arith.constant dense<0.000000e+00> : vector<16xf32>
    %71 = vector.multi_reduction <add>, %70, %cst_33 [1] : vector<16x32xf32> to vector<16xf32>
    %72 = vector.shape_cast %71 : vector<16xf32> to vector<16x1xf32>
    %73 = vector.extract_strided_slice %20 {offsets = [1, 0], sizes = [1, 32], strides = [1, 1]} : vector<8x32xf32> to vector<1x32xf32>
    %cst_34 = arith.constant dense<0.000000e+00> : vector<1x16xf32>
    %74 = tpu.matmul %73, %67, %cst_34 {dimension_numbers = #tpu.dot_dimension_numbers<[1], [1], [0], [0], [0, 0, 1, 0], [], []>} : vector<1x32xf32>, vector<16x32xf32>, vector<1x16xf32> -> vector<1x16xf32>
    %75 = vector.broadcast %72 : vector<16x1xf32> to vector<16x16xf32>
    %76 = vector.broadcast %74 : vector<1x16xf32> to vector<16x16xf32>
    %77 = arith.addf %75, %76 : vector<16x16xf32>
    %cst_35 = arith.constant 2.000000e-01 : f32
    %78 = vector.broadcast %cst_35 : f32 to vector<16x16xf32>
    %79 = arith.mulf %78, %77 : vector<16x16xf32>
    %80 = arith.maximumf %77, %79 : vector<16x16xf32>
    %cst_36 = arith.constant -1.000000e+30 : f32
    %81 = vector.broadcast %cst_36 : f32 to vector<16x16xf32>
    %82 = arith.select %18, %80, %81 : vector<16x16xi1>, vector<16x16xf32>
    %cst_37 = arith.constant dense<0xFF800000> : vector<16xf32>
    %83 = vector.multi_reduction <maximumf>, %82, %cst_37 [1] : vector<16x16xf32> to vector<16xf32>
    %84 = vector.shape_cast %83 : vector<16xf32> to vector<16x1xf32>
    %85 = vector.broadcast %84 : vector<16x1xf32> to vector<16x16xf32>
    %86 = arith.subf %82, %85 : vector<16x16xf32>
    %87 = math.exp %86 : vector<16x16xf32>
    %cst_38 = arith.constant dense<0.000000e+00> : vector<16xf32>
    %88 = vector.multi_reduction <add>, %87, %cst_38 [1] : vector<16x16xf32> to vector<16xf32>
    %89 = vector.shape_cast %88 : vector<16xf32> to vector<16x1xf32>
    %90 = vector.broadcast %89 : vector<16x1xf32> to vector<16x16xf32>
    %91 = arith.divf %87, %90 : vector<16x16xf32>
    %cst_39 = arith.constant dense<0.000000e+00> : vector<16x32xf32>
    %92 = tpu.matmul %91, %67, %cst_39 {dimension_numbers = #tpu.dot_dimension_numbers<[1], [0], [0], [1], [0, 0, 1, 1], [], []>} : vector<16x16xf32>, vector<16x32xf32>, vector<16x32xf32> -> vector<16x32xf32>
    %93 = vector.extract_strided_slice %22 {offsets = [1, 0], sizes = [1, 32], strides = [1, 1]} : vector<8x32xf32> to vector<1x32xf32>
    %94 = vector.broadcast %93 : vector<1x32xf32> to vector<16x32xf32>
    %95 = arith.addf %92, %94 : vector<16x32xf32>
    %cst_40 = arith.constant 0.000000e+00 : f32
    %96 = vector.broadcast %cst_40 : f32 to vector<16x32xf32>
    %97 = arith.cmpf ogt, %95, %96 : vector<16x32xf32>
    %98 = math.exp %95 : vector<16x32xf32>
    %cst_41 = arith.constant 1.000000e+00 : f32
    %99 = vector.broadcast %cst_41 : f32 to vector<16x32xf32>
    %100 = arith.subf %98, %99 : vector<16x32xf32>
    %101 = arith.select %97, %95, %100 : vector<16x32xi1>, vector<16x32xf32>
    %c1_42 = arith.constant 1 : index
    %c0_43 = arith.constant 0 : index
    %c0_44 = arith.constant 0 : index
    %102 = vector.load %arg7[%c1_42, %c0_43, %c0_44] : memref<8x32x32xf32, #tpu.memory_space<vmem>>, vector<1x32x32xf32>
    %103 = vector.shape_cast %102 : vector<1x32x32xf32> to vector<32x32xf32>
    %cst_45 = arith.constant dense<0.000000e+00> : vector<16x32xf32>
    %104 = tpu.matmul %101, %103, %cst_45 {dimension_numbers = #tpu.dot_dimension_numbers<[1], [0], [0], [1], [0, 0, 1, 1], [], []>} : vector<16x32xf32>, vector<32x32xf32>, vector<16x32xf32> -> vector<16x32xf32>
    %105 = arith.addf %64, %104 : vector<16x32xf32>
    %c2 = arith.constant 2 : index
    %c0_46 = arith.constant 0 : index
    %c0_47 = arith.constant 0 : index
    %106 = vector.load %arg3[%c2, %c0_46, %c0_47] : memref<8x3x32xf32, #tpu.memory_space<vmem>>, vector<1x3x32xf32>
    %107 = vector.shape_cast %106 : vector<1x3x32xf32> to vector<3x32xf32>
    %cst_48 = arith.constant dense<0.000000e+00> : vector<16x32xf32>
    %108 = tpu.matmul %19, %107, %cst_48 {dimension_numbers = #tpu.dot_dimension_numbers<[1], [0], [0], [1], [0, 0, 1, 1], [], []>} : vector<16x3xf32>, vector<3x32xf32>, vector<16x32xf32> -> vector<16x32xf32>
    %109 = vector.extract_strided_slice %21 {offsets = [2, 0], sizes = [1, 32], strides = [1, 1]} : vector<8x32xf32> to vector<1x32xf32>
    %110 = vector.broadcast %109 : vector<1x32xf32> to vector<16x32xf32>
    %111 = arith.mulf %108, %110 : vector<16x32xf32>
    %cst_49 = arith.constant dense<0.000000e+00> : vector<16xf32>
    %112 = vector.multi_reduction <add>, %111, %cst_49 [1] : vector<16x32xf32> to vector<16xf32>
    %113 = vector.shape_cast %112 : vector<16xf32> to vector<16x1xf32>
    %114 = vector.extract_strided_slice %20 {offsets = [2, 0], sizes = [1, 32], strides = [1, 1]} : vector<8x32xf32> to vector<1x32xf32>
    %cst_50 = arith.constant dense<0.000000e+00> : vector<1x16xf32>
    %115 = tpu.matmul %114, %108, %cst_50 {dimension_numbers = #tpu.dot_dimension_numbers<[1], [1], [0], [0], [0, 0, 1, 0], [], []>} : vector<1x32xf32>, vector<16x32xf32>, vector<1x16xf32> -> vector<1x16xf32>
    %116 = vector.broadcast %113 : vector<16x1xf32> to vector<16x16xf32>
    %117 = vector.broadcast %115 : vector<1x16xf32> to vector<16x16xf32>
    %118 = arith.addf %116, %117 : vector<16x16xf32>
    %cst_51 = arith.constant 2.000000e-01 : f32
    %119 = vector.broadcast %cst_51 : f32 to vector<16x16xf32>
    %120 = arith.mulf %119, %118 : vector<16x16xf32>
    %121 = arith.maximumf %118, %120 : vector<16x16xf32>
    %cst_52 = arith.constant -1.000000e+30 : f32
    %122 = vector.broadcast %cst_52 : f32 to vector<16x16xf32>
    %123 = arith.select %18, %121, %122 : vector<16x16xi1>, vector<16x16xf32>
    %cst_53 = arith.constant dense<0xFF800000> : vector<16xf32>
    %124 = vector.multi_reduction <maximumf>, %123, %cst_53 [1] : vector<16x16xf32> to vector<16xf32>
    %125 = vector.shape_cast %124 : vector<16xf32> to vector<16x1xf32>
    %126 = vector.broadcast %125 : vector<16x1xf32> to vector<16x16xf32>
    %127 = arith.subf %123, %126 : vector<16x16xf32>
    %128 = math.exp %127 : vector<16x16xf32>
    %cst_54 = arith.constant dense<0.000000e+00> : vector<16xf32>
    %129 = vector.multi_reduction <add>, %128, %cst_54 [1] : vector<16x16xf32> to vector<16xf32>
    %130 = vector.shape_cast %129 : vector<16xf32> to vector<16x1xf32>
    %131 = vector.broadcast %130 : vector<16x1xf32> to vector<16x16xf32>
    %132 = arith.divf %128, %131 : vector<16x16xf32>
    %cst_55 = arith.constant dense<0.000000e+00> : vector<16x32xf32>
    %133 = tpu.matmul %132, %108, %cst_55 {dimension_numbers = #tpu.dot_dimension_numbers<[1], [0], [0], [1], [0, 0, 1, 1], [], []>} : vector<16x16xf32>, vector<16x32xf32>, vector<16x32xf32> -> vector<16x32xf32>
    %134 = vector.extract_strided_slice %22 {offsets = [2, 0], sizes = [1, 32], strides = [1, 1]} : vector<8x32xf32> to vector<1x32xf32>
    %135 = vector.broadcast %134 : vector<1x32xf32> to vector<16x32xf32>
    %136 = arith.addf %133, %135 : vector<16x32xf32>
    %cst_56 = arith.constant 0.000000e+00 : f32
    %137 = vector.broadcast %cst_56 : f32 to vector<16x32xf32>
    %138 = arith.cmpf ogt, %136, %137 : vector<16x32xf32>
    %139 = math.exp %136 : vector<16x32xf32>
    %cst_57 = arith.constant 1.000000e+00 : f32
    %140 = vector.broadcast %cst_57 : f32 to vector<16x32xf32>
    %141 = arith.subf %139, %140 : vector<16x32xf32>
    %142 = arith.select %138, %136, %141 : vector<16x32xi1>, vector<16x32xf32>
    %c2_58 = arith.constant 2 : index
    %c0_59 = arith.constant 0 : index
    %c0_60 = arith.constant 0 : index
    %143 = vector.load %arg7[%c2_58, %c0_59, %c0_60] : memref<8x32x32xf32, #tpu.memory_space<vmem>>, vector<1x32x32xf32>
    %144 = vector.shape_cast %143 : vector<1x32x32xf32> to vector<32x32xf32>
    %cst_61 = arith.constant dense<0.000000e+00> : vector<16x32xf32>
    %145 = tpu.matmul %142, %144, %cst_61 {dimension_numbers = #tpu.dot_dimension_numbers<[1], [0], [0], [1], [0, 0, 1, 1], [], []>} : vector<16x32xf32>, vector<32x32xf32>, vector<16x32xf32> -> vector<16x32xf32>
    %146 = arith.addf %105, %145 : vector<16x32xf32>
    %c3 = arith.constant 3 : index
    %c0_62 = arith.constant 0 : index
    %c0_63 = arith.constant 0 : index
    %147 = vector.load %arg3[%c3, %c0_62, %c0_63] : memref<8x3x32xf32, #tpu.memory_space<vmem>>, vector<1x3x32xf32>
    %148 = vector.shape_cast %147 : vector<1x3x32xf32> to vector<3x32xf32>
    %cst_64 = arith.constant dense<0.000000e+00> : vector<16x32xf32>
    %149 = tpu.matmul %19, %148, %cst_64 {dimension_numbers = #tpu.dot_dimension_numbers<[1], [0], [0], [1], [0, 0, 1, 1], [], []>} : vector<16x3xf32>, vector<3x32xf32>, vector<16x32xf32> -> vector<16x32xf32>
    %150 = vector.extract_strided_slice %21 {offsets = [3, 0], sizes = [1, 32], strides = [1, 1]} : vector<8x32xf32> to vector<1x32xf32>
    %151 = vector.broadcast %150 : vector<1x32xf32> to vector<16x32xf32>
    %152 = arith.mulf %149, %151 : vector<16x32xf32>
    %cst_65 = arith.constant dense<0.000000e+00> : vector<16xf32>
    %153 = vector.multi_reduction <add>, %152, %cst_65 [1] : vector<16x32xf32> to vector<16xf32>
    %154 = vector.shape_cast %153 : vector<16xf32> to vector<16x1xf32>
    %155 = vector.extract_strided_slice %20 {offsets = [3, 0], sizes = [1, 32], strides = [1, 1]} : vector<8x32xf32> to vector<1x32xf32>
    %cst_66 = arith.constant dense<0.000000e+00> : vector<1x16xf32>
    %156 = tpu.matmul %155, %149, %cst_66 {dimension_numbers = #tpu.dot_dimension_numbers<[1], [1], [0], [0], [0, 0, 1, 0], [], []>} : vector<1x32xf32>, vector<16x32xf32>, vector<1x16xf32> -> vector<1x16xf32>
    %157 = vector.broadcast %154 : vector<16x1xf32> to vector<16x16xf32>
    %158 = vector.broadcast %156 : vector<1x16xf32> to vector<16x16xf32>
    %159 = arith.addf %157, %158 : vector<16x16xf32>
    %cst_67 = arith.constant 2.000000e-01 : f32
    %160 = vector.broadcast %cst_67 : f32 to vector<16x16xf32>
    %161 = arith.mulf %160, %159 : vector<16x16xf32>
    %162 = arith.maximumf %159, %161 : vector<16x16xf32>
    %cst_68 = arith.constant -1.000000e+30 : f32
    %163 = vector.broadcast %cst_68 : f32 to vector<16x16xf32>
    %164 = arith.select %18, %162, %163 : vector<16x16xi1>, vector<16x16xf32>
    %cst_69 = arith.constant dense<0xFF800000> : vector<16xf32>
    %165 = vector.multi_reduction <maximumf>, %164, %cst_69 [1] : vector<16x16xf32> to vector<16xf32>
    %166 = vector.shape_cast %165 : vector<16xf32> to vector<16x1xf32>
    %167 = vector.broadcast %166 : vector<16x1xf32> to vector<16x16xf32>
    %168 = arith.subf %164, %167 : vector<16x16xf32>
    %169 = math.exp %168 : vector<16x16xf32>
    %cst_70 = arith.constant dense<0.000000e+00> : vector<16xf32>
    %170 = vector.multi_reduction <add>, %169, %cst_70 [1] : vector<16x16xf32> to vector<16xf32>
    %171 = vector.shape_cast %170 : vector<16xf32> to vector<16x1xf32>
    %172 = vector.broadcast %171 : vector<16x1xf32> to vector<16x16xf32>
    %173 = arith.divf %169, %172 : vector<16x16xf32>
    %cst_71 = arith.constant dense<0.000000e+00> : vector<16x32xf32>
    %174 = tpu.matmul %173, %149, %cst_71 {dimension_numbers = #tpu.dot_dimension_numbers<[1], [0], [0], [1], [0, 0, 1, 1], [], []>} : vector<16x16xf32>, vector<16x32xf32>, vector<16x32xf32> -> vector<16x32xf32>
    %175 = vector.extract_strided_slice %22 {offsets = [3, 0], sizes = [1, 32], strides = [1, 1]} : vector<8x32xf32> to vector<1x32xf32>
    %176 = vector.broadcast %175 : vector<1x32xf32> to vector<16x32xf32>
    %177 = arith.addf %174, %176 : vector<16x32xf32>
    %cst_72 = arith.constant 0.000000e+00 : f32
    %178 = vector.broadcast %cst_72 : f32 to vector<16x32xf32>
    %179 = arith.cmpf ogt, %177, %178 : vector<16x32xf32>
    %180 = math.exp %177 : vector<16x32xf32>
    %cst_73 = arith.constant 1.000000e+00 : f32
    %181 = vector.broadcast %cst_73 : f32 to vector<16x32xf32>
    %182 = arith.subf %180, %181 : vector<16x32xf32>
    %183 = arith.select %179, %177, %182 : vector<16x32xi1>, vector<16x32xf32>
    %c3_74 = arith.constant 3 : index
    %c0_75 = arith.constant 0 : index
    %c0_76 = arith.constant 0 : index
    %184 = vector.load %arg7[%c3_74, %c0_75, %c0_76] : memref<8x32x32xf32, #tpu.memory_space<vmem>>, vector<1x32x32xf32>
    %185 = vector.shape_cast %184 : vector<1x32x32xf32> to vector<32x32xf32>
    %cst_77 = arith.constant dense<0.000000e+00> : vector<16x32xf32>
    %186 = tpu.matmul %183, %185, %cst_77 {dimension_numbers = #tpu.dot_dimension_numbers<[1], [0], [0], [1], [0, 0, 1, 1], [], []>} : vector<16x32xf32>, vector<32x32xf32>, vector<16x32xf32> -> vector<16x32xf32>
    %187 = arith.addf %146, %186 : vector<16x32xf32>
    %c4 = arith.constant 4 : index
    %c0_78 = arith.constant 0 : index
    %c0_79 = arith.constant 0 : index
    %188 = vector.load %arg3[%c4, %c0_78, %c0_79] : memref<8x3x32xf32, #tpu.memory_space<vmem>>, vector<1x3x32xf32>
    %189 = vector.shape_cast %188 : vector<1x3x32xf32> to vector<3x32xf32>
    %cst_80 = arith.constant dense<0.000000e+00> : vector<16x32xf32>
    %190 = tpu.matmul %19, %189, %cst_80 {dimension_numbers = #tpu.dot_dimension_numbers<[1], [0], [0], [1], [0, 0, 1, 1], [], []>} : vector<16x3xf32>, vector<3x32xf32>, vector<16x32xf32> -> vector<16x32xf32>
    %191 = vector.extract_strided_slice %21 {offsets = [4, 0], sizes = [1, 32], strides = [1, 1]} : vector<8x32xf32> to vector<1x32xf32>
    %192 = vector.broadcast %191 : vector<1x32xf32> to vector<16x32xf32>
    %193 = arith.mulf %190, %192 : vector<16x32xf32>
    %cst_81 = arith.constant dense<0.000000e+00> : vector<16xf32>
    %194 = vector.multi_reduction <add>, %193, %cst_81 [1] : vector<16x32xf32> to vector<16xf32>
    %195 = vector.shape_cast %194 : vector<16xf32> to vector<16x1xf32>
    %196 = vector.extract_strided_slice %20 {offsets = [4, 0], sizes = [1, 32], strides = [1, 1]} : vector<8x32xf32> to vector<1x32xf32>
    %cst_82 = arith.constant dense<0.000000e+00> : vector<1x16xf32>
    %197 = tpu.matmul %196, %190, %cst_82 {dimension_numbers = #tpu.dot_dimension_numbers<[1], [1], [0], [0], [0, 0, 1, 0], [], []>} : vector<1x32xf32>, vector<16x32xf32>, vector<1x16xf32> -> vector<1x16xf32>
    %198 = vector.broadcast %195 : vector<16x1xf32> to vector<16x16xf32>
    %199 = vector.broadcast %197 : vector<1x16xf32> to vector<16x16xf32>
    %200 = arith.addf %198, %199 : vector<16x16xf32>
    %cst_83 = arith.constant 2.000000e-01 : f32
    %201 = vector.broadcast %cst_83 : f32 to vector<16x16xf32>
    %202 = arith.mulf %201, %200 : vector<16x16xf32>
    %203 = arith.maximumf %200, %202 : vector<16x16xf32>
    %cst_84 = arith.constant -1.000000e+30 : f32
    %204 = vector.broadcast %cst_84 : f32 to vector<16x16xf32>
    %205 = arith.select %18, %203, %204 : vector<16x16xi1>, vector<16x16xf32>
    %cst_85 = arith.constant dense<0xFF800000> : vector<16xf32>
    %206 = vector.multi_reduction <maximumf>, %205, %cst_85 [1] : vector<16x16xf32> to vector<16xf32>
    %207 = vector.shape_cast %206 : vector<16xf32> to vector<16x1xf32>
    %208 = vector.broadcast %207 : vector<16x1xf32> to vector<16x16xf32>
    %209 = arith.subf %205, %208 : vector<16x16xf32>
    %210 = math.exp %209 : vector<16x16xf32>
    %cst_86 = arith.constant dense<0.000000e+00> : vector<16xf32>
    %211 = vector.multi_reduction <add>, %210, %cst_86 [1] : vector<16x16xf32> to vector<16xf32>
    %212 = vector.shape_cast %211 : vector<16xf32> to vector<16x1xf32>
    %213 = vector.broadcast %212 : vector<16x1xf32> to vector<16x16xf32>
    %214 = arith.divf %210, %213 : vector<16x16xf32>
    %cst_87 = arith.constant dense<0.000000e+00> : vector<16x32xf32>
    %215 = tpu.matmul %214, %190, %cst_87 {dimension_numbers = #tpu.dot_dimension_numbers<[1], [0], [0], [1], [0, 0, 1, 1], [], []>} : vector<16x16xf32>, vector<16x32xf32>, vector<16x32xf32> -> vector<16x32xf32>
    %216 = vector.extract_strided_slice %22 {offsets = [4, 0], sizes = [1, 32], strides = [1, 1]} : vector<8x32xf32> to vector<1x32xf32>
    %217 = vector.broadcast %216 : vector<1x32xf32> to vector<16x32xf32>
    %218 = arith.addf %215, %217 : vector<16x32xf32>
    %cst_88 = arith.constant 0.000000e+00 : f32
    %219 = vector.broadcast %cst_88 : f32 to vector<16x32xf32>
    %220 = arith.cmpf ogt, %218, %219 : vector<16x32xf32>
    %221 = math.exp %218 : vector<16x32xf32>
    %cst_89 = arith.constant 1.000000e+00 : f32
    %222 = vector.broadcast %cst_89 : f32 to vector<16x32xf32>
    %223 = arith.subf %221, %222 : vector<16x32xf32>
    %224 = arith.select %220, %218, %223 : vector<16x32xi1>, vector<16x32xf32>
    %c4_90 = arith.constant 4 : index
    %c0_91 = arith.constant 0 : index
    %c0_92 = arith.constant 0 : index
    %225 = vector.load %arg7[%c4_90, %c0_91, %c0_92] : memref<8x32x32xf32, #tpu.memory_space<vmem>>, vector<1x32x32xf32>
    %226 = vector.shape_cast %225 : vector<1x32x32xf32> to vector<32x32xf32>
    %cst_93 = arith.constant dense<0.000000e+00> : vector<16x32xf32>
    %227 = tpu.matmul %224, %226, %cst_93 {dimension_numbers = #tpu.dot_dimension_numbers<[1], [0], [0], [1], [0, 0, 1, 1], [], []>} : vector<16x32xf32>, vector<32x32xf32>, vector<16x32xf32> -> vector<16x32xf32>
    %228 = arith.addf %187, %227 : vector<16x32xf32>
    %c5 = arith.constant 5 : index
    %c0_94 = arith.constant 0 : index
    %c0_95 = arith.constant 0 : index
    %229 = vector.load %arg3[%c5, %c0_94, %c0_95] : memref<8x3x32xf32, #tpu.memory_space<vmem>>, vector<1x3x32xf32>
    %230 = vector.shape_cast %229 : vector<1x3x32xf32> to vector<3x32xf32>
    %cst_96 = arith.constant dense<0.000000e+00> : vector<16x32xf32>
    %231 = tpu.matmul %19, %230, %cst_96 {dimension_numbers = #tpu.dot_dimension_numbers<[1], [0], [0], [1], [0, 0, 1, 1], [], []>} : vector<16x3xf32>, vector<3x32xf32>, vector<16x32xf32> -> vector<16x32xf32>
    %232 = vector.extract_strided_slice %21 {offsets = [5, 0], sizes = [1, 32], strides = [1, 1]} : vector<8x32xf32> to vector<1x32xf32>
    %233 = vector.broadcast %232 : vector<1x32xf32> to vector<16x32xf32>
    %234 = arith.mulf %231, %233 : vector<16x32xf32>
    %cst_97 = arith.constant dense<0.000000e+00> : vector<16xf32>
    %235 = vector.multi_reduction <add>, %234, %cst_97 [1] : vector<16x32xf32> to vector<16xf32>
    %236 = vector.shape_cast %235 : vector<16xf32> to vector<16x1xf32>
    %237 = vector.extract_strided_slice %20 {offsets = [5, 0], sizes = [1, 32], strides = [1, 1]} : vector<8x32xf32> to vector<1x32xf32>
    %cst_98 = arith.constant dense<0.000000e+00> : vector<1x16xf32>
    %238 = tpu.matmul %237, %231, %cst_98 {dimension_numbers = #tpu.dot_dimension_numbers<[1], [1], [0], [0], [0, 0, 1, 0], [], []>} : vector<1x32xf32>, vector<16x32xf32>, vector<1x16xf32> -> vector<1x16xf32>
    %239 = vector.broadcast %236 : vector<16x1xf32> to vector<16x16xf32>
    %240 = vector.broadcast %238 : vector<1x16xf32> to vector<16x16xf32>
    %241 = arith.addf %239, %240 : vector<16x16xf32>
    %cst_99 = arith.constant 2.000000e-01 : f32
    %242 = vector.broadcast %cst_99 : f32 to vector<16x16xf32>
    %243 = arith.mulf %242, %241 : vector<16x16xf32>
    %244 = arith.maximumf %241, %243 : vector<16x16xf32>
    %cst_100 = arith.constant -1.000000e+30 : f32
    %245 = vector.broadcast %cst_100 : f32 to vector<16x16xf32>
    %246 = arith.select %18, %244, %245 : vector<16x16xi1>, vector<16x16xf32>
    %cst_101 = arith.constant dense<0xFF800000> : vector<16xf32>
    %247 = vector.multi_reduction <maximumf>, %246, %cst_101 [1] : vector<16x16xf32> to vector<16xf32>
    %248 = vector.shape_cast %247 : vector<16xf32> to vector<16x1xf32>
    %249 = vector.broadcast %248 : vector<16x1xf32> to vector<16x16xf32>
    %250 = arith.subf %246, %249 : vector<16x16xf32>
    %251 = math.exp %250 : vector<16x16xf32>
    %cst_102 = arith.constant dense<0.000000e+00> : vector<16xf32>
    %252 = vector.multi_reduction <add>, %251, %cst_102 [1] : vector<16x16xf32> to vector<16xf32>
    %253 = vector.shape_cast %252 : vector<16xf32> to vector<16x1xf32>
    %254 = vector.broadcast %253 : vector<16x1xf32> to vector<16x16xf32>
    %255 = arith.divf %251, %254 : vector<16x16xf32>
    %cst_103 = arith.constant dense<0.000000e+00> : vector<16x32xf32>
    %256 = tpu.matmul %255, %231, %cst_103 {dimension_numbers = #tpu.dot_dimension_numbers<[1], [0], [0], [1], [0, 0, 1, 1], [], []>} : vector<16x16xf32>, vector<16x32xf32>, vector<16x32xf32> -> vector<16x32xf32>
    %257 = vector.extract_strided_slice %22 {offsets = [5, 0], sizes = [1, 32], strides = [1, 1]} : vector<8x32xf32> to vector<1x32xf32>
    %258 = vector.broadcast %257 : vector<1x32xf32> to vector<16x32xf32>
    %259 = arith.addf %256, %258 : vector<16x32xf32>
    %cst_104 = arith.constant 0.000000e+00 : f32
    %260 = vector.broadcast %cst_104 : f32 to vector<16x32xf32>
    %261 = arith.cmpf ogt, %259, %260 : vector<16x32xf32>
    %262 = math.exp %259 : vector<16x32xf32>
    %cst_105 = arith.constant 1.000000e+00 : f32
    %263 = vector.broadcast %cst_105 : f32 to vector<16x32xf32>
    %264 = arith.subf %262, %263 : vector<16x32xf32>
    %265 = arith.select %261, %259, %264 : vector<16x32xi1>, vector<16x32xf32>
    %c5_106 = arith.constant 5 : index
    %c0_107 = arith.constant 0 : index
    %c0_108 = arith.constant 0 : index
    %266 = vector.load %arg7[%c5_106, %c0_107, %c0_108] : memref<8x32x32xf32, #tpu.memory_space<vmem>>, vector<1x32x32xf32>
    %267 = vector.shape_cast %266 : vector<1x32x32xf32> to vector<32x32xf32>
    %cst_109 = arith.constant dense<0.000000e+00> : vector<16x32xf32>
    %268 = tpu.matmul %265, %267, %cst_109 {dimension_numbers = #tpu.dot_dimension_numbers<[1], [0], [0], [1], [0, 0, 1, 1], [], []>} : vector<16x32xf32>, vector<32x32xf32>, vector<16x32xf32> -> vector<16x32xf32>
    %269 = arith.addf %228, %268 : vector<16x32xf32>
    %c6 = arith.constant 6 : index
    %c0_110 = arith.constant 0 : index
    %c0_111 = arith.constant 0 : index
    %270 = vector.load %arg3[%c6, %c0_110, %c0_111] : memref<8x3x32xf32, #tpu.memory_space<vmem>>, vector<1x3x32xf32>
    %271 = vector.shape_cast %270 : vector<1x3x32xf32> to vector<3x32xf32>
    %cst_112 = arith.constant dense<0.000000e+00> : vector<16x32xf32>
    %272 = tpu.matmul %19, %271, %cst_112 {dimension_numbers = #tpu.dot_dimension_numbers<[1], [0], [0], [1], [0, 0, 1, 1], [], []>} : vector<16x3xf32>, vector<3x32xf32>, vector<16x32xf32> -> vector<16x32xf32>
    %273 = vector.extract_strided_slice %21 {offsets = [6, 0], sizes = [1, 32], strides = [1, 1]} : vector<8x32xf32> to vector<1x32xf32>
    %274 = vector.broadcast %273 : vector<1x32xf32> to vector<16x32xf32>
    %275 = arith.mulf %272, %274 : vector<16x32xf32>
    %cst_113 = arith.constant dense<0.000000e+00> : vector<16xf32>
    %276 = vector.multi_reduction <add>, %275, %cst_113 [1] : vector<16x32xf32> to vector<16xf32>
    %277 = vector.shape_cast %276 : vector<16xf32> to vector<16x1xf32>
    %278 = vector.extract_strided_slice %20 {offsets = [6, 0], sizes = [1, 32], strides = [1, 1]} : vector<8x32xf32> to vector<1x32xf32>
    %cst_114 = arith.constant dense<0.000000e+00> : vector<1x16xf32>
    %279 = tpu.matmul %278, %272, %cst_114 {dimension_numbers = #tpu.dot_dimension_numbers<[1], [1], [0], [0], [0, 0, 1, 0], [], []>} : vector<1x32xf32>, vector<16x32xf32>, vector<1x16xf32> -> vector<1x16xf32>
    %280 = vector.broadcast %277 : vector<16x1xf32> to vector<16x16xf32>
    %281 = vector.broadcast %279 : vector<1x16xf32> to vector<16x16xf32>
    %282 = arith.addf %280, %281 : vector<16x16xf32>
    %cst_115 = arith.constant 2.000000e-01 : f32
    %283 = vector.broadcast %cst_115 : f32 to vector<16x16xf32>
    %284 = arith.mulf %283, %282 : vector<16x16xf32>
    %285 = arith.maximumf %282, %284 : vector<16x16xf32>
    %cst_116 = arith.constant -1.000000e+30 : f32
    %286 = vector.broadcast %cst_116 : f32 to vector<16x16xf32>
    %287 = arith.select %18, %285, %286 : vector<16x16xi1>, vector<16x16xf32>
    %cst_117 = arith.constant dense<0xFF800000> : vector<16xf32>
    %288 = vector.multi_reduction <maximumf>, %287, %cst_117 [1] : vector<16x16xf32> to vector<16xf32>
    %289 = vector.shape_cast %288 : vector<16xf32> to vector<16x1xf32>
    %290 = vector.broadcast %289 : vector<16x1xf32> to vector<16x16xf32>
    %291 = arith.subf %287, %290 : vector<16x16xf32>
    %292 = math.exp %291 : vector<16x16xf32>
    %cst_118 = arith.constant dense<0.000000e+00> : vector<16xf32>
    %293 = vector.multi_reduction <add>, %292, %cst_118 [1] : vector<16x16xf32> to vector<16xf32>
    %294 = vector.shape_cast %293 : vector<16xf32> to vector<16x1xf32>
    %295 = vector.broadcast %294 : vector<16x1xf32> to vector<16x16xf32>
    %296 = arith.divf %292, %295 : vector<16x16xf32>
    %cst_119 = arith.constant dense<0.000000e+00> : vector<16x32xf32>
    %297 = tpu.matmul %296, %272, %cst_119 {dimension_numbers = #tpu.dot_dimension_numbers<[1], [0], [0], [1], [0, 0, 1, 1], [], []>} : vector<16x16xf32>, vector<16x32xf32>, vector<16x32xf32> -> vector<16x32xf32>
    %298 = vector.extract_strided_slice %22 {offsets = [6, 0], sizes = [1, 32], strides = [1, 1]} : vector<8x32xf32> to vector<1x32xf32>
    %299 = vector.broadcast %298 : vector<1x32xf32> to vector<16x32xf32>
    %300 = arith.addf %297, %299 : vector<16x32xf32>
    %cst_120 = arith.constant 0.000000e+00 : f32
    %301 = vector.broadcast %cst_120 : f32 to vector<16x32xf32>
    %302 = arith.cmpf ogt, %300, %301 : vector<16x32xf32>
    %303 = math.exp %300 : vector<16x32xf32>
    %cst_121 = arith.constant 1.000000e+00 : f32
    %304 = vector.broadcast %cst_121 : f32 to vector<16x32xf32>
    %305 = arith.subf %303, %304 : vector<16x32xf32>
    %306 = arith.select %302, %300, %305 : vector<16x32xi1>, vector<16x32xf32>
    %c6_122 = arith.constant 6 : index
    %c0_123 = arith.constant 0 : index
    %c0_124 = arith.constant 0 : index
    %307 = vector.load %arg7[%c6_122, %c0_123, %c0_124] : memref<8x32x32xf32, #tpu.memory_space<vmem>>, vector<1x32x32xf32>
    %308 = vector.shape_cast %307 : vector<1x32x32xf32> to vector<32x32xf32>
    %cst_125 = arith.constant dense<0.000000e+00> : vector<16x32xf32>
    %309 = tpu.matmul %306, %308, %cst_125 {dimension_numbers = #tpu.dot_dimension_numbers<[1], [0], [0], [1], [0, 0, 1, 1], [], []>} : vector<16x32xf32>, vector<32x32xf32>, vector<16x32xf32> -> vector<16x32xf32>
    %310 = arith.addf %269, %309 : vector<16x32xf32>
    %c7 = arith.constant 7 : index
    %c0_126 = arith.constant 0 : index
    %c0_127 = arith.constant 0 : index
    %311 = vector.load %arg3[%c7, %c0_126, %c0_127] : memref<8x3x32xf32, #tpu.memory_space<vmem>>, vector<1x3x32xf32>
    %312 = vector.shape_cast %311 : vector<1x3x32xf32> to vector<3x32xf32>
    %cst_128 = arith.constant dense<0.000000e+00> : vector<16x32xf32>
    %313 = tpu.matmul %19, %312, %cst_128 {dimension_numbers = #tpu.dot_dimension_numbers<[1], [0], [0], [1], [0, 0, 1, 1], [], []>} : vector<16x3xf32>, vector<3x32xf32>, vector<16x32xf32> -> vector<16x32xf32>
    %314 = vector.extract_strided_slice %21 {offsets = [7, 0], sizes = [1, 32], strides = [1, 1]} : vector<8x32xf32> to vector<1x32xf32>
    %315 = vector.broadcast %314 : vector<1x32xf32> to vector<16x32xf32>
    %316 = arith.mulf %313, %315 : vector<16x32xf32>
    %cst_129 = arith.constant dense<0.000000e+00> : vector<16xf32>
    %317 = vector.multi_reduction <add>, %316, %cst_129 [1] : vector<16x32xf32> to vector<16xf32>
    %318 = vector.shape_cast %317 : vector<16xf32> to vector<16x1xf32>
    %319 = vector.extract_strided_slice %20 {offsets = [7, 0], sizes = [1, 32], strides = [1, 1]} : vector<8x32xf32> to vector<1x32xf32>
    %cst_130 = arith.constant dense<0.000000e+00> : vector<1x16xf32>
    %320 = tpu.matmul %319, %313, %cst_130 {dimension_numbers = #tpu.dot_dimension_numbers<[1], [1], [0], [0], [0, 0, 1, 0], [], []>} : vector<1x32xf32>, vector<16x32xf32>, vector<1x16xf32> -> vector<1x16xf32>
    %321 = vector.broadcast %318 : vector<16x1xf32> to vector<16x16xf32>
    %322 = vector.broadcast %320 : vector<1x16xf32> to vector<16x16xf32>
    %323 = arith.addf %321, %322 : vector<16x16xf32>
    %cst_131 = arith.constant 2.000000e-01 : f32
    %324 = vector.broadcast %cst_131 : f32 to vector<16x16xf32>
    %325 = arith.mulf %324, %323 : vector<16x16xf32>
    %326 = arith.maximumf %323, %325 : vector<16x16xf32>
    %cst_132 = arith.constant -1.000000e+30 : f32
    %327 = vector.broadcast %cst_132 : f32 to vector<16x16xf32>
    %328 = arith.select %18, %326, %327 : vector<16x16xi1>, vector<16x16xf32>
    %cst_133 = arith.constant dense<0xFF800000> : vector<16xf32>
    %329 = vector.multi_reduction <maximumf>, %328, %cst_133 [1] : vector<16x16xf32> to vector<16xf32>
    %330 = vector.shape_cast %329 : vector<16xf32> to vector<16x1xf32>
    %331 = vector.broadcast %330 : vector<16x1xf32> to vector<16x16xf32>
    %332 = arith.subf %328, %331 : vector<16x16xf32>
    %333 = math.exp %332 : vector<16x16xf32>
    %cst_134 = arith.constant dense<0.000000e+00> : vector<16xf32>
    %334 = vector.multi_reduction <add>, %333, %cst_134 [1] : vector<16x16xf32> to vector<16xf32>
    %335 = vector.shape_cast %334 : vector<16xf32> to vector<16x1xf32>
    %336 = vector.broadcast %335 : vector<16x1xf32> to vector<16x16xf32>
    %337 = arith.divf %333, %336 : vector<16x16xf32>
    %cst_135 = arith.constant dense<0.000000e+00> : vector<16x32xf32>
    %338 = tpu.matmul %337, %313, %cst_135 {dimension_numbers = #tpu.dot_dimension_numbers<[1], [0], [0], [1], [0, 0, 1, 1], [], []>} : vector<16x16xf32>, vector<16x32xf32>, vector<16x32xf32> -> vector<16x32xf32>
    %339 = vector.extract_strided_slice %22 {offsets = [7, 0], sizes = [1, 32], strides = [1, 1]} : vector<8x32xf32> to vector<1x32xf32>
    %340 = vector.broadcast %339 : vector<1x32xf32> to vector<16x32xf32>
    %341 = arith.addf %338, %340 : vector<16x32xf32>
    %cst_136 = arith.constant 0.000000e+00 : f32
    %342 = vector.broadcast %cst_136 : f32 to vector<16x32xf32>
    %343 = arith.cmpf ogt, %341, %342 : vector<16x32xf32>
    %344 = math.exp %341 : vector<16x32xf32>
    %cst_137 = arith.constant 1.000000e+00 : f32
    %345 = vector.broadcast %cst_137 : f32 to vector<16x32xf32>
    %346 = arith.subf %344, %345 : vector<16x32xf32>
    %347 = arith.select %343, %341, %346 : vector<16x32xi1>, vector<16x32xf32>
    %c7_138 = arith.constant 7 : index
    %c0_139 = arith.constant 0 : index
    %c0_140 = arith.constant 0 : index
    %348 = vector.load %arg7[%c7_138, %c0_139, %c0_140] : memref<8x32x32xf32, #tpu.memory_space<vmem>>, vector<1x32x32xf32>
    %349 = vector.shape_cast %348 : vector<1x32x32xf32> to vector<32x32xf32>
    %cst_141 = arith.constant dense<0.000000e+00> : vector<16x32xf32>
    %350 = tpu.matmul %347, %349, %cst_141 {dimension_numbers = #tpu.dot_dimension_numbers<[1], [0], [0], [1], [0, 0, 1, 1], [], []>} : vector<16x32xf32>, vector<32x32xf32>, vector<16x32xf32> -> vector<16x32xf32>
    %351 = arith.addf %310, %350 : vector<16x32xf32>
    %c0_142 = arith.constant 0 : index
    %c0_143 = arith.constant 0 : index
    %352 = vector.load %arg9[%c0_142, %c0_143] : memref<1x32xf32, #tpu.memory_space<vmem>>, vector<1x32xf32>
    %353 = vector.broadcast %352 : vector<1x32xf32> to vector<16x32xf32>
    %354 = arith.mulf %351, %353 : vector<16x32xf32>
    %cst_144 = arith.constant dense<0.000000e+00> : vector<16xf32>
    %355 = vector.multi_reduction <add>, %354, %cst_144 [1] : vector<16x32xf32> to vector<16xf32>
    %356 = vector.shape_cast %355 : vector<16xf32> to vector<16x1xf32>
    %c0_145 = arith.constant 0 : index
    %c0_146 = arith.constant 0 : index
    %357 = vector.load %arg8[%c0_145, %c0_146] : memref<1x32xf32, #tpu.memory_space<vmem>>, vector<1x32xf32>
    %cst_147 = arith.constant dense<0.000000e+00> : vector<1x16xf32>
    %358 = tpu.matmul %357, %351, %cst_147 {dimension_numbers = #tpu.dot_dimension_numbers<[1], [1], [0], [0], [0, 0, 1, 0], [], []>} : vector<1x32xf32>, vector<16x32xf32>, vector<1x16xf32> -> vector<1x16xf32>
    %359 = vector.broadcast %356 : vector<16x1xf32> to vector<16x16xf32>
    %360 = vector.broadcast %358 : vector<1x16xf32> to vector<16x16xf32>
    %361 = arith.addf %359, %360 : vector<16x16xf32>
    %cst_148 = arith.constant 2.000000e-01 : f32
    %362 = vector.broadcast %cst_148 : f32 to vector<16x16xf32>
    %363 = arith.mulf %362, %361 : vector<16x16xf32>
    %364 = arith.maximumf %361, %363 : vector<16x16xf32>
    %cst_149 = arith.constant -1.000000e+30 : f32
    %365 = vector.broadcast %cst_149 : f32 to vector<16x16xf32>
    %366 = arith.select %18, %364, %365 : vector<16x16xi1>, vector<16x16xf32>
    %cst_150 = arith.constant dense<0xFF800000> : vector<16xf32>
    %367 = vector.multi_reduction <maximumf>, %366, %cst_150 [1] : vector<16x16xf32> to vector<16xf32>
    %368 = vector.shape_cast %367 : vector<16xf32> to vector<16x1xf32>
    %369 = vector.broadcast %368 : vector<16x1xf32> to vector<16x16xf32>
    %370 = arith.subf %366, %369 : vector<16x16xf32>
    %371 = math.exp %370 : vector<16x16xf32>
    %cst_151 = arith.constant dense<0.000000e+00> : vector<16xf32>
    %372 = vector.multi_reduction <add>, %371, %cst_151 [1] : vector<16x16xf32> to vector<16xf32>
    %373 = vector.shape_cast %372 : vector<16xf32> to vector<16x1xf32>
    %374 = vector.broadcast %373 : vector<16x1xf32> to vector<16x16xf32>
    %375 = arith.divf %371, %374 : vector<16x16xf32>
    %cst_152 = arith.constant dense<0.000000e+00> : vector<16x32xf32>
    %376 = tpu.matmul %375, %351, %cst_152 {dimension_numbers = #tpu.dot_dimension_numbers<[1], [0], [0], [1], [0, 0, 1, 1], [], []>} : vector<16x16xf32>, vector<16x32xf32>, vector<16x32xf32> -> vector<16x32xf32>
    %c0_153 = arith.constant 0 : index
    %c0_154 = arith.constant 0 : index
    %377 = vector.load %arg10[%c0_153, %c0_154] : memref<1x32xf32, #tpu.memory_space<vmem>>, vector<1x32xf32>
    %378 = vector.broadcast %377 : vector<1x32xf32> to vector<16x32xf32>
    %379 = arith.addf %376, %378 : vector<16x32xf32>
    %cst_155 = arith.constant 0.000000e+00 : f32
    %380 = vector.broadcast %cst_155 : f32 to vector<16x32xf32>
    %381 = arith.cmpf ogt, %379, %380 : vector<16x32xf32>
    %382 = math.exp %379 : vector<16x32xf32>
    %cst_156 = arith.constant 1.000000e+00 : f32
    %383 = vector.broadcast %cst_156 : f32 to vector<16x32xf32>
    %384 = arith.subf %382, %383 : vector<16x32xf32>
    %385 = arith.select %381, %379, %384 : vector<16x32xi1>, vector<16x32xf32>
    %cst_157 = arith.constant 0.000000e+00 : f32
    %386 = vector.broadcast %cst_157 : f32 to vector<2x32xf32>
    %c0_158 = arith.constant 0 : index
    %c0_159 = arith.constant 0 : index
    %387 = vector.load %arg13[%c0_158, %c0_159] : memref<1x32xf32, #tpu.memory_space<vmem>>, vector<1x32xf32>
    %388 = vector.broadcast %387 : vector<1x32xf32> to vector<2x32xf32>
    %389 = arith.addf %386, %388 : vector<2x32xf32>
    %c0_160 = arith.constant 0 : index
    %c0_161 = arith.constant 0 : index
    %c0_162 = arith.constant 0 : index
    %390 = vector.load %arg11[%c0_160, %c0_161, %c0_162] : memref<8x2x16xf32, #tpu.memory_space<vmem>>, vector<1x2x16xf32>
    %391 = vector.shape_cast %390 : vector<1x2x16xf32> to vector<2x16xf32>
    %cst_163 = arith.constant dense<0.000000e+00> : vector<2x32xf32>
    %392 = tpu.matmul %391, %385, %cst_163 {dimension_numbers = #tpu.dot_dimension_numbers<[1], [0], [0], [1], [0, 0, 1, 1], [], []>} : vector<2x16xf32>, vector<16x32xf32>, vector<2x32xf32> -> vector<2x32xf32>
    %c0_164 = arith.constant 0 : index
    %c0_165 = arith.constant 0 : index
    %c0_166 = arith.constant 0 : index
    %393 = vector.load %arg12[%c0_164, %c0_165, %c0_166] : memref<8x32x32xf32, #tpu.memory_space<vmem>>, vector<1x32x32xf32>
    %394 = vector.shape_cast %393 : vector<1x32x32xf32> to vector<32x32xf32>
    %cst_167 = arith.constant dense<0.000000e+00> : vector<2x32xf32>
    %395 = tpu.matmul %392, %394, %cst_167 {dimension_numbers = #tpu.dot_dimension_numbers<[1], [0], [0], [1], [0, 0, 1, 1], [], []>} : vector<2x32xf32>, vector<32x32xf32>, vector<2x32xf32> -> vector<2x32xf32>
    %396 = arith.addf %389, %395 : vector<2x32xf32>
    %c1_168 = arith.constant 1 : index
    %c0_169 = arith.constant 0 : index
    %c0_170 = arith.constant 0 : index
    %397 = vector.load %arg11[%c1_168, %c0_169, %c0_170] : memref<8x2x16xf32, #tpu.memory_space<vmem>>, vector<1x2x16xf32>
    %398 = vector.shape_cast %397 : vector<1x2x16xf32> to vector<2x16xf32>
    %cst_171 = arith.constant dense<0.000000e+00> : vector<2x32xf32>
    %399 = tpu.matmul %398, %385, %cst_171 {dimension_numbers = #tpu.dot_dimension_numbers<[1], [0], [0], [1], [0, 0, 1, 1], [], []>} : vector<2x16xf32>, vector<16x32xf32>, vector<2x32xf32> -> vector<2x32xf32>
    %c1_172 = arith.constant 1 : index
    %c0_173 = arith.constant 0 : index
    %c0_174 = arith.constant 0 : index
    %400 = vector.load %arg12[%c1_172, %c0_173, %c0_174] : memref<8x32x32xf32, #tpu.memory_space<vmem>>, vector<1x32x32xf32>
    %401 = vector.shape_cast %400 : vector<1x32x32xf32> to vector<32x32xf32>
    %cst_175 = arith.constant dense<0.000000e+00> : vector<2x32xf32>
    %402 = tpu.matmul %399, %401, %cst_175 {dimension_numbers = #tpu.dot_dimension_numbers<[1], [0], [0], [1], [0, 0, 1, 1], [], []>} : vector<2x32xf32>, vector<32x32xf32>, vector<2x32xf32> -> vector<2x32xf32>
    %403 = arith.addf %396, %402 : vector<2x32xf32>
    %c2_176 = arith.constant 2 : index
    %c0_177 = arith.constant 0 : index
    %c0_178 = arith.constant 0 : index
    %404 = vector.load %arg11[%c2_176, %c0_177, %c0_178] : memref<8x2x16xf32, #tpu.memory_space<vmem>>, vector<1x2x16xf32>
    %405 = vector.shape_cast %404 : vector<1x2x16xf32> to vector<2x16xf32>
    %cst_179 = arith.constant dense<0.000000e+00> : vector<2x32xf32>
    %406 = tpu.matmul %405, %385, %cst_179 {dimension_numbers = #tpu.dot_dimension_numbers<[1], [0], [0], [1], [0, 0, 1, 1], [], []>} : vector<2x16xf32>, vector<16x32xf32>, vector<2x32xf32> -> vector<2x32xf32>
    %c2_180 = arith.constant 2 : index
    %c0_181 = arith.constant 0 : index
    %c0_182 = arith.constant 0 : index
    %407 = vector.load %arg12[%c2_180, %c0_181, %c0_182] : memref<8x32x32xf32, #tpu.memory_space<vmem>>, vector<1x32x32xf32>
    %408 = vector.shape_cast %407 : vector<1x32x32xf32> to vector<32x32xf32>
    %cst_183 = arith.constant dense<0.000000e+00> : vector<2x32xf32>
    %409 = tpu.matmul %406, %408, %cst_183 {dimension_numbers = #tpu.dot_dimension_numbers<[1], [0], [0], [1], [0, 0, 1, 1], [], []>} : vector<2x32xf32>, vector<32x32xf32>, vector<2x32xf32> -> vector<2x32xf32>
    %410 = arith.addf %403, %409 : vector<2x32xf32>
    %c3_184 = arith.constant 3 : index
    %c0_185 = arith.constant 0 : index
    %c0_186 = arith.constant 0 : index
    %411 = vector.load %arg11[%c3_184, %c0_185, %c0_186] : memref<8x2x16xf32, #tpu.memory_space<vmem>>, vector<1x2x16xf32>
    %412 = vector.shape_cast %411 : vector<1x2x16xf32> to vector<2x16xf32>
    %cst_187 = arith.constant dense<0.000000e+00> : vector<2x32xf32>
    %413 = tpu.matmul %412, %385, %cst_187 {dimension_numbers = #tpu.dot_dimension_numbers<[1], [0], [0], [1], [0, 0, 1, 1], [], []>} : vector<2x16xf32>, vector<16x32xf32>, vector<2x32xf32> -> vector<2x32xf32>
    %c3_188 = arith.constant 3 : index
    %c0_189 = arith.constant 0 : index
    %c0_190 = arith.constant 0 : index
    %414 = vector.load %arg12[%c3_188, %c0_189, %c0_190] : memref<8x32x32xf32, #tpu.memory_space<vmem>>, vector<1x32x32xf32>
    %415 = vector.shape_cast %414 : vector<1x32x32xf32> to vector<32x32xf32>
    %cst_191 = arith.constant dense<0.000000e+00> : vector<2x32xf32>
    %416 = tpu.matmul %413, %415, %cst_191 {dimension_numbers = #tpu.dot_dimension_numbers<[1], [0], [0], [1], [0, 0, 1, 1], [], []>} : vector<2x32xf32>, vector<32x32xf32>, vector<2x32xf32> -> vector<2x32xf32>
    %417 = arith.addf %410, %416 : vector<2x32xf32>
    %c4_192 = arith.constant 4 : index
    %c0_193 = arith.constant 0 : index
    %c0_194 = arith.constant 0 : index
    %418 = vector.load %arg11[%c4_192, %c0_193, %c0_194] : memref<8x2x16xf32, #tpu.memory_space<vmem>>, vector<1x2x16xf32>
    %419 = vector.shape_cast %418 : vector<1x2x16xf32> to vector<2x16xf32>
    %cst_195 = arith.constant dense<0.000000e+00> : vector<2x32xf32>
    %420 = tpu.matmul %419, %385, %cst_195 {dimension_numbers = #tpu.dot_dimension_numbers<[1], [0], [0], [1], [0, 0, 1, 1], [], []>} : vector<2x16xf32>, vector<16x32xf32>, vector<2x32xf32> -> vector<2x32xf32>
    %c4_196 = arith.constant 4 : index
    %c0_197 = arith.constant 0 : index
    %c0_198 = arith.constant 0 : index
    %421 = vector.load %arg12[%c4_196, %c0_197, %c0_198] : memref<8x32x32xf32, #tpu.memory_space<vmem>>, vector<1x32x32xf32>
    %422 = vector.shape_cast %421 : vector<1x32x32xf32> to vector<32x32xf32>
    %cst_199 = arith.constant dense<0.000000e+00> : vector<2x32xf32>
    %423 = tpu.matmul %420, %422, %cst_199 {dimension_numbers = #tpu.dot_dimension_numbers<[1], [0], [0], [1], [0, 0, 1, 1], [], []>} : vector<2x32xf32>, vector<32x32xf32>, vector<2x32xf32> -> vector<2x32xf32>
    %424 = arith.addf %417, %423 : vector<2x32xf32>
    %c5_200 = arith.constant 5 : index
    %c0_201 = arith.constant 0 : index
    %c0_202 = arith.constant 0 : index
    %425 = vector.load %arg11[%c5_200, %c0_201, %c0_202] : memref<8x2x16xf32, #tpu.memory_space<vmem>>, vector<1x2x16xf32>
    %426 = vector.shape_cast %425 : vector<1x2x16xf32> to vector<2x16xf32>
    %cst_203 = arith.constant dense<0.000000e+00> : vector<2x32xf32>
    %427 = tpu.matmul %426, %385, %cst_203 {dimension_numbers = #tpu.dot_dimension_numbers<[1], [0], [0], [1], [0, 0, 1, 1], [], []>} : vector<2x16xf32>, vector<16x32xf32>, vector<2x32xf32> -> vector<2x32xf32>
    %c5_204 = arith.constant 5 : index
    %c0_205 = arith.constant 0 : index
    %c0_206 = arith.constant 0 : index
    %428 = vector.load %arg12[%c5_204, %c0_205, %c0_206] : memref<8x32x32xf32, #tpu.memory_space<vmem>>, vector<1x32x32xf32>
    %429 = vector.shape_cast %428 : vector<1x32x32xf32> to vector<32x32xf32>
    %cst_207 = arith.constant dense<0.000000e+00> : vector<2x32xf32>
    %430 = tpu.matmul %427, %429, %cst_207 {dimension_numbers = #tpu.dot_dimension_numbers<[1], [0], [0], [1], [0, 0, 1, 1], [], []>} : vector<2x32xf32>, vector<32x32xf32>, vector<2x32xf32> -> vector<2x32xf32>
    %431 = arith.addf %424, %430 : vector<2x32xf32>
    %c6_208 = arith.constant 6 : index
    %c0_209 = arith.constant 0 : index
    %c0_210 = arith.constant 0 : index
    %432 = vector.load %arg11[%c6_208, %c0_209, %c0_210] : memref<8x2x16xf32, #tpu.memory_space<vmem>>, vector<1x2x16xf32>
    %433 = vector.shape_cast %432 : vector<1x2x16xf32> to vector<2x16xf32>
    %cst_211 = arith.constant dense<0.000000e+00> : vector<2x32xf32>
    %434 = tpu.matmul %433, %385, %cst_211 {dimension_numbers = #tpu.dot_dimension_numbers<[1], [0], [0], [1], [0, 0, 1, 1], [], []>} : vector<2x16xf32>, vector<16x32xf32>, vector<2x32xf32> -> vector<2x32xf32>
    %c6_212 = arith.constant 6 : index
    %c0_213 = arith.constant 0 : index
    %c0_214 = arith.constant 0 : index
    %435 = vector.load %arg12[%c6_212, %c0_213, %c0_214] : memref<8x32x32xf32, #tpu.memory_space<vmem>>, vector<1x32x32xf32>
    %436 = vector.shape_cast %435 : vector<1x32x32xf32> to vector<32x32xf32>
    %cst_215 = arith.constant dense<0.000000e+00> : vector<2x32xf32>
    %437 = tpu.matmul %434, %436, %cst_215 {dimension_numbers = #tpu.dot_dimension_numbers<[1], [0], [0], [1], [0, 0, 1, 1], [], []>} : vector<2x32xf32>, vector<32x32xf32>, vector<2x32xf32> -> vector<2x32xf32>
    %438 = arith.addf %431, %437 : vector<2x32xf32>
    %c7_216 = arith.constant 7 : index
    %c0_217 = arith.constant 0 : index
    %c0_218 = arith.constant 0 : index
    %439 = vector.load %arg11[%c7_216, %c0_217, %c0_218] : memref<8x2x16xf32, #tpu.memory_space<vmem>>, vector<1x2x16xf32>
    %440 = vector.shape_cast %439 : vector<1x2x16xf32> to vector<2x16xf32>
    %cst_219 = arith.constant dense<0.000000e+00> : vector<2x32xf32>
    %441 = tpu.matmul %440, %385, %cst_219 {dimension_numbers = #tpu.dot_dimension_numbers<[1], [0], [0], [1], [0, 0, 1, 1], [], []>} : vector<2x16xf32>, vector<16x32xf32>, vector<2x32xf32> -> vector<2x32xf32>
    %c7_220 = arith.constant 7 : index
    %c0_221 = arith.constant 0 : index
    %c0_222 = arith.constant 0 : index
    %442 = vector.load %arg12[%c7_220, %c0_221, %c0_222] : memref<8x32x32xf32, #tpu.memory_space<vmem>>, vector<1x32x32xf32>
    %443 = vector.shape_cast %442 : vector<1x32x32xf32> to vector<32x32xf32>
    %cst_223 = arith.constant dense<0.000000e+00> : vector<2x32xf32>
    %444 = tpu.matmul %441, %443, %cst_223 {dimension_numbers = #tpu.dot_dimension_numbers<[1], [0], [0], [1], [0, 0, 1, 1], [], []>} : vector<2x32xf32>, vector<32x32xf32>, vector<2x32xf32> -> vector<2x32xf32>
    %445 = arith.addf %438, %444 : vector<2x32xf32>
    %cst_224 = arith.constant 0.000000e+00 : f32
    %446 = vector.broadcast %cst_224 : f32 to vector<2x32xf32>
    %447 = arith.maximumf %445, %446 : vector<2x32xf32>
    %c0_225 = arith.constant 0 : index
    %c0_226 = arith.constant 0 : index
    %448 = vector.load %arg14[%c0_225, %c0_226] : memref<32x32xf32, #tpu.memory_space<vmem>>, vector<32x32xf32>
    %cst_227 = arith.constant dense<0.000000e+00> : vector<2x32xf32>
    %449 = tpu.matmul %447, %448, %cst_227 {dimension_numbers = #tpu.dot_dimension_numbers<[1], [0], [0], [1], [0, 0, 1, 1], [], []>} : vector<2x32xf32>, vector<32x32xf32>, vector<2x32xf32> -> vector<2x32xf32>
    %c0_228 = arith.constant 0 : index
    %c0_229 = arith.constant 0 : index
    %450 = vector.load %arg15[%c0_228, %c0_229] : memref<1x32xf32, #tpu.memory_space<vmem>>, vector<1x32xf32>
    %451 = vector.broadcast %450 : vector<1x32xf32> to vector<2x32xf32>
    %452 = arith.addf %449, %451 : vector<2x32xf32>
    %cst_230 = arith.constant 0.000000e+00 : f32
    %453 = vector.broadcast %cst_230 : f32 to vector<2x32xf32>
    %454 = arith.maximumf %452, %453 : vector<2x32xf32>
    %c0_231 = arith.constant 0 : index
    %c0_232 = arith.constant 0 : index
    %455 = vector.load %arg16[%c0_231, %c0_232] : memref<32x8xf32, #tpu.memory_space<vmem>>, vector<32x8xf32>
    %cst_233 = arith.constant dense<0.000000e+00> : vector<2x8xf32>
    %456 = tpu.matmul %454, %455, %cst_233 {dimension_numbers = #tpu.dot_dimension_numbers<[1], [0], [0], [1], [0, 0, 1, 1], [], []>} : vector<2x32xf32>, vector<32x8xf32>, vector<2x8xf32> -> vector<2x8xf32>
    %c0_234 = arith.constant 0 : index
    %c0_235 = arith.constant 0 : index
    %457 = vector.load %arg17[%c0_234, %c0_235] : memref<1x8xf32, #tpu.memory_space<vmem>>, vector<1x8xf32>
    %458 = vector.broadcast %457 : vector<1x8xf32> to vector<2x8xf32>
    %459 = arith.addf %456, %458 : vector<2x8xf32>
    %cst_236 = arith.constant 0.000000e+00 : f32
    %460 = vector.broadcast %cst_236 : f32 to vector<2x8xf32>
    %461 = arith.subf %460, %459 : vector<2x8xf32>
    %462 = math.exp %461 : vector<2x8xf32>
    %cst_237 = arith.constant 1.000000e+00 : f32
    %463 = vector.broadcast %cst_237 : f32 to vector<2x8xf32>
    %464 = arith.addf %463, %462 : vector<2x8xf32>
    %cst_238 = arith.constant 1.000000e+00 : f32
    %465 = vector.broadcast %cst_238 : f32 to vector<2x8xf32>
    %466 = arith.divf %465, %464 : vector<2x8xf32>
    %c0_239 = arith.constant 0 : index
    %c0_240 = arith.constant 0 : index
    %467 = vector.load %arg18[%c0_239, %c0_240] : memref<2x8xf32, #tpu.memory_space<vmem>>, vector<2x8xf32>
    tpu.vector_store %arg18[%c0_239, %c0_240], %466 {strides = array<i32>} : memref<2x8xf32, #tpu.memory_space<vmem>>, vector<2x8xf32>,
    return
  }
}

</mosaic_0001>

<llo_original>
// kernel: tpu_custom_call.1
$region0: #{tpu_custom_call.1}
  #allocation0 [shape = 'u32[]', space=smem, size = 0x4, offset = 0x4, fixed_abs, tag = 'smem constant byte address 0x4 - core index']
  #allocation1 [shape = 'u32[144,128]{1,0:T(1,128)}', space=vmem, size = 0x12000, scoped, tag = 'internal scratch']
  %s0 = inlined_call_operand.vmem [shape: f32[16,3], index: 0, kind: input, shape index: {}]
  %s1 = inlined_call_operand.vmem [shape: s32[16,1], index: 1, kind: input, shape index: {}]
  %s2 = inlined_call_operand.vmem [shape: s32[1,16], index: 2, kind: input, shape index: {}]
  %s3 = inlined_call_operand.vmem [shape: f32[8,3,32], index: 3, kind: input, shape index: {}]
  %s4 = inlined_call_operand.vmem [shape: f32[8,32], index: 4, kind: input, shape index: {}]
  %s5 = inlined_call_operand.vmem [shape: f32[8,32], index: 5, kind: input, shape index: {}]
  %s6 = inlined_call_operand.vmem [shape: f32[8,32], index: 6, kind: input, shape index: {}]
  %s7 = inlined_call_operand.hbm [shape: f32[8,32,32], index: 7, kind: input, shape index: {}]
  %s8 = inlined_call_operand.vmem [shape: f32[1,32], index: 8, kind: input, shape index: {}]
  %s9 = inlined_call_operand.vmem [shape: f32[1,32], index: 9, kind: input, shape index: {}]
  %s10 = inlined_call_operand.vmem [shape: f32[1,32], index: 10, kind: input, shape index: {}]
  %s11 = inlined_call_operand.vmem [shape: f32[8,2,16], index: 11, kind: input, shape index: {}]
  %s12 = inlined_call_operand.hbm [shape: f32[8,32,32], index: 12, kind: input, shape index: {}]
  %s13 = inlined_call_operand.vmem [shape: f32[1,32], index: 13, kind: input, shape index: {}]
  %s14 = inlined_call_operand.vmem [shape: f32[32,32], index: 14, kind: input, shape index: {}]
  %s15 = inlined_call_operand.vmem [shape: f32[1,32], index: 15, kind: input, shape index: {}]
  %s16 = inlined_call_operand.vmem [shape: f32[32,8], index: 16, kind: input, shape index: {}]
  %s17 = inlined_call_operand.vmem [shape: f32[1,8], index: 17, kind: input, shape index: {}]
  %s18 = inlined_call_operand.hbm [shape: f32[2,8], index: 18, kind: output, shape index: {}]
  %s19 = sld [smem:[#allocation0]]
  $region90: #{tpu_custom_call.1} parent=0
    _
  %s21 = ssub.s32 1, %s19
  %s22 = scalar_select 0, %s21, %s19
  $region1: #{tpu_custom_call.1} parent=0
    #allocation2 [shape = 'u8[131072]{0}', space=vmem, size = 0x20000, scoped, tag = 'input window, operand 7, single buffered']
    #allocation3 [shape = 's32[1]{0}', space=sflag, size = 0x4, scoped, tag = 'scoped memory for tpu_custom_call.1']
    #allocation4 [shape = 's32[1]{0}', space=sflag, size = 0x4, scoped, tag = 'scoped memory for tpu_custom_call.1']
    #allocation5 [shape = 'u8[131072]{0}', space=vmem, size = 0x20000, scoped, tag = 'input window, operand 12, single buffered']
    #allocation6 [shape = 's32[1]{0}', space=sflag, size = 0x4, scoped, tag = 'scoped memory for tpu_custom_call.1']
    #allocation7 [shape = 'u8[1024]{0}', space=vmem, size = 0x400, scoped, tag = 'output window, operand 0, single buffered']
    %23 = vsyncpa [#allocation3], 0
    %24 = vsyncpa [#allocation6], 0
    %25 = vsyncpa [#allocation4], 0
    // Predicated region
    $region2: #{tpu_custom_call.1} parent=1 // pred_check
      _
    $region3: #{tpu_custom_call.1} parent=1 // pred_check_branch
      %27 = sbr.rel (0) target = $region5
    $region4: #{tpu_custom_call.1} parent=1 // pred_region
      _
    $region5: #{tpu_custom_call.1} parent=1 // pred_fallthru
      _
    // Predicated region
    $region6: #{tpu_custom_call.1} parent=1 // pred_check
      _
    $region7: #{tpu_custom_call.1} parent=1 // pred_check_branch
      %29 = sbr.rel (0) target = $region9
    $region8: #{tpu_custom_call.1} parent=1 // pred_region
      _
    $region9: #{tpu_custom_call.1} parent=1 // pred_fallthru
      _
    // Predicated region
    $region10: #{tpu_custom_call.1} parent=1 // pred_check
      _
    $region11: #{tpu_custom_call.1} parent=1 // pred_check_branch
      %31 = sbr.rel (0) target = $region13
    $region12: #{tpu_custom_call.1} parent=1 // pred_region
      _
    $region13: #{tpu_custom_call.1} parent=1 // pred_fallthru
      _
    // Predicated region
    $region14: #{tpu_custom_call.1} parent=1 // pred_check
      _
    $region15: #{tpu_custom_call.1} parent=1 // pred_check_branch
      %33 = sbr.rel (0) target = $region17
    $region16: #{tpu_custom_call.1} parent=1 // pred_region
      _
    $region17: #{tpu_custom_call.1} parent=1 // pred_fallthru
      _
    // Predicated region
    $region18: #{tpu_custom_call.1} parent=1 // pred_check
      _
    $region19: #{tpu_custom_call.1} parent=1 // pred_check_branch
      %35 = sbr.rel (0) target = $region21
    $region20: #{tpu_custom_call.1} parent=1 // pred_region
      _
    $region21: #{tpu_custom_call.1} parent=1 // pred_fallthru
      _
    // Predicated region
    $region22: #{tpu_custom_call.1} parent=1 // pred_check
      _
    $region23: #{tpu_custom_call.1} parent=1 // pred_check_branch
      %37 = sbr.rel (0) target = $region25
    $region24: #{tpu_custom_call.1} parent=1 // pred_region
      _
    $region25: #{tpu_custom_call.1} parent=1 // pred_fallthru
      _
    // Predicated region
    $region26: #{tpu_custom_call.1} parent=1 // pred_check
      _
    $region27: #{tpu_custom_call.1} parent=1 // pred_check_branch
      %39 = sbr.rel (0) target = $region29
    $region28: #{tpu_custom_call.1} parent=1 // pred_region
      _
    $region29: #{tpu_custom_call.1} parent=1 // pred_fallthru
      _
    // Predicated region
    $region30: #{tpu_custom_call.1} parent=1 // pred_check
      _
    $region31: #{tpu_custom_call.1} parent=1 // pred_check_branch
      %41 = sbr.rel (0) target = $region33
    $region32: #{tpu_custom_call.1} parent=1 // pred_region
      %s43 = ssub.s32 4096, 4096
      %44 = vsyncadd [#allocation3], %s43
      %s45 = sshll.u32 [#allocation2], 4
      %s46 = int_to_ptr.vmem [resolvable:$true] %s45
      %51 = dma.hbm_to_vmem [thread:$0]  %s7, 4096, %s46, [#allocation3], 128, 128, 8
    $region33: #{tpu_custom_call.1} parent=1 // pred_fallthru
      _
    // Predicated region
    $region34: #{tpu_custom_call.1} parent=1 // pred_check
      _
    $region35: #{tpu_custom_call.1} parent=1 // pred_check_branch
      %53 = sbr.rel (0) target = $region37
    $region36: #{tpu_custom_call.1} parent=1 // pred_region
      _
    $region37: #{tpu_custom_call.1} parent=1 // pred_fallthru
      _
    // Predicated region
    $region38: #{tpu_custom_call.1} parent=1 // pred_check
      _
    $region39: #{tpu_custom_call.1} parent=1 // pred_check_branch
      %55 = sbr.rel (0) target = $region41
    $region40: #{tpu_custom_call.1} parent=1 // pred_region
      _
    $region41: #{tpu_custom_call.1} parent=1 // pred_fallthru
      _
    // Predicated region
    $region42: #{tpu_custom_call.1} parent=1 // pred_check
      _
    $region43: #{tpu_custom_call.1} parent=1 // pred_check_branch
      %57 = sbr.rel (0) target = $region45
    $region44: #{tpu_custom_call.1} parent=1 // pred_region
      _
    $region45: #{tpu_custom_call.1} parent=1 // pred_fallthru
      _
    // Predicated region
    $region46: #{tpu_custom_call.1} parent=1 // pred_check
      _
    $region47: #{tpu_custom_call.1} parent=1 // pred_check_branch
      %59 = sbr.rel (0) target = $region49
    $region48: #{tpu_custom_call.1} parent=1 // pred_region
      _
    $region49: #{tpu_custom_call.1} parent=1 // pred_fallthru
      _
    // Predicated region
    $region50: #{tpu_custom_call.1} parent=1 // pred_check
      _
    $region51: #{tpu_custom_call.1} parent=1 // pred_check_branch
      %61 = sbr.rel (0) target = $region53
    $region52: #{tpu_custom_call.1} parent=1 // pred_region
      %s63 = ssub.s32 4096, 4096
      %64 = vsyncadd [#allocation6], %s63
      %s65 = sshll.u32 [#allocation5], 4
      %s66 = int_to_ptr.vmem [resolvable:$true] %s65
      %71 = dma.hbm_to_vmem [thread:$0]  %s12, 4096, %s66, [#allocation6], 128, 128, 8
    $region53: #{tpu_custom_call.1} parent=1 // pred_fallthru
      _
    // Predicated region
    $region54: #{tpu_custom_call.1} parent=1 // pred_check
      _
    $region55: #{tpu_custom_call.1} parent=1 // pred_check_branch
      %73 = sbr.rel (0) target = $region57
    $region56: #{tpu_custom_call.1} parent=1 // pred_region
      _
    $region57: #{tpu_custom_call.1} parent=1 // pred_fallthru
      _
    // Predicated region
    $region58: #{tpu_custom_call.1} parent=1 // pred_check
      _
    $region59: #{tpu_custom_call.1} parent=1 // pred_check_branch
      %75 = sbr.rel (0) target = $region61
    $region60: #{tpu_custom_call.1} parent=1 // pred_region
      _
    $region61: #{tpu_custom_call.1} parent=1 // pred_fallthru
      _
    // Predicated region
    $region62: #{tpu_custom_call.1} parent=1 // pred_check
      _
    $region63: #{tpu_custom_call.1} parent=1 // pred_check_branch
      %77 = sbr.rel (0) target = $region65
    $region64: #{tpu_custom_call.1} parent=1 // pred_region
      _
    $region65: #{tpu_custom_call.1} parent=1 // pred_fallthru
      _
    // Predicated region
    $region66: #{tpu_custom_call.1} parent=1 // pred_check
      _
    $region67: #{tpu_custom_call.1} parent=1 // pred_check_branch
      %79 = sbr.rel (0) target = $region69
    $region68: #{tpu_custom_call.1} parent=1 // pred_region
      _
    $region69: #{tpu_custom_call.1} parent=1 // pred_fallthru
      _
    // Predicated region
    $region70: #{tpu_custom_call.1} parent=1 // pred_check
      _
    $region71: #{tpu_custom_call.1} parent=1 // pred_check_branch
      %81 = sbr.rel (0) target = $region73
    $region72: #{tpu_custom_call.1} parent=1 // pred_region
      _
    $region73: #{tpu_custom_call.1} parent=1 // pred_fallthru
      _
    // Predicated region
    $region74: #{tpu_custom_call.1} parent=1 // pred_check
      _
    $region75: #{tpu_custom_call.1} parent=1 // pred_check_branch
      %83 = sbr.rel (0) target = $region77
    $region76: #{tpu_custom_call.1} parent=1 // pred_region
      %84 = dma.done [#allocation3], 4096
    $region77: #{tpu_custom_call.1} parent=1 // pred_fallthru
      _
    // Predicated region
    $region78: #{tpu_custom_call.1} parent=1 // pred_check
      _
    $region79: #{tpu_custom_call.1} parent=1 // pred_check_branch
      %86 = sbr.rel (0) target = $region81
    $region80: #{tpu_custom_call.1} parent=1 // pred_region
      %87 = dma.done [#allocation6], 4096
    $region81: #{tpu_custom_call.1} parent=1 // pred_fallthru
      _
    %v88 = vld [vmem:[%s1] sm:$0xff]
    %v89 = vld [vmem:[%s1 + $0x8] sm:$0xff]
    %v90 = vld [vmem:[%s2] sm:$0x1]
    %v91 = vlaneseq
    %v92 = vand.u32 %v91, 127
    %93 = vset.pattern.permute.xlu0 0
    %94 = vperm.xlu0 %93, %v88
    %v95 = vpop.permute.xlu0 %94
    %96 = vset.pattern.permute.xlu0 0
    %97 = vperm.xlu0 %96, %v89
    %v98 = vpop.permute.xlu0 %97
    %vm99 = vcmp.eq.s32.totalorder %v92, %v95
    %vm100 = vcmp.eq.s32.totalorder %v92, %v98
    %v101 = vsel %vm99, 1, 0
    %v102 = vsel %vm100, 1, 0
    %v103 = vcvt.s32.f32 %v101
    %v104 = vcvt.s32.f32 %v102
    %v105 = vlaneseq
    %v106 = vshrl.u32 %v105, 7
    %v107 = vadd.s32 %v106, 8
    %v108 = vlaneseq
    %v109 = vshrl.u32 %v108, 7
    %v110 = vsub.s32 0, %v109
    %v111 = vrot.slane %v90, %v110
    %vm112 = vcmp.eq.s32.totalorder %v106, %v111
    %vm113 = vcmp.eq.s32.totalorder %v107, %v111
    %v114 = vsel %vm112, 1, 0
    %v115 = vsel %vm113, 1, 0
    %v116 = vcvt.s32.f32 %v114
    %v117 = vcvt.s32.f32 %v115
    %vm118 = vcmask 130048
    %v120 = vsel %vm118, %v116, 0
    %v123 = vsel %vm118, %v117, 0
    %125 = vmatprep.subr.mxu0 0.0
    %126 = vmatpush1.msra.mxu0 %v103
    %127 = vmatprep.subr.mxu0 0.0
    %128 = vmatpush1.msra.mxu0 %v104
    %129 = vmatprep.subr.mxu0 0.0
    %130 = vmatpush1.msra.mxu0 0.0
    %131 = vmatprep.subr.mxu0 0.0
    %132 = vmatpush1.msra.mxu0 0.0
    %133 = vmatprep.subr.mxu0 0.0
    %134 = vmatpush1.msra.mxu0 0.0
    %135 = vmatprep.subr.mxu0 0.0
    %136 = vmatpush1.msra.mxu0 0.0
    %137 = vmatprep.subr.mxu0 0.0
    %138 = vmatpush1.msra.mxu0 0.0
    %139 = vmatprep.subr.mxu0 0.0
    %140 = vmatpush1.msra.mxu0 0.0
    %141 = vmatprep.subr.mxu0 0.0
    %142 = vmatpush1.msra.mxu0 0.0
    %143 = vmatprep.subr.mxu0 0.0
    %144 = vmatpush1.msra.mxu0 0.0
    %145 = vmatprep.subr.mxu0 0.0
    %146 = vmatpush1.msra.mxu0 0.0
    %147 = vmatprep.subr.mxu0 0.0
    %148 = vmatpush1.msra.mxu0 0.0
    %149 = vmatprep.subr.mxu0 0.0
    %150 = vmatpush1.msra.mxu0 0.0
    %151 = vmatprep.subr.mxu0 0.0
    %152 = vmatpush1.msra.mxu0 0.0
    %153 = vmatprep.subr.mxu0 0.0
    %154 = vmatpush1.msra.mxu0 0.0
    %155 = vmatprep.subr.mxu0 0.0
    %156 = vmatpush1.msra.mxu0 0.0
    %157 = vmatprep.subr.mxu0 0.0
    %158 = vmatpush1.msra.mxu0 0.0
    %159 = vmatprep.subr.mxu0 0.0
    %160 = vmatpush1.msra.mxu0 0.0
    %161 = vmatprep.subr.mxu0 0.0
    %162 = vmatpush1.msra.mxu0 0.0
    %163 = vmatprep.subr.mxu0 0.0
    %164 = vmatpush1.msra.mxu0 0.0
    %165 = vmatprep.subr.mxu0 0.0
    %166 = vmatpush1.msra.mxu0 0.0
    %167 = vmatprep.subr.mxu0 0.0
    %168 = vmatpush1.msra.mxu0 0.0
    %169 = vmatprep.subr.mxu0 0.0
    %170 = vmatpush1.msra.mxu0 0.0
    %171 = vmatprep.subr.mxu0 0.0
    %172 = vmatpush1.msra.mxu0 0.0
    %173 = vmatprep.subr.mxu0 0.0
    %174 = vmatpush1.msra.mxu0 0.0
    %175 = vmatprep.subr.mxu0 0.0
    %176 = vmatpush1.msra.mxu0 0.0
    %177 = vmatprep.subr.mxu0 0.0
    %178 = vmatpush1.msra.mxu0 0.0
    %179 = vmatprep.subr.mxu0 0.0
    %180 = vmatpush1.msra.mxu0 0.0
    %181 = vmatprep.subr.mxu0 0.0
    %182 = vmatpush1.msra.mxu0 0.0
    %183 = vmatprep.subr.mxu0 0.0
    %184 = vmatpush1.msra.mxu0 0.0
    %185 = vmatprep.subr.mxu0 0.0
    %186 = vmatpush1.msra.mxu0 0.0
    %187 = vmatprep.subr.mxu0 0.0
    %188 = vmatpush1.msra.mxu0 0.0
    %189 = vmatprep.mubr.f32.mxu0 0.0
    %190 = vmatmul.mubr.f32.gmra.mrb[0].mxu0 %v120
    %v191 = vpop.f32.mrb[0].mxu0
    %v192 = vadd.f32 0.0, %v191
    %v193 = vpop.f32.mrb[0].mxu0
    %194 = vmatprep.mubr.f32.mxu0 0.0
    %195 = vmatmul.mubr.f32.gmra.mrb[0].mxu0 %v123
    %v196 = vpop.f32.mrb[0].mxu0
    %v197 = vadd.f32 0.0, %v196
    %v198 = vpop.f32.mrb[0].mxu0
    %199 = vdwg.mxu0
    %vm200 = vcmp.gt.f32.partialorder %v192, 0.5
    %vm201 = vcmp.gt.f32.partialorder %v197, 0.5
    %vm202 = vcmp.eq.s32.totalorder %v106, %v92
    %vm203 = vcmp.eq.s32.totalorder %v107, %v92
    %vm204 = vmor %vm200, %vm202
    %vm205 = vmor %vm201, %vm203
    %v206 = vld [vmem:[%s0] sm:$0xff]
    %v207 = vld [vmem:[%s0 + $0x8] sm:$0xff]
    %v208 = vld [vmem:[%s4] sm:$0xff]
    %v209 = vld [vmem:[%s5] sm:$0xff]
    %v210 = vld [vmem:[%s6] sm:$0xff]
    %v211 = vld [vmem:[%s3] sm:$0x7]
    %vm212 = vcmask 23552
    %v214 = vsel %vm212, %v206, 0
    %v217 = vsel %vm212, %v207, 0
    %vm219 = vcmask 1042432
    %v221 = vsel %vm219, %v211, 0
    %223 = vmatprep.subr.mxu0 0.0
    %224 = vmatpush1.msra.mxu0 %v221
    %225 = vmatprep.subr.mxu0 0.0
    %226 = vmatpush1.msra.mxu0 0.0
    %227 = vmatprep.subr.mxu0 0.0
    %228 = vmatpush1.msra.mxu0 0.0
    %229 = vmatprep.subr.mxu0 0.0
    %230 = vmatpush1.msra.mxu0 0.0
    %231 = vmatprep.subr.mxu0 0.0
    %232 = vmatpush1.msra.mxu0 0.0
    %233 = vmatprep.subr.mxu0 0.0
    %234 = vmatpush1.msra.mxu0 0.0
    %235 = vmatprep.subr.mxu0 0.0
    %236 = vmatpush1.msra.mxu0 0.0
    %237 = vmatprep.subr.mxu0 0.0
    %238 = vmatpush1.msra.mxu0 0.0
    %239 = vmatprep.subr.mxu0 0.0
    %240 = vmatpush1.msra.mxu0 0.0
    %241 = vmatprep.subr.mxu0 0.0
    %242 = vmatpush1.msra.mxu0 0.0
    %243 = vmatprep.subr.mxu0 0.0
    %244 = vmatpush1.msra.mxu0 0.0
    %245 = vmatprep.subr.mxu0 0.0
    %246 = vmatpush1.msra.mxu0 0.0
    %247 = vmatprep.subr.mxu0 0.0
    %248 = vmatpush1.msra.mxu0 0.0
    %249 = vmatprep.subr.mxu0 0.0
    %250 = vmatpush1.msra.mxu0 0.0
    %251 = vmatprep.subr.mxu0 0.0
    %252 = vmatpush1.msra.mxu0 0.0
    %253 = vmatprep.subr.mxu0 0.0
    %254 = vmatpush1.msra.mxu0 0.0
    %255 = vmatprep.subr.mxu0 0.0
    %256 = vmatpush1.msra.mxu0 0.0
    %257 = vmatprep.subr.mxu0 0.0
    %258 = vmatpush1.msra.mxu0 0.0
    %259 = vmatprep.subr.mxu0 0.0
    %260 = vmatpush1.msra.mxu0 0.0
    %261 = vmatprep.subr.mxu0 0.0
    %262 = vmatpush1.msra.mxu0 0.0
    %263 = vmatprep.subr.mxu0 0.0
    %264 = vmatpush1.msra.mxu0 0.0
    %265 = vmatprep.subr.mxu0 0.0
    %266 = vmatpush1.msra.mxu0 0.0
    %267 = vmatprep.subr.mxu0 0.0
    %268 = vmatpush1.msra.mxu0 0.0
    %269 = vmatprep.subr.mxu0 0.0
    %270 = vmatpush1.msra.mxu0 0.0
    %271 = vmatprep.subr.mxu0 0.0
    %272 = vmatpush1.msra.mxu0 0.0
    %273 = vmatprep.subr.mxu0 0.0
    %274 = vmatpush1.msra.mxu0 0.0
    %275 = vmatprep.subr.mxu0 0.0
    %276 = vmatpush1.msra.mxu0 0.0
    %277 = vmatprep.subr.mxu0 0.0
    %278 = vmatpush1.msra.mxu0 0.0
    %279 = vmatprep.subr.mxu0 0.0
    %280 = vmatpush1.msra.mxu0 0.0
    %281 = vmatprep.subr.mxu0 0.0
    %282 = vmatpush1.msra.mxu0 0.0
    %283 = vmatprep.subr.mxu0 0.0
    %284 = vmatpush1.msra.mxu0 0.0
    %285 = vmatprep.subr.mxu0 0.0
    %286 = vmatpush1.msra.mxu0 0.0
    %287 = vmatprep.mubr.f32.mxu0 0.0
    %288 = vmatmul.mubr.f32.gmra.mrb[0].mxu0 %v214
    %v289 = vpop.f32.mrb[0].mxu0
    %v290 = vadd.f32 0.0, %v289
    %v291 = vpop.f32.mrb[0].mxu0
    %292 = vmatprep.mubr.f32.mxu0 0.0
    %293 = vmatmul.mubr.f32.gmra.mrb[0].mxu0 %v217
    %v294 = vpop.f32.mrb[0].mxu0
    %v295 = vadd.f32 0.0, %v294
    %v296 = vpop.f32.mrb[0].mxu0
    %297 = vdwg.mxu0
    %v298 = vlaneseq
    %v299 = vshrl.u32 %v298, 7
    %v300 = vsub.s32 0, %v299
    %v301 = vrot.slane %v209, %v300
    %v302 = vmul.f32 %v290, %v301
    %v303 = vmul.f32 %v295, %v301
    %vm304 = vcmask 261120
    %v305 = vsel %vm304, %v302, 0.0
    %306 = vadd.xlane.f32.xlu0 %v305
    %v307 = vpop.xlane.xlu0 %306
    %v308 = vsel %vm304, %v303, 0.0
    %309 = vadd.xlane.f32.xlu0 %v308
    %v310 = vpop.xlane.xlu0 %309
    %v312 = vsel %vm304, %v208, 0
    %v315 = vsel %vm304, %v290, 0
    %v318 = vsel %vm304, %v295, 0
    %320 = vmatprep.subr.mxu0 0.0
    %321 = vmatpush1.xpose.msra.mxu0 %v315
    %322 = vmatprep.subr.mxu0 0.0
    %323 = vmatpush1.xpose.msra.mxu0 %v318
    %324 = vmatprep.subr.mxu0 0.0
    %325 = vmatpush1.xpose.msra.mxu0 0.0
    %326 = vmatprep.subr.mxu0 0.0
    %327 = vmatpush1.xpose.msra.mxu0 0.0
    %328 = vmatprep.subr.mxu0 0.0
    %329 = vmatpush1.xpose.msra.mxu0 0.0
    %330 = vmatprep.subr.mxu0 0.0
    %331 = vmatpush1.xpose.msra.mxu0 0.0
    %332 = vmatprep.subr.mxu0 0.0
    %333 = vmatpush1.xpose.msra.mxu0 0.0
    %334 = vmatprep.subr.mxu0 0.0
    %335 = vmatpush1.xpose.msra.mxu0 0.0
    %336 = vmatprep.subr.mxu0 0.0
    %337 = vmatpush1.xpose.msra.mxu0 0.0
    %338 = vmatprep.subr.mxu0 0.0
    %339 = vmatpush1.xpose.msra.mxu0 0.0
    %340 = vmatprep.subr.mxu0 0.0
    %341 = vmatpush1.xpose.msra.mxu0 0.0
    %342 = vmatprep.subr.mxu0 0.0
    %343 = vmatpush1.xpose.msra.mxu0 0.0
    %344 = vmatprep.subr.mxu0 0.0
    %345 = vmatpush1.xpose.msra.mxu0 0.0
    %346 = vmatprep.subr.mxu0 0.0
    %347 = vmatpush1.xpose.msra.mxu0 0.0
    %348 = vmatprep.subr.mxu0 0.0
    %349 = vmatpush1.xpose.msra.mxu0 0.0
    %350 = vmatprep.subr.mxu0 0.0
    %351 = vmatpush1.xpose.msra.mxu0 0.0
    %352 = vmatprep.subr.mxu0 0.0
    %353 = vmatpush1.xpose.msra.mxu0 0.0
    %354 = vmatprep.subr.mxu0 0.0
    %355 = vmatpush1.xpose.msra.mxu0 0.0
    %356 = vmatprep.subr.mxu0 0.0
    %357 = vmatpush1.xpose.msra.mxu0 0.0
    %358 = vmatprep.subr.mxu0 0.0
    %359 = vmatpush1.xpose.msra.mxu0 0.0
    %360 = vmatprep.subr.mxu0 0.0
    %361 = vmatpush1.xpose.msra.mxu0 0.0
    %362 = vmatprep.subr.mxu0 0.0
    %363 = vmatpush1.xpose.msra.mxu0 0.0
    %364 = vmatprep.subr.mxu0 0.0
    %365 = vmatpush1.xpose.msra.mxu0 0.0
    %366 = vmatprep.subr.mxu0 0.0
    %367 = vmatpush1.xpose.msra.mxu0 0.0
    %368 = vmatprep.subr.mxu0 0.0
    %369 = vmatpush1.xpose.msra.mxu0 0.0
    %370 = vmatprep.subr.mxu0 0.0
    %371 = vmatpush1.xpose.msra.mxu0 0.0
    %372 = vmatprep.subr.mxu0 0.0
    %373 = vmatpush1.xpose.msra.mxu0 0.0
    %374 = vmatprep.subr.mxu0 0.0
    %375 = vmatpush1.xpose.msra.mxu0 0.0
    %376 = vmatprep.subr.mxu0 0.0
    %377 = vmatpush1.xpose.msra.mxu0 0.0
    %378 = vmatprep.subr.mxu0 0.0
    %379 = vmatpush1.xpose.msra.mxu0 0.0
    %380 = vmatprep.subr.mxu0 0.0
    %381 = vmatpush1.xpose.msra.mxu0 0.0
    %382 = vmatprep.subr.mxu0 0.0
    %383 = vmatpush1.xpose.msra.mxu0 0.0
    %384 = vmatprep.mubr.f32.mxu0 0.0
    %385 = vmatmul.mubr.f32.gmra.mrb[0].mxu0 %v312
    %v386 = vpop.f32.mrb[0].mxu0
    %v387 = vadd.f32 0.0, %v386
    %v388 = vpop.f32.mrb[0].mxu0
    %389 = vdwg.mxu0
    %v390 = vlaneseq
    %v391 = vshrl.u32 %v390, 7
    %v392 = vsub.s32 0, %v391
    %v393 = vrot.slane %v387, %v392
    %v394 = vadd.f32 %v307, %v393
    %v395 = vadd.f32 %v310, %v393
    %v396 = vmul.f32 %v394, 0.2
    %v397 = vmul.f32 %v395, 0.2
    %v398 = vmax.f32 %v394, %v396
    %v399 = vmax.f32 %v395, %v397
    %v400 = vsel %vm204, %v398, -1e+30
    %v401 = vsel %vm205, %v399, -1e+30
    %v402 = vsel %vm118, %v400, -inf
    %403 = vmax.xlane.f32.xlu0 %v402
    %v404 = vpop.xlane.xlu0 %403
    %v405 = vsel %vm118, %v401, -inf
    %406 = vmax.xlane.f32.xlu0 %v405
    %v407 = vpop.xlane.xlu0 %406
    %v408 = vsub.f32 %v400, %v404
    %v409 = vsub.f32 %v401, %v407
    %v410 = vmul.f32 %v408, 1.442695
    %v411 = vpow.pop %v410
    %v412 = vmul.f32 %v409, 1.442695
    %v413 = vpow.pop %v412
    %v414 = vsel %vm118, %v411, 0.0
    %415 = vadd.xlane.f32.xlu0 %v414
    %v416 = vpop.xlane.xlu0 %415
    %v417 = vsel %vm118, %v413, 0.0
    %418 = vadd.xlane.f32.xlu0 %v417
    %v419 = vpop.xlane.xlu0 %418
    %v420 = vrcp.pop %v416
    %v421 = vmul.f32 %v411, %v420
    %v422 = vrcp.pop %v419
    %v423 = vmul.f32 %v413, %v422
    %v424 = vlaneseq
    %v425 = vshrl.u32 %v424, 7
    %v426 = vsub.s32 0, %v425
    %v427 = vrot.slane %v210, %v426
    %v429 = vsel %vm118, %v421, 0
    %v432 = vsel %vm118, %v423, 0
    %434 = vmatprep.subr.mxu0 0.0
    %435 = vmatpush1.msra.mxu0 %v290
    %436 = vmatprep.subr.mxu0 0.0
    %437 = vmatpush1.msra.mxu0 %v295
    %438 = vmatprep.subr.mxu0 0.0
    %439 = vmatpush1.msra.mxu0 0.0
    %440 = vmatprep.subr.mxu0 0.0
    %441 = vmatpush1.msra.mxu0 0.0
    %442 = vmatprep.subr.mxu0 0.0
    %443 = vmatpush1.msra.mxu0 0.0
    %444 = vmatprep.subr.mxu0 0.0
    %445 = vmatpush1.msra.mxu0 0.0
    %446 = vmatprep.subr.mxu0 0.0
    %447 = vmatpush1.msra.mxu0 0.0
    %448 = vmatprep.subr.mxu0 0.0
    %449 = vmatpush1.msra.mxu0 0.0
    %450 = vmatprep.subr.mxu0 0.0
    %451 = vmatpush1.msra.mxu0 0.0
    %452 = vmatprep.subr.mxu0 0.0
    %453 = vmatpush1.msra.mxu0 0.0
    %454 = vmatprep.subr.mxu0 0.0
    %455 = vmatpush1.msra.mxu0 0.0
    %456 = vmatprep.subr.mxu0 0.0
    %457 = vmatpush1.msra.mxu0 0.0
    %458 = vmatprep.subr.mxu0 0.0
    %459 = vmatpush1.msra.mxu0 0.0
    %460 = vmatprep.subr.mxu0 0.0
    %461 = vmatpush1.msra.mxu0 0.0
    %462 = vmatprep.subr.mxu0 0.0
    %463 = vmatpush1.msra.mxu0 0.0
    %464 = vmatprep.subr.mxu0 0.0
    %465 = vmatpush1.msra.mxu0 0.0
    %466 = vmatprep.subr.mxu0 0.0
    %467 = vmatpush1.msra.mxu0 0.0
    %468 = vmatprep.subr.mxu0 0.0
    %469 = vmatpush1.msra.mxu0 0.0
    %470 = vmatprep.subr.mxu0 0.0
    %471 = vmatpush1.msra.mxu0 0.0
    %472 = vmatprep.subr.mxu0 0.0
    %473 = vmatpush1.msra.mxu0 0.0
    %474 = vmatprep.subr.mxu0 0.0
    %475 = vmatpush1.msra.mxu0 0.0
    %476 = vmatprep.subr.mxu0 0.0
    %477 = vmatpush1.msra.mxu0 0.0
    %478 = vmatprep.subr.mxu0 0.0
    %479 = vmatpush1.msra.mxu0 0.0
    %480 = vmatprep.subr.mxu0 0.0
    %481 = vmatpush1.msra.mxu0 0.0
    %482 = vmatprep.subr.mxu0 0.0
    %483 = vmatpush1.msra.mxu0 0.0
    %484 = vmatprep.subr.mxu0 0.0
    %485 = vmatpush1.msra.mxu0 0.0
    %486 = vmatprep.subr.mxu0 0.0
    %487 = vmatpush1.msra.mxu0 0.0
    %488 = vmatprep.subr.mxu0 0.0
    %489 = vmatpush1.msra.mxu0 0.0
    %490 = vmatprep.subr.mxu0 0.0
    %491 = vmatpush1.msra.mxu0 0.0
    %492 = vmatprep.subr.mxu0 0.0
    %493 = vmatpush1.msra.mxu0 0.0
    %494 = vmatprep.subr.mxu0 0.0
    %495 = vmatpush1.msra.mxu0 0.0
    %496 = vmatprep.subr.mxu0 0.0
    %497 = vmatpush1.msra.mxu0 0.0
    %498 = vmatprep.mubr.f32.mxu0 0.0
    %499 = vmatmul.mubr.f32.gmra.mrb[0].mxu0 %v429
    %v500 = vpop.f32.mrb[0].mxu0
    %v501 = vadd.f32 %v427, %v500
    %v502 = vpop.f32.mrb[0].mxu0
    %503 = vmatprep.mubr.f32.mxu0 0.0
    %504 = vmatmul.mubr.f32.gmra.mrb[0].mxu0 %v432
    %v505 = vpop.f32.mrb[0].mxu0
    %v506 = vadd.f32 %v427, %v505
    %v507 = vpop.f32.mrb[0].mxu0
    %508 = vdwg.mxu0
    %vm509 = vcmp.gt.f32.partialorder %v501, 0.0
    %vm510 = vcmp.gt.f32.partialorder %v506, 0.0
    %v511 = vmul.f32 %v501, 1.442695
    %v512 = vpow.pop %v511
    %v513 = vmul.f32 %v506, 1.442695
    %v514 = vpow.pop %v513
    %v515 = vsub.f32 %v512, 1.0
    %v516 = vsub.f32 %v514, 1.0
    %v517 = vsel %vm509, %v501, %v515
    %v518 = vsel %vm510, %v506, %v516
    %v519 = vld [vmem:[#allocation2] sm:$0xff]
    %v520 = vld [vmem:[#allocation2 + $0x8] sm:$0xff]
    %v521 = vld [vmem:[#allocation2 + $0x10] sm:$0xff]
    %v522 = vld [vmem:[#allocation2 + $0x18] sm:$0xff]
    %s523 = scalar_lea.vmem %s3, 4
    %v524 = vld [vmem:[%s523] sm:$0x7]
    %v526 = vsel %vm219, %v524, 0
    %528 = vmatprep.subr.mxu0 0.0
    %529 = vmatpush1.msra.mxu0 %v526
    %530 = vmatprep.subr.mxu0 0.0
    %531 = vmatpush1.msra.mxu0 0.0
    %532 = vmatprep.subr.mxu0 0.0
    %533 = vmatpush1.msra.mxu0 0.0
    %534 = vmatprep.subr.mxu0 0.0
    %535 = vmatpush1.msra.mxu0 0.0
    %536 = vmatprep.subr.mxu0 0.0
    %537 = vmatpush1.msra.mxu0 0.0
    %538 = vmatprep.subr.mxu0 0.0
    %539 = vmatpush1.msra.mxu0 0.0
    %540 = vmatprep.subr.mxu0 0.0
    %541 = vmatpush1.msra.mxu0 0.0
    %542 = vmatprep.subr.mxu0 0.0
    %543 = vmatpush1.msra.mxu0 0.0
    %544 = vmatprep.subr.mxu0 0.0
    %545 = vmatpush1.msra.mxu0 0.0
    %546 = vmatprep.subr.mxu0 0.0
    %547 = vmatpush1.msra.mxu0 0.0
    %548 = vmatprep.subr.mxu0 0.0
    %549 = vmatpush1.msra.mxu0 0.0
    %550 = vmatprep.subr.mxu0 0.0
    %551 = vmatpush1.msra.mxu0 0.0
    %552 = vmatprep.subr.mxu0 0.0
    %553 = vmatpush1.msra.mxu0 0.0
    %554 = vmatprep.subr.mxu0 0.0
    %555 = vmatpush1.msra.mxu0 0.0
    %556 = vmatprep.subr.mxu0 0.0
    %557 = vmatpush1.msra.mxu0 0.0
    %558 = vmatprep.subr.mxu0 0.0
    %559 = vmatpush1.msra.mxu0 0.0
    %560 = vmatprep.subr.mxu0 0.0
    %561 = vmatpush1.msra.mxu0 0.0
    %562 = vmatprep.subr.mxu0 0.0
    %563 = vmatpush1.msra.mxu0 0.0
    %564 = vmatprep.subr.mxu0 0.0
    %565 = vmatpush1.msra.mxu0 0.0
    %566 = vmatprep.subr.mxu0 0.0
    %567 = vmatpush1.msra.mxu0 0.0
    %568 = vmatprep.subr.mxu0 0.0
    %569 = vmatpush1.msra.mxu0 0.0
    %570 = vmatprep.subr.mxu0 0.0
    %571 = vmatpush1.msra.mxu0 0.0
    %572 = vmatprep.subr.mxu0 0.0
    %573 = vmatpush1.msra.mxu0 0.0
    %574 = vmatprep.subr.mxu0 0.0
    %575 = vmatpush1.msra.mxu0 0.0
    %576 = vmatprep.subr.mxu0 0.0
    %577 = vmatpush1.msra.mxu0 0.0
    %578 = vmatprep.subr.mxu0 0.0
    %579 = vmatpush1.msra.mxu0 0.0
    %580 = vmatprep.subr.mxu0 0.0
    %581 = vmatpush1.msra.mxu0 0.0
    %582 = vmatprep.subr.mxu0 0.0
    %583 = vmatpush1.msra.mxu0 0.0
    %584 = vmatprep.subr.mxu0 0.0
    %585 = vmatpush1.msra.mxu0 0.0
    %586 = vmatprep.subr.mxu0 0.0
    %587 = vmatpush1.msra.mxu0 0.0
    %588 = vmatprep.subr.mxu0 0.0
    %589 = vmatpush1.msra.mxu0 0.0
    %590 = vmatprep.subr.mxu0 0.0
    %591 = vmatpush1.msra.mxu0 0.0
    %592 = vmatprep.mubr.f32.mxu0 0.0
    %593 = vmatmul.mubr.f32.gmra.mrb[0].mxu0 %v214
    %v594 = vpop.f32.mrb[0].mxu0
    %v595 = vadd.f32 0.0, %v594
    %v596 = vpop.f32.mrb[0].mxu0
    %597 = vmatprep.mubr.f32.mxu0 0.0
    %598 = vmatmul.mubr.f32.gmra.mrb[0].mxu0 %v217
    %v599 = vpop.f32.mrb[0].mxu0
    %v600 = vadd.f32 0.0, %v599
    %v601 = vpop.f32.mrb[0].mxu0
    %602 = vdwg.mxu0
    %v603 = vlaneseq
    %v604 = vshrl.u32 %v603, 7
    %v605 = vsub.s32 1, %v604
    %v606 = vrot.slane %v209, %v605
    %v607 = vmul.f32 %v595, %v606
    %v608 = vmul.f32 %v600, %v606
    %v609 = vsel %vm304, %v607, 0.0
    %610 = vadd.xlane.f32.xlu0 %v609
    %v611 = vpop.xlane.xlu0 %610
    %v612 = vsel %vm304, %v608, 0.0
    %613 = vadd.xlane.f32.xlu0 %v612
    %v614 = vpop.xlane.xlu0 %613
    %v615 = vrot.slane %v208, 1
    %v616 = vsel %vm304, %v615, 0
    %v619 = vsel %vm304, %v595, 0
    %v622 = vsel %vm304, %v600, 0
    %624 = vmatprep.subr.mxu0 0.0
    %625 = vmatpush1.xpose.msra.mxu0 %v619
    %626 = vmatprep.subr.mxu0 0.0
    %627 = vmatpush1.xpose.msra.mxu0 %v622
    %628 = vmatprep.subr.mxu0 0.0
    %629 = vmatpush1.xpose.msra.mxu0 0.0
    %630 = vmatprep.subr.mxu0 0.0
    %631 = vmatpush1.xpose.msra.mxu0 0.0
    %632 = vmatprep.subr.mxu0 0.0
    %633 = vmatpush1.xpose.msra.mxu0 0.0
    %634 = vmatprep.subr.mxu0 0.0
    %635 = vmatpush1.xpose.msra.mxu0 0.0
    %636 = vmatprep.subr.mxu0 0.0
    %637 = vmatpush1.xpose.msra.mxu0 0.0
    %638 = vmatprep.subr.mxu0 0.0
    %639 = vmatpush1.xpose.msra.mxu0 0.0
    %640 = vmatprep.subr.mxu0 0.0
    %641 = vmatpush1.xpose.msra.mxu0 0.0
    %642 = vmatprep.subr.mxu0 0.0
    %643 = vmatpush1.xpose.msra.mxu0 0.0
    %644 = vmatprep.subr.mxu0 0.0
    %645 = vmatpush1.xpose.msra.mxu0 0.0
    %646 = vmatprep.subr.mxu0 0.0
    %647 = vmatpush1.xpose.msra.mxu0 0.0
    %648 = vmatprep.subr.mxu0 0.0
    %649 = vmatpush1.xpose.msra.mxu0 0.0
    %650 = vmatprep.subr.mxu0 0.0
    %651 = vmatpush1.xpose.msra.mxu0 0.0
    %652 = vmatprep.subr.mxu0 0.0
    %653 = vmatpush1.xpose.msra.mxu0 0.0
    %654 = vmatprep.subr.mxu0 0.0
    %655 = vmatpush1.xpose.msra.mxu0 0.0
    %656 = vmatprep.subr.mxu0 0.0
    %657 = vmatpush1.xpose.msra.mxu0 0.0
    %658 = vmatprep.subr.mxu0 0.0
    %659 = vmatpush1.xpose.msra.mxu0 0.0
    %660 = vmatprep.subr.mxu0 0.0
    %661 = vmatpush1.xpose.msra.mxu0 0.0
    %662 = vmatprep.subr.mxu0 0.0
    %663 = vmatpush1.xpose.msra.mxu0 0.0
    %664 = vmatprep.subr.mxu0 0.0
    %665 = vmatpush1.xpose.msra.mxu0 0.0
    %666 = vmatprep.subr.mxu0 0.0
    %667 = vmatpush1.xpose.msra.mxu0 0.0
    %668 = vmatprep.subr.mxu0 0.0
    %669 = vmatpush1.xpose.msra.mxu0 0.0
    %670 = vmatprep.subr.mxu0 0.0
    %671 = vmatpush1.xpose.msra.mxu0 0.0
    %672 = vmatprep.subr.mxu0 0.0
    %673 = vmatpush1.xpose.msra.mxu0 0.0
    %674 = vmatprep.subr.mxu0 0.0
    %675 = vmatpush1.xpose.msra.mxu0 0.0
    %676 = vmatprep.subr.mxu0 0.0
    %677 = vmatpush1.xpose.msra.mxu0 0.0
    %678 = vmatprep.subr.mxu0 0.0
    %679 = vmatpush1.xpose.msra.mxu0 0.0
    %680 = vmatprep.subr.mxu0 0.0
    %681 = vmatpush1.xpose.msra.mxu0 0.0
    %682 = vmatprep.subr.mxu0 0.0
    %683 = vmatpush1.xpose.msra.mxu0 0.0
    %684 = vmatprep.subr.mxu0 0.0
    %685 = vmatpush1.xpose.msra.mxu0 0.0
    %686 = vmatprep.subr.mxu0 0.0
    %687 = vmatpush1.xpose.msra.mxu0 0.0
    %688 = vmatprep.mubr.f32.mxu0 0.0
    %689 = vmatmul.mubr.f32.gmra.mrb[0].mxu0 %v616
    %v690 = vpop.f32.mrb[0].mxu0
    %v691 = vadd.f32 0.0, %v690
    %v692 = vpop.f32.mrb[0].mxu0
    %693 = vdwg.mxu0
    %v694 = vlaneseq
    %v695 = vshrl.u32 %v694, 7
    %v696 = vsub.s32 0, %v695
    %v697 = vrot.slane %v691, %v696
    %v698 = vadd.f32 %v611, %v697
    %v699 = vadd.f32 %v614, %v697
    %v700 = vmul.f32 %v698, 0.2
    %v701 = vmul.f32 %v699, 0.2
    %v702 = vmax.f32 %v698, %v700
    %v703 = vmax.f32 %v699, %v701
    %v704 = vsel %vm204, %v702, -1e+30
    %v705 = vsel %vm205, %v703, -1e+30
    %v706 = vsel %vm118, %v704, -inf
    %707 = vmax.xlane.f32.xlu0 %v706
    %v708 = vpop.xlane.xlu0 %707
    %v709 = vsel %vm118, %v705, -inf
    %710 = vmax.xlane.f32.xlu0 %v709
    %v711 = vpop.xlane.xlu0 %710
    %v712 = vsub.f32 %v704, %v708
    %v713 = vsub.f32 %v705, %v711
    %v714 = vmul.f32 %v712, 1.442695
    %v715 = vpow.pop %v714
    %v716 = vmul.f32 %v713, 1.442695
    %v717 = vpow.pop %v716
    %v718 = vsel %vm118, %v715, 0.0
    %719 = vadd.xlane.f32.xlu0 %v718
    %v720 = vpop.xlane.xlu0 %719
    %v721 = vsel %vm118, %v717, 0.0
    %722 = vadd.xlane.f32.xlu0 %v721
    %v723 = vpop.xlane.xlu0 %722
    %v724 = vrcp.pop %v720
    %v725 = vmul.f32 %v715, %v724
    %v726 = vrcp.pop %v723
    %v727 = vmul.f32 %v717, %v726
    %v728 = vlaneseq
    %v729 = vshrl.u32 %v728, 7
    %v730 = vsub.s32 1, %v729
    %v731 = vrot.slane %v210, %v730
    %v733 = vsel %vm118, %v725, 0
    %v736 = vsel %vm118, %v727, 0
    %738 = vmatprep.subr.mxu0 0.0
    %739 = vmatpush1.msra.mxu0 %v595
    %740 = vmatprep.subr.mxu0 0.0
    %741 = vmatpush1.msra.mxu0 %v600
    %742 = vmatprep.subr.mxu0 0.0
    %743 = vmatpush1.msra.mxu0 0.0
    %744 = vmatprep.subr.mxu0 0.0
    %745 = vmatpush1.msra.mxu0 0.0
    %746 = vmatprep.subr.mxu0 0.0
    %747 = vmatpush1.msra.mxu0 0.0
    %748 = vmatprep.subr.mxu0 0.0
    %749 = vmatpush1.msra.mxu0 0.0
    %750 = vmatprep.subr.mxu0 0.0
    %751 = vmatpush1.msra.mxu0 0.0
    %752 = vmatprep.subr.mxu0 0.0
    %753 = vmatpush1.msra.mxu0 0.0
    %754 = vmatprep.subr.mxu0 0.0
    %755 = vmatpush1.msra.mxu0 0.0
    %756 = vmatprep.subr.mxu0 0.0
    %757 = vmatpush1.msra.mxu0 0.0
    %758 = vmatprep.subr.mxu0 0.0
    %759 = vmatpush1.msra.mxu0 0.0
    %760 = vmatprep.subr.mxu0 0.0
    %761 = vmatpush1.msra.mxu0 0.0
    %762 = vmatprep.subr.mxu0 0.0
    %763 = vmatpush1.msra.mxu0 0.0
    %764 = vmatprep.subr.mxu0 0.0
    %765 = vmatpush1.msra.mxu0 0.0
    %766 = vmatprep.subr.mxu0 0.0
    %767 = vmatpush1.msra.mxu0 0.0
    %768 = vmatprep.subr.mxu0 0.0
    %769 = vmatpush1.msra.mxu0 0.0
    %770 = vmatprep.subr.mxu0 0.0
    %771 = vmatpush1.msra.mxu0 0.0
    %772 = vmatprep.subr.mxu0 0.0
    %773 = vmatpush1.msra.mxu0 0.0
    %774 = vmatprep.subr.mxu0 0.0
    %775 = vmatpush1.msra.mxu0 0.0
    %776 = vmatprep.subr.mxu0 0.0
    %777 = vmatpush1.msra.mxu0 0.0
    %778 = vmatprep.subr.mxu0 0.0
    %779 = vmatpush1.msra.mxu0 0.0
    %780 = vmatprep.subr.mxu0 0.0
    %781 = vmatpush1.msra.mxu0 0.0
    %782 = vmatprep.subr.mxu0 0.0
    %783 = vmatpush1.msra.mxu0 0.0
    %784 = vmatprep.subr.mxu0 0.0
    %785 = vmatpush1.msra.mxu0 0.0
    %786 = vmatprep.subr.mxu0 0.0
    %787 = vmatpush1.msra.mxu0 0.0
    %788 = vmatprep.subr.mxu0 0.0
    %789 = vmatpush1.msra.mxu0 0.0
    %790 = vmatprep.subr.mxu0 0.0
    %791 = vmatpush1.msra.mxu0 0.0
    %792 = vmatprep.subr.mxu0 0.0
    %793 = vmatpush1.msra.mxu0 0.0
    %794 = vmatprep.subr.mxu0 0.0
    %795 = vmatpush1.msra.mxu0 0.0
    %796 = vmatprep.subr.mxu0 0.0
    %797 = vmatpush1.msra.mxu0 0.0
    %798 = vmatprep.subr.mxu0 0.0
    %799 = vmatpush1.msra.mxu0 0.0
    %800 = vmatprep.subr.mxu0 0.0
    %801 = vmatpush1.msra.mxu0 0.0
    %802 = vmatprep.mubr.f32.mxu0 0.0
    %803 = vmatmul.mubr.f32.gmra.mrb[0].mxu0 %v733
    %v804 = vpop.f32.mrb[0].mxu0
    %v805 = vadd.f32 %v731, %v804
    %v806 = vpop.f32.mrb[0].mxu0
    %807 = vmatprep.mubr.f32.mxu0 0.0
    %808 = vmatmul.mubr.f32.gmra.mrb[0].mxu0 %v736
    %v809 = vpop.f32.mrb[0].mxu0
    %v810 = vadd.f32 %v731, %v809
    %v811 = vpop.f32.mrb[0].mxu0
    %812 = vdwg.mxu0
    %vm813 = vcmp.gt.f32.partialorder %v805, 0.0
    %vm814 = vcmp.gt.f32.partialorder %v810, 0.0
    %v815 = vmul.f32 %v805, 1.442695
    %v816 = vpow.pop %v815
    %v817 = vmul.f32 %v810, 1.442695
    %v818 = vpow.pop %v817
    %v819 = vsub.f32 %v816, 1.0
    %v820 = vsub.f32 %v818, 1.0
    %v821 = vsel %vm813, %v805, %v819
    %v822 = vsel %vm814, %v810, %v820
    %s823 = scalar_lea.vmem [#allocation2], 32
    %v824 = vld [vmem:[%s823] sm:$0xff]
    %v825 = vld [vmem:[%s823 + $0x8] sm:$0xff]
    %v826 = vld [vmem:[%s823 + $0x10] sm:$0xff]
    %v827 = vld [vmem:[%s823 + $0x18] sm:$0xff]
    %v829 = vsel %vm304, %v821, 0
    %v832 = vsel %vm304, %v822, 0
    %834 = vmatprep.subr.mxu0 0.0
    %835 = vmatpush1.msra.mxu0 %v824
    %836 = vmatprep.subr.mxu0 0.0
    %837 = vmatpush1.msra.mxu0 %v825
    %838 = vmatprep.subr.mxu0 0.0
    %839 = vmatpush1.msra.mxu0 %v826
    %840 = vmatprep.subr.mxu0 0.0
    %841 = vmatpush1.msra.mxu0 %v827
    %842 = vmatprep.subr.mxu0 0.0
    %843 = vmatpush1.msra.mxu0 0.0
    %844 = vmatprep.subr.mxu0 0.0
    %845 = vmatpush1.msra.mxu0 0.0
    %846 = vmatprep.subr.mxu0 0.0
    %847 = vmatpush1.msra.mxu0 0.0
    %848 = vmatprep.subr.mxu0 0.0
    %849 = vmatpush1.msra.mxu0 0.0
    %850 = vmatprep.subr.mxu0 0.0
    %851 = vmatpush1.msra.mxu0 0.0
    %852 = vmatprep.subr.mxu0 0.0
    %853 = vmatpush1.msra.mxu0 0.0
    %854 = vmatprep.subr.mxu0 0.0
    %855 = vmatpush1.msra.mxu0 0.0
    %856 = vmatprep.subr.mxu0 0.0
    %857 = vmatpush1.msra.mxu0 0.0
    %858 = vmatprep.subr.mxu0 0.0
    %859 = vmatpush1.msra.mxu0 0.0
    %860 = vmatprep.subr.mxu0 0.0
    %861 = vmatpush1.msra.mxu0 0.0
    %862 = vmatprep.subr.mxu0 0.0
    %863 = vmatpush1.msra.mxu0 0.0
    %864 = vmatprep.subr.mxu0 0.0
    %865 = vmatpush1.msra.mxu0 0.0
    %866 = vmatprep.subr.mxu0 0.0
    %867 = vmatpush1.msra.mxu0 0.0
    %868 = vmatprep.subr.mxu0 0.0
    %869 = vmatpush1.msra.mxu0 0.0
    %870 = vmatprep.subr.mxu0 0.0
    %871 = vmatpush1.msra.mxu0 0.0
    %872 = vmatprep.subr.mxu0 0.0
    %873 = vmatpush1.msra.mxu0 0.0
    %874 = vmatprep.subr.mxu0 0.0
    %875 = vmatpush1.msra.mxu0 0.0
    %876 = vmatprep.subr.mxu0 0.0
    %877 = vmatpush1.msra.mxu0 0.0
    %878 = vmatprep.subr.mxu0 0.0
    %879 = vmatpush1.msra.mxu0 0.0
    %880 = vmatprep.subr.mxu0 0.0
    %881 = vmatpush1.msra.mxu0 0.0
    %882 = vmatprep.subr.mxu0 0.0
    %883 = vmatpush1.msra.mxu0 0.0
    %884 = vmatprep.subr.mxu0 0.0
    %885 = vmatpush1.msra.mxu0 0.0
    %886 = vmatprep.subr.mxu0 0.0
    %887 = vmatpush1.msra.mxu0 0.0
    %888 = vmatprep.subr.mxu0 0.0
    %889 = vmatpush1.msra.mxu0 0.0
    %890 = vmatprep.subr.mxu0 0.0
    %891 = vmatpush1.msra.mxu0 0.0
    %892 = vmatprep.subr.mxu0 0.0
    %893 = vmatpush1.msra.mxu0 0.0
    %894 = vmatprep.subr.mxu0 0.0
    %895 = vmatpush1.msra.mxu0 0.0
    %896 = vmatprep.subr.mxu0 0.0
    %897 = vmatpush1.msra.mxu0 0.0
    %898 = vmatprep.mubr.f32.mxu0 0.0
    %899 = vmatmul.mubr.f32.gmra.mrb[0].mxu0 %v829
    %v900 = vpop.f32.mrb[0].mxu0
    %v901 = vadd.f32 0.0, %v900
    %v902 = vpop.f32.mrb[0].mxu0
    %903 = vmatprep.mubr.f32.mxu0 0.0
    %904 = vmatmul.mubr.f32.gmra.mrb[0].mxu0 %v832
    %v905 = vpop.f32.mrb[0].mxu0
    %v906 = vadd.f32 0.0, %v905
    %v907 = vpop.f32.mrb[0].mxu0
    %908 = vdwg.mxu0
    %v910 = vsel %vm304, %v517, 0
    %v913 = vsel %vm304, %v518, 0
    %915 = vmatprep.subr.mxu0 0.0
    %916 = vmatpush1.msra.mxu0 %v519
    %917 = vmatprep.subr.mxu0 0.0
    %918 = vmatpush1.msra.mxu0 %v520
    %919 = vmatprep.subr.mxu0 0.0
    %920 = vmatpush1.msra.mxu0 %v521
    %921 = vmatprep.subr.mxu0 0.0
    %922 = vmatpush1.msra.mxu0 %v522
    %923 = vmatprep.subr.mxu0 0.0
    %924 = vmatpush1.msra.mxu0 0.0
    %925 = vmatprep.subr.mxu0 0.0
    %926 = vmatpush1.msra.mxu0 0.0
    %927 = vmatprep.subr.mxu0 0.0
    %928 = vmatpush1.msra.mxu0 0.0
    %929 = vmatprep.subr.mxu0 0.0
    %930 = vmatpush1.msra.mxu0 0.0
    %931 = vmatprep.subr.mxu0 0.0
    %932 = vmatpush1.msra.mxu0 0.0
    %933 = vmatprep.subr.mxu0 0.0
    %934 = vmatpush1.msra.mxu0 0.0
    %935 = vmatprep.subr.mxu0 0.0
    %936 = vmatpush1.msra.mxu0 0.0
    %937 = vmatprep.subr.mxu0 0.0
    %938 = vmatpush1.msra.mxu0 0.0
    %939 = vmatprep.subr.mxu0 0.0
    %940 = vmatpush1.msra.mxu0 0.0
    %941 = vmatprep.subr.mxu0 0.0
    %942 = vmatpush1.msra.mxu0 0.0
    %943 = vmatprep.subr.mxu0 0.0
    %944 = vmatpush1.msra.mxu0 0.0
    %945 = vmatprep.subr.mxu0 0.0
    %946 = vmatpush1.msra.mxu0 0.0
    %947 = vmatprep.subr.mxu0 0.0
    %948 = vmatpush1.msra.mxu0 0.0
    %949 = vmatprep.subr.mxu0 0.0
    %950 = vmatpush1.msra.mxu0 0.0
    %951 = vmatprep.subr.mxu0 0.0
    %952 = vmatpush1.msra.mxu0 0.0
    %953 = vmatprep.subr.mxu0 0.0
    %954 = vmatpush1.msra.mxu0 0.0
    %955 = vmatprep.subr.mxu0 0.0
    %956 = vmatpush1.msra.mxu0 0.0
    %957 = vmatprep.subr.mxu0 0.0
    %958 = vmatpush1.msra.mxu0 0.0
    %959 = vmatprep.subr.mxu0 0.0
    %960 = vmatpush1.msra.mxu0 0.0
    %961 = vmatprep.subr.mxu0 0.0
    %962 = vmatpush1.msra.mxu0 0.0
    %963 = vmatprep.subr.mxu0 0.0
    %964 = vmatpush1.msra.mxu0 0.0
    %965 = vmatprep.subr.mxu0 0.0
    %966 = vmatpush1.msra.mxu0 0.0
    %967 = vmatprep.subr.mxu0 0.0
    %968 = vmatpush1.msra.mxu0 0.0
    %969 = vmatprep.subr.mxu0 0.0
    %970 = vmatpush1.msra.mxu0 0.0
    %971 = vmatprep.subr.mxu0 0.0
    %972 = vmatpush1.msra.mxu0 0.0
    %973 = vmatprep.subr.mxu0 0.0
    %974 = vmatpush1.msra.mxu0 0.0
    %975 = vmatprep.subr.mxu0 0.0
    %976 = vmatpush1.msra.mxu0 0.0
    %977 = vmatprep.subr.mxu0 0.0
    %978 = vmatpush1.msra.mxu0 0.0
    %979 = vmatprep.mubr.f32.mxu0 0.0
    %980 = vmatmul.mubr.f32.gmra.mrb[0].mxu0 %v910
    %v981 = vpop.f32.mrb[0].mxu0
    %v982 = vadd.f32 %v901, %v981
    %v983 = vpop.f32.mrb[0].mxu0
    %984 = vmatprep.mubr.f32.mxu0 0.0
    %985 = vmatmul.mubr.f32.gmra.mrb[0].mxu0 %v913
    %v986 = vpop.f32.mrb[0].mxu0
    %v987 = vadd.f32 %v906, %v986
    %v988 = vpop.f32.mrb[0].mxu0
    %989 = vdwg.mxu0
    %s990 = scalar_lea.vmem %s3, 8
    %v991 = vld [vmem:[%s990] sm:$0x7]
    %v993 = vsel %vm219, %v991, 0
    %995 = vmatprep.subr.mxu0 0.0
    %996 = vmatpush1.msra.mxu0 %v993
    %997 = vmatprep.subr.mxu0 0.0
    %998 = vmatpush1.msra.mxu0 0.0
    %999 = vmatprep.subr.mxu0 0.0
    %1000 = vmatpush1.msra.mxu0 0.0
    %1001 = vmatprep.subr.mxu0 0.0
    %1002 = vmatpush1.msra.mxu0 0.0
    %1003 = vmatprep.subr.mxu0 0.0
    %1004 = vmatpush1.msra.mxu0 0.0
    %1005 = vmatprep.subr.mxu0 0.0
    %1006 = vmatpush1.msra.mxu0 0.0
    %1007 = vmatprep.subr.mxu0 0.0
    %1008 = vmatpush1.msra.mxu0 0.0
    %1009 = vmatprep.subr.mxu0 0.0
    %1010 = vmatpush1.msra.mxu0 0.0
    %1011 = vmatprep.subr.mxu0 0.0
    %1012 = vmatpush1.msra.mxu0 0.0
    %1013 = vmatprep.subr.mxu0 0.0
    %1014 = vmatpush1.msra.mxu0 0.0
    %1015 = vmatprep.subr.mxu0 0.0
    %1016 = vmatpush1.msra.mxu0 0.0
    %1017 = vmatprep.subr.mxu0 0.0
    %1018 = vmatpush1.msra.mxu0 0.0
    %1019 = vmatprep.subr.mxu0 0.0
    %1020 = vmatpush1.msra.mxu0 0.0
    %1021 = vmatprep.subr.mxu0 0.0
    %1022 = vmatpush1.msra.mxu0 0.0
    %1023 = vmatprep.subr.mxu0 0.0
    %1024 = vmatpush1.msra.mxu0 0.0
    %1025 = vmatprep.subr.mxu0 0.0
    %1026 = vmatpush1.msra.mxu0 0.0
    %1027 = vmatprep.subr.mxu0 0.0
    %1028 = vmatpush1.msra.mxu0 0.0
    %1029 = vmatprep.subr.mxu0 0.0
    %1030 = vmatpush1.msra.mxu0 0.0
    %1031 = vmatprep.subr.mxu0 0.0
    %1032 = vmatpush1.msra.mxu0 0.0
    %1033 = vmatprep.subr.mxu0 0.0
    %1034 = vmatpush1.msra.mxu0 0.0
    %1035 = vmatprep.subr.mxu0 0.0
    %1036 = vmatpush1.msra.mxu0 0.0
    %1037 = vmatprep.subr.mxu0 0.0
    %1038 = vmatpush1.msra.mxu0 0.0
    %1039 = vmatprep.subr.mxu0 0.0
    %1040 = vmatpush1.msra.mxu0 0.0
    %1041 = vmatprep.subr.mxu0 0.0
    %1042 = vmatpush1.msra.mxu0 0.0
    %1043 = vmatprep.subr.mxu0 0.0
    %1044 = vmatpush1.msra.mxu0 0.0
    %1045 = vmatprep.subr.mxu0 0.0
    %1046 = vmatpush1.msra.mxu0 0.0
    %1047 = vmatprep.subr.mxu0 0.0
    %1048 = vmatpush1.msra.mxu0 0.0
    %1049 = vmatprep.subr.mxu0 0.0
    %1050 = vmatpush1.msra.mxu0 0.0
    %1051 = vmatprep.subr.mxu0 0.0
    %1052 = vmatpush1.msra.mxu0 0.0
    %1053 = vmatprep.subr.mxu0 0.0
    %1054 = vmatpush1.msra.mxu0 0.0
    %1055 = vmatprep.subr.mxu0 0.0
    %1056 = vmatpush1.msra.mxu0 0.0
    %1057 = vmatprep.subr.mxu0 0.0
    %1058 = vmatpush1.msra.mxu0 0.0
    %1059 = vmatprep.mubr.f32.mxu0 0.0
    %1060 = vmatmul.mubr.f32.gmra.mrb[0].mxu0 %v214
    %v1061 = vpop.f32.mrb[0].mxu0
    %v1062 = vadd.f32 0.0, %v1061
    %v1063 = vpop.f32.mrb[0].mxu0
    %1064 = vmatprep.mubr.f32.mxu0 0.0
    %1065 = vmatmul.mubr.f32.gmra.mrb[0].mxu0 %v217
    %v1066 = vpop.f32.mrb[0].mxu0
    %v1067 = vadd.f32 0.0, %v1066
    %v1068 = vpop.f32.mrb[0].mxu0
    %1069 = vdwg.mxu0
    %v1070 = vlaneseq
    %v1071 = vshrl.u32 %v1070, 7
    %v1072 = vsub.s32 2, %v1071
    %v1073 = vrot.slane %v209, %v1072
    %v1074 = vmul.f32 %v1062, %v1073
    %v1075 = vmul.f32 %v1067, %v1073
    %v1076 = vsel %vm304, %v1074, 0.0
    %1077 = vadd.xlane.f32.xlu0 %v1076
    %v1078 = vpop.xlane.xlu0 %1077
    %v1079 = vsel %vm304, %v1075, 0.0
    %1080 = vadd.xlane.f32.xlu0 %v1079
    %v1081 = vpop.xlane.xlu0 %1080
    %v1082 = vrot.slane %v208, 2
    %v1083 = vsel %vm304, %v1082, 0
    %v1086 = vsel %vm304, %v1062, 0
    %v1089 = vsel %vm304, %v1067, 0
    %1091 = vmatprep.subr.mxu0 0.0
    %1092 = vmatpush1.xpose.msra.mxu0 %v1086
    %1093 = vmatprep.subr.mxu0 0.0
    %1094 = vmatpush1.xpose.msra.mxu0 %v1089
    %1095 = vmatprep.subr.mxu0 0.0
    %1096 = vmatpush1.xpose.msra.mxu0 0.0
    %1097 = vmatprep.subr.mxu0 0.0
    %1098 = vmatpush1.xpose.msra.mxu0 0.0
    %1099 = vmatprep.subr.mxu0 0.0
    %1100 = vmatpush1.xpose.msra.mxu0 0.0
    %1101 = vmatprep.subr.mxu0 0.0
    %1102 = vmatpush1.xpose.msra.mxu0 0.0
    %1103 = vmatprep.subr.mxu0 0.0
    %1104 = vmatpush1.xpose.msra.mxu0 0.0
    %1105 = vmatprep.subr.mxu0 0.0
    %1106 = vmatpush1.xpose.msra.mxu0 0.0
    %1107 = vmatprep.subr.mxu0 0.0
    %1108 = vmatpush1.xpose.msra.mxu0 0.0
    %1109 = vmatprep.subr.mxu0 0.0
    %1110 = vmatpush1.xpose.msra.mxu0 0.0
    %1111 = vmatprep.subr.mxu0 0.0
    %1112 = vmatpush1.xpose.msra.mxu0 0.0
    %1113 = vmatprep.subr.mxu0 0.0
    %1114 = vmatpush1.xpose.msra.mxu0 0.0
    %1115 = vmatprep.subr.mxu0 0.0
    %1116 = vmatpush1.xpose.msra.mxu0 0.0
    %1117 = vmatprep.subr.mxu0 0.0
    %1118 = vmatpush1.xpose.msra.mxu0 0.0
    %1119 = vmatprep.subr.mxu0 0.0
    %1120 = vmatpush1.xpose.msra.mxu0 0.0
    %1121 = vmatprep.subr.mxu0 0.0
    %1122 = vmatpush1.xpose.msra.mxu0 0.0
    %1123 = vmatprep.subr.mxu0 0.0
    %1124 = vmatpush1.xpose.msra.mxu0 0.0
    %1125 = vmatprep.subr.mxu0 0.0
    %1126 = vmatpush1.xpose.msra.mxu0 0.0
    %1127 = vmatprep.subr.mxu0 0.0
    %1128 = vmatpush1.xpose.msra.mxu0 0.0
    %1129 = vmatprep.subr.mxu0 0.0
    %1130 = vmatpush1.xpose.msra.mxu0 0.0
    %1131 = vmatprep.subr.mxu0 0.0
    %1132 = vmatpush1.xpose.msra.mxu0 0.0
    %1133 = vmatprep.subr.mxu0 0.0
    %1134 = vmatpush1.xpose.msra.mxu0 0.0
    %1135 = vmatprep.subr.mxu0 0.0
    %1136 = vmatpush1.xpose.msra.mxu0 0.0
    %1137 = vmatprep.subr.mxu0 0.0
    %1138 = vmatpush1.xpose.msra.mxu0 0.0
    %1139 = vmatprep.subr.mxu0 0.0
    %1140 = vmatpush1.xpose.msra.mxu0 0.0
    %1141 = vmatprep.subr.mxu0 0.0
    %1142 = vmatpush1.xpose.msra.mxu0 0.0
    %1143 = vmatprep.subr.mxu0 0.0
    %1144 = vmatpush1.xpose.msra.mxu0 0.0
    %1145 = vmatprep.subr.mxu0 0.0
    %1146 = vmatpush1.xpose.msra.mxu0 0.0
    %1147 = vmatprep.subr.mxu0 0.0
    %1148 = vmatpush1.xpose.msra.mxu0 0.0
    %1149 = vmatprep.subr.mxu0 0.0
    %1150 = vmatpush1.xpose.msra.mxu0 0.0
    %1151 = vmatprep.subr.mxu0 0.0
    %1152 = vmatpush1.xpose.msra.mxu0 0.0
    %1153 = vmatprep.subr.mxu0 0.0
    %1154 = vmatpush1.xpose.msra.mxu0 0.0
    %1155 = vmatprep.mubr.f32.mxu0 0.0
    %1156 = vmatmul.mubr.f32.gmra.mrb[0].mxu0 %v1083
    %v1157 = vpop.f32.mrb[0].mxu0
    %v1158 = vadd.f32 0.0, %v1157
    %v1159 = vpop.f32.mrb[0].mxu0
    %1160 = vdwg.mxu0
    %v1161 = vlaneseq
    %v1162 = vshrl.u32 %v1161, 7
    %v1163 = vsub.s32 0, %v1162
    %v1164 = vrot.slane %v1158, %v1163
    %v1165 = vadd.f32 %v1078, %v1164
    %v1166 = vadd.f32 %v1081, %v1164
    %v1167 = vmul.f32 %v1165, 0.2
    %v1168 = vmul.f32 %v1166, 0.2
    %v1169 = vmax.f32 %v1165, %v1167
    %v1170 = vmax.f32 %v1166, %v1168
    %v1171 = vsel %vm204, %v1169, -1e+30
    %v1172 = vsel %vm205, %v1170, -1e+30
    %v1173 = vsel %vm118, %v1171, -inf
    %1174 = vmax.xlane.f32.xlu0 %v1173
    %v1175 = vpop.xlane.xlu0 %1174
    %v1176 = vsel %vm118, %v1172, -inf
    %1177 = vmax.xlane.f32.xlu0 %v1176
    %v1178 = vpop.xlane.xlu0 %1177
    %v1179 = vsub.f32 %v1171, %v1175
    %v1180 = vsub.f32 %v1172, %v1178
    %v1181 = vmul.f32 %v1179, 1.442695
    %v1182 = vpow.pop %v1181
    %v1183 = vmul.f32 %v1180, 1.442695
    %v1184 = vpow.pop %v1183
    %v1185 = vsel %vm118, %v1182, 0.0
    %1186 = vadd.xlane.f32.xlu0 %v1185
    %v1187 = vpop.xlane.xlu0 %1186
    %v1188 = vsel %vm118, %v1184, 0.0
    %1189 = vadd.xlane.f32.xlu0 %v1188
    %v1190 = vpop.xlane.xlu0 %1189
    %v1191 = vrcp.pop %v1187
    %v1192 = vmul.f32 %v1182, %v1191
    %v1193 = vrcp.pop %v1190
    %v1194 = vmul.f32 %v1184, %v1193
    %v1195 = vlaneseq
    %v1196 = vshrl.u32 %v1195, 7
    %v1197 = vsub.s32 2, %v1196
    %v1198 = vrot.slane %v210, %v1197
    %v1200 = vsel %vm118, %v1192, 0
    %v1203 = vsel %vm118, %v1194, 0
    %1205 = vmatprep.subr.mxu0 0.0
    %1206 = vmatpush1.msra.mxu0 %v1062
    %1207 = vmatprep.subr.mxu0 0.0
    %1208 = vmatpush1.msra.mxu0 %v1067
    %1209 = vmatprep.subr.mxu0 0.0
    %1210 = vmatpush1.msra.mxu0 0.0
    %1211 = vmatprep.subr.mxu0 0.0
    %1212 = vmatpush1.msra.mxu0 0.0
    %1213 = vmatprep.subr.mxu0 0.0
    %1214 = vmatpush1.msra.mxu0 0.0
    %1215 = vmatprep.subr.mxu0 0.0
    %1216 = vmatpush1.msra.mxu0 0.0
    %1217 = vmatprep.subr.mxu0 0.0
    %1218 = vmatpush1.msra.mxu0 0.0
    %1219 = vmatprep.subr.mxu0 0.0
    %1220 = vmatpush1.msra.mxu0 0.0
    %1221 = vmatprep.subr.mxu0 0.0
    %1222 = vmatpush1.msra.mxu0 0.0
    %1223 = vmatprep.subr.mxu0 0.0
    %1224 = vmatpush1.msra.mxu0 0.0
    %1225 = vmatprep.subr.mxu0 0.0
    %1226 = vmatpush1.msra.mxu0 0.0
    %1227 = vmatprep.subr.mxu0 0.0
    %1228 = vmatpush1.msra.mxu0 0.0
    %1229 = vmatprep.subr.mxu0 0.0
    %1230 = vmatpush1.msra.mxu0 0.0
    %1231 = vmatprep.subr.mxu0 0.0
    %1232 = vmatpush1.msra.mxu0 0.0
    %1233 = vmatprep.subr.mxu0 0.0
    %1234 = vmatpush1.msra.mxu0 0.0
    %1235 = vmatprep.subr.mxu0 0.0
    %1236 = vmatpush1.msra.mxu0 0.0
    %1237 = vmatprep.subr.mxu0 0.0
    %1238 = vmatpush1.msra.mxu0 0.0
    %1239 = vmatprep.subr.mxu0 0.0
    %1240 = vmatpush1.msra.mxu0 0.0
    %1241 = vmatprep.subr.mxu0 0.0
    %1242 = vmatpush1.msra.mxu0 0.0
    %1243 = vmatprep.subr.mxu0 0.0
    %1244 = vmatpush1.msra.mxu0 0.0
    %1245 = vmatprep.subr.mxu0 0.0
    %1246 = vmatpush1.msra.mxu0 0.0
    %1247 = vmatprep.subr.mxu0 0.0
    %1248 = vmatpush1.msra.mxu0 0.0
    %1249 = vmatprep.subr.mxu0 0.0
    %1250 = vmatpush1.msra.mxu0 0.0
    %1251 = vmatprep.subr.mxu0 0.0
    %1252 = vmatpush1.msra.mxu0 0.0
    %1253 = vmatprep.subr.mxu0 0.0
    %1254 = vmatpush1.msra.mxu0 0.0
    %1255 = vmatprep.subr.mxu0 0.0
    %1256 = vmatpush1.msra.mxu0 0.0
    %1257 = vmatprep.subr.mxu0 0.0
    %1258 = vmatpush1.msra.mxu0 0.0
    %1259 = vmatprep.subr.mxu0 0.0
    %1260 = vmatpush1.msra.mxu0 0.0
    %1261 = vmatprep.subr.mxu0 0.0
    %1262 = vmatpush1.msra.mxu0 0.0
    %1263 = vmatprep.subr.mxu0 0.0
    %1264 = vmatpush1.msra.mxu0 0.0
    %1265 = vmatprep.subr.mxu0 0.0
    %1266 = vmatpush1.msra.mxu0 0.0
    %1267 = vmatprep.subr.mxu0 0.0
    %1268 = vmatpush1.msra.mxu0 0.0
    %1269 = vmatprep.mubr.f32.mxu0 0.0
    %1270 = vmatmul.mubr.f32.gmra.mrb[0].mxu0 %v1200
    %v1271 = vpop.f32.mrb[0].mxu0
    %v1272 = vadd.f32 %v1198, %v1271
    %v1273 = vpop.f32.mrb[0].mxu0
    %1274 = vmatprep.mubr.f32.mxu0 0.0
    %1275 = vmatmul.mubr.f32.gmra.mrb[0].mxu0 %v1203
    %v1276 = vpop.f32.mrb[0].mxu0
    %v1277 = vadd.f32 %v1198, %v1276
    %v1278 = vpop.f32.mrb[0].mxu0
    %1279 = vdwg.mxu0
    %vm1280 = vcmp.gt.f32.partialorder %v1272, 0.0
    %vm1281 = vcmp.gt.f32.partialorder %v1277, 0.0
    %v1282 = vmul.f32 %v1272, 1.442695
    %v1283 = vpow.pop %v1282
    %v1284 = vmul.f32 %v1277, 1.442695
    %v1285 = vpow.pop %v1284
    %v1286 = vsub.f32 %v1283, 1.0
    %v1287 = vsub.f32 %v1285, 1.0
    %v1288 = vsel %vm1280, %v1272, %v1286
    %v1289 = vsel %vm1281, %v1277, %v1287
    %s1290 = scalar_lea.vmem [#allocation2], 64
    %v1291 = vld [vmem:[%s1290] sm:$0xff]
    %v1292 = vld [vmem:[%s1290 + $0x8] sm:$0xff]
    %v1293 = vld [vmem:[%s1290 + $0x10] sm:$0xff]
    %v1294 = vld [vmem:[%s1290 + $0x18] sm:$0xff]
    %v1296 = vsel %vm304, %v1288, 0
    %v1299 = vsel %vm304, %v1289, 0
    %1301 = vmatprep.subr.mxu0 0.0
    %1302 = vmatpush1.msra.mxu0 %v1291
    %1303 = vmatprep.subr.mxu0 0.0
    %1304 = vmatpush1.msra.mxu0 %v1292
    %1305 = vmatprep.subr.mxu0 0.0
    %1306 = vmatpush1.msra.mxu0 %v1293
    %1307 = vmatprep.subr.mxu0 0.0
    %1308 = vmatpush1.msra.mxu0 %v1294
    %1309 = vmatprep.subr.mxu0 0.0
    %1310 = vmatpush1.msra.mxu0 0.0
    %1311 = vmatprep.subr.mxu0 0.0
    %1312 = vmatpush1.msra.mxu0 0.0
    %1313 = vmatprep.subr.mxu0 0.0
    %1314 = vmatpush1.msra.mxu0 0.0
    %1315 = vmatprep.subr.mxu0 0.0
    %1316 = vmatpush1.msra.mxu0 0.0
    %1317 = vmatprep.subr.mxu0 0.0
    %1318 = vmatpush1.msra.mxu0 0.0
    %1319 = vmatprep.subr.mxu0 0.0
    %1320 = vmatpush1.msra.mxu0 0.0
    %1321 = vmatprep.subr.mxu0 0.0
    %1322 = vmatpush1.msra.mxu0 0.0
    %1323 = vmatprep.subr.mxu0 0.0
    %1324 = vmatpush1.msra.mxu0 0.0
    %1325 = vmatprep.subr.mxu0 0.0
    %1326 = vmatpush1.msra.mxu0 0.0
    %1327 = vmatprep.subr.mxu0 0.0
    %1328 = vmatpush1.msra.mxu0 0.0
    %1329 = vmatprep.subr.mxu0 0.0
    %1330 = vmatpush1.msra.mxu0 0.0
    %1331 = vmatprep.subr.mxu0 0.0
    %1332 = vmatpush1.msra.mxu0 0.0
    %1333 = vmatprep.subr.mxu0 0.0
    %1334 = vmatpush1.msra.mxu0 0.0
    %1335 = vmatprep.subr.mxu0 0.0
    %1336 = vmatpush1.msra.mxu0 0.0
    %1337 = vmatprep.subr.mxu0 0.0
    %1338 = vmatpush1.msra.mxu0 0.0
    %1339 = vmatprep.subr.mxu0 0.0
    %1340 = vmatpush1.msra.mxu0 0.0
    %1341 = vmatprep.subr.mxu0 0.0
    %1342 = vmatpush1.msra.mxu0 0.0
    %1343 = vmatprep.subr.mxu0 0.0
    %1344 = vmatpush1.msra.mxu0 0.0
    %1345 = vmatprep.subr.mxu0 0.0
    %1346 = vmatpush1.msra.mxu0 0.0
    %1347 = vmatprep.subr.mxu0 0.0
    %1348 = vmatpush1.msra.mxu0 0.0
    %1349 = vmatprep.subr.mxu0 0.0
    %1350 = vmatpush1.msra.mxu0 0.0
    %1351 = vmatprep.subr.mxu0 0.0
    %1352 = vmatpush1.msra.mxu0 0.0
    %1353 = vmatprep.subr.mxu0 0.0
    %1354 = vmatpush1.msra.mxu0 0.0
    %1355 = vmatprep.subr.mxu0 0.0
    %1356 = vmatpush1.msra.mxu0 0.0
    %1357 = vmatprep.subr.mxu0 0.0
    %1358 = vmatpush1.msra.mxu0 0.0
    %1359 = vmatprep.subr.mxu0 0.0
    %1360 = vmatpush1.msra.mxu0 0.0
    %1361 = vmatprep.subr.mxu0 0.0
    %1362 = vmatpush1.msra.mxu0 0.0
    %1363 = vmatprep.subr.mxu0 0.0
    %1364 = vmatpush1.msra.mxu0 0.0
    %1365 = vmatprep.mubr.f32.mxu0 0.0
    %1366 = vmatmul.mubr.f32.gmra.mrb[0].mxu0 %v1296
    %v1367 = vpop.f32.mrb[0].mxu0
    %v1368 = vadd.f32 0.0, %v1367
    %v1369 = vpop.f32.mrb[0].mxu0
    %1370 = vmatprep.mubr.f32.mxu0 0.0
    %1371 = vmatmul.mubr.f32.gmra.mrb[0].mxu0 %v1299
    %v1372 = vpop.f32.mrb[0].mxu0
    %v1373 = vadd.f32 0.0, %v1372
    %v1374 = vpop.f32.mrb[0].mxu0
    %1375 = vdwg.mxu0
    %v1376 = vadd.f32 %v982, %v1368
    %v1377 = vadd.f32 %v987, %v1373
    %s1378 = scalar_lea.vmem %s3, 12
    %v1379 = vld [vmem:[%s1378] sm:$0x7]
    %v1381 = vsel %vm219, %v1379, 0
    %1383 = vmatprep.subr.mxu0 0.0
    %1384 = vmatpush1.msra.mxu0 %v1381
    %1385 = vmatprep.subr.mxu0 0.0
    %1386 = vmatpush1.msra.mxu0 0.0
    %1387 = vmatprep.subr.mxu0 0.0
    %1388 = vmatpush1.msra.mxu0 0.0
    %1389 = vmatprep.subr.mxu0 0.0
    %1390 = vmatpush1.msra.mxu0 0.0
    %1391 = vmatprep.subr.mxu0 0.0
    %1392 = vmatpush1.msra.mxu0 0.0
    %1393 = vmatprep.subr.mxu0 0.0
    %1394 = vmatpush1.msra.mxu0 0.0
    %1395 = vmatprep.subr.mxu0 0.0
    %1396 = vmatpush1.msra.mxu0 0.0
    %1397 = vmatprep.subr.mxu0 0.0
    %1398 = vmatpush1.msra.mxu0 0.0
    %1399 = vmatprep.subr.mxu0 0.0
    %1400 = vmatpush1.msra.mxu0 0.0
    %1401 = vmatprep.subr.mxu0 0.0
    %1402 = vmatpush1.msra.mxu0 0.0
    %1403 = vmatprep.subr.mxu0 0.0
    %1404 = vmatpush1.msra.mxu0 0.0
    %1405 = vmatprep.subr.mxu0 0.0
    %1406 = vmatpush1.msra.mxu0 0.0
    %1407 = vmatprep.subr.mxu0 0.0
    %1408 = vmatpush1.msra.mxu0 0.0
    %1409 = vmatprep.subr.mxu0 0.0
    %1410 = vmatpush1.msra.mxu0 0.0
    %1411 = vmatprep.subr.mxu0 0.0
    %1412 = vmatpush1.msra.mxu0 0.0
    %1413 = vmatprep.subr.mxu0 0.0
    %1414 = vmatpush1.msra.mxu0 0.0
    %1415 = vmatprep.subr.mxu0 0.0
    %1416 = vmatpush1.msra.mxu0 0.0
    %1417 = vmatprep.subr.mxu0 0.0
    %1418 = vmatpush1.msra.mxu0 0.0
    %1419 = vmatprep.subr.mxu0 0.0
    %1420 = vmatpush1.msra.mxu0 0.0
    %1421 = vmatprep.subr.mxu0 0.0
    %1422 = vmatpush1.msra.mxu0 0.0
    %1423 = vmatprep.subr.mxu0 0.0
    %1424 = vmatpush1.msra.mxu0 0.0
    %1425 = vmatprep.subr.mxu0 0.0
    %1426 = vmatpush1.msra.mxu0 0.0
    %1427 = vmatprep.subr.mxu0 0.0
    %1428 = vmatpush1.msra.mxu0 0.0
    %1429 = vmatprep.subr.mxu0 0.0
    %1430 = vmatpush1.msra.mxu0 0.0
    %1431 = vmatprep.subr.mxu0 0.0
    %1432 = vmatpush1.msra.mxu0 0.0
    %1433 = vmatprep.subr.mxu0 0.0
    %1434 = vmatpush1.msra.mxu0 0.0
    %1435 = vmatprep.subr.mxu0 0.0
    %1436 = vmatpush1.msra.mxu0 0.0
    %1437 = vmatprep.subr.mxu0 0.0
    %1438 = vmatpush1.msra.mxu0 0.0
    %1439 = vmatprep.subr.mxu0 0.0
    %1440 = vmatpush1.msra.mxu0 0.0
    %1441 = vmatprep.subr.mxu0 0.0
    %1442 = vmatpush1.msra.mxu0 0.0
    %1443 = vmatprep.subr.mxu0 0.0
    %1444 = vmatpush1.msra.mxu0 0.0
    %1445 = vmatprep.subr.mxu0 0.0
    %1446 = vmatpush1.msra.mxu0 0.0
    %1447 = vmatprep.mubr.f32.mxu0 0.0
    %1448 = vmatmul.mubr.f32.gmra.mrb[0].mxu0 %v214
    %v1449 = vpop.f32.mrb[0].mxu0
    %v1450 = vadd.f32 0.0, %v1449
    %v1451 = vpop.f32.mrb[0].mxu0
    %1452 = vmatprep.mubr.f32.mxu0 0.0
    %1453 = vmatmul.mubr.f32.gmra.mrb[0].mxu0 %v217
    %v1454 = vpop.f32.mrb[0].mxu0
    %v1455 = vadd.f32 0.0, %v1454
    %v1456 = vpop.f32.mrb[0].mxu0
    %1457 = vdwg.mxu0
    %v1458 = vlaneseq
    %v1459 = vshrl.u32 %v1458, 7
    %v1460 = vsub.s32 3, %v1459
    %v1461 = vrot.slane %v209, %v1460
    %v1462 = vmul.f32 %v1450, %v1461
    %v1463 = vmul.f32 %v1455, %v1461
    %v1464 = vsel %vm304, %v1462, 0.0
    %1465 = vadd.xlane.f32.xlu0 %v1464
    %v1466 = vpop.xlane.xlu0 %1465
    %v1467 = vsel %vm304, %v1463, 0.0
    %1468 = vadd.xlane.f32.xlu0 %v1467
    %v1469 = vpop.xlane.xlu0 %1468
    %v1470 = vrot.slane %v208, 3
    %v1471 = vsel %vm304, %v1470, 0
    %v1474 = vsel %vm304, %v1450, 0
    %v1477 = vsel %vm304, %v1455, 0
    %1479 = vmatprep.subr.mxu0 0.0
    %1480 = vmatpush1.xpose.msra.mxu0 %v1474
    %1481 = vmatprep.subr.mxu0 0.0
    %1482 = vmatpush1.xpose.msra.mxu0 %v1477
    %1483 = vmatprep.subr.mxu0 0.0
    %1484 = vmatpush1.xpose.msra.mxu0 0.0
    %1485 = vmatprep.subr.mxu0 0.0
    %1486 = vmatpush1.xpose.msra.mxu0 0.0
    %1487 = vmatprep.subr.mxu0 0.0
    %1488 = vmatpush1.xpose.msra.mxu0 0.0
    %1489 = vmatprep.subr.mxu0 0.0
    %1490 = vmatpush1.xpose.msra.mxu0 0.0
    %1491 = vmatprep.subr.mxu0 0.0
    %1492 = vmatpush1.xpose.msra.mxu0 0.0
    %1493 = vmatprep.subr.mxu0 0.0
    %1494 = vmatpush1.xpose.msra.mxu0 0.0
    %1495 = vmatprep.subr.mxu0 0.0
    %1496 = vmatpush1.xpose.msra.mxu0 0.0
    %1497 = vmatprep.subr.mxu0 0.0
    %1498 = vmatpush1.xpose.msra.mxu0 0.0
    %1499 = vmatprep.subr.mxu0 0.0
    %1500 = vmatpush1.xpose.msra.mxu0 0.0
    %1501 = vmatprep.subr.mxu0 0.0
    %1502 = vmatpush1.xpose.msra.mxu0 0.0
    %1503 = vmatprep.subr.mxu0 0.0
    %1504 = vmatpush1.xpose.msra.mxu0 0.0
    %1505 = vmatprep.subr.mxu0 0.0
    %1506 = vmatpush1.xpose.msra.mxu0 0.0
    %1507 = vmatprep.subr.mxu0 0.0
    %1508 = vmatpush1.xpose.msra.mxu0 0.0
    %1509 = vmatprep.subr.mxu0 0.0
    %1510 = vmatpush1.xpose.msra.mxu0 0.0
    %1511 = vmatprep.subr.mxu0 0.0
    %1512 = vmatpush1.xpose.msra.mxu0 0.0
    %1513 = vmatprep.subr.mxu0 0.0
    %1514 = vmatpush1.xpose.msra.mxu0 0.0
    %1515 = vmatprep.subr.mxu0 0.0
    %1516 = vmatpush1.xpose.msra.mxu0 0.0
    %1517 = vmatprep.subr.mxu0 0.0
    %1518 = vmatpush1.xpose.msra.mxu0 0.0
    %1519 = vmatprep.subr.mxu0 0.0
    %1520 = vmatpush1.xpose.msra.mxu0 0.0
    %1521 = vmatprep.subr.mxu0 0.0
    %1522 = vmatpush1.xpose.msra.mxu0 0.0
    %1523 = vmatprep.subr.mxu0 0.0
    %1524 = vmatpush1.xpose.msra.mxu0 0.0
    %1525 = vmatprep.subr.mxu0 0.0
    %1526 = vmatpush1.xpose.msra.mxu0 0.0
    %1527 = vmatprep.subr.mxu0 0.0
    %1528 = vmatpush1.xpose.msra.mxu0 0.0
    %1529 = vmatprep.subr.mxu0 0.0
    %1530 = vmatpush1.xpose.msra.mxu0 0.0
    %1531 = vmatprep.subr.mxu0 0.0
    %1532 = vmatpush1.xpose.msra.mxu0 0.0
    %1533 = vmatprep.subr.mxu0 0.0
    %1534 = vmatpush1.xpose.msra.mxu0 0.0
    %1535 = vmatprep.subr.mxu0 0.0
    %1536 = vmatpush1.xpose.msra.mxu0 0.0
    %1537 = vmatprep.subr.mxu0 0.0
    %1538 = vmatpush1.xpose.msra.mxu0 0.0
    %1539 = vmatprep.subr.mxu0 0.0
    %1540 = vmatpush1.xpose.msra.mxu0 0.0
    %1541 = vmatprep.subr.mxu0 0.0
    %1542 = vmatpush1.xpose.msra.mxu0 0.0
    %1543 = vmatprep.mubr.f32.mxu0 0.0
    %1544 = vmatmul.mubr.f32.gmra.mrb[0].mxu0 %v1471
    %v1545 = vpop.f32.mrb[0].mxu0
    %v1546 = vadd.f32 0.0, %v1545
    %v1547 = vpop.f32.mrb[0].mxu0
    %1548 = vdwg.mxu0
    %v1549 = vlaneseq
    %v1550 = vshrl.u32 %v1549, 7
    %v1551 = vsub.s32 0, %v1550
    %v1552 = vrot.slane %v1546, %v1551
    %v1553 = vadd.f32 %v1466, %v1552
    %v1554 = vadd.f32 %v1469, %v1552
    %v1555 = vmul.f32 %v1553, 0.2
    %v1556 = vmul.f32 %v1554, 0.2
    %v1557 = vmax.f32 %v1553, %v1555
    %v1558 = vmax.f32 %v1554, %v1556
    %v1559 = vsel %vm204, %v1557, -1e+30
    %v1560 = vsel %vm205, %v1558, -1e+30
    %v1561 = vsel %vm118, %v1559, -inf
    %1562 = vmax.xlane.f32.xlu0 %v1561
    %v1563 = vpop.xlane.xlu0 %1562
    %v1564 = vsel %vm118, %v1560, -inf
    %1565 = vmax.xlane.f32.xlu0 %v1564
    %v1566 = vpop.xlane.xlu0 %1565
    %v1567 = vsub.f32 %v1559, %v1563
    %v1568 = vsub.f32 %v1560, %v1566
    %v1569 = vmul.f32 %v1567, 1.442695
    %v1570 = vpow.pop %v1569
    %v1571 = vmul.f32 %v1568, 1.442695
    %v1572 = vpow.pop %v1571
    %v1573 = vsel %vm118, %v1570, 0.0
    %1574 = vadd.xlane.f32.xlu0 %v1573
    %v1575 = vpop.xlane.xlu0 %1574
    %v1576 = vsel %vm118, %v1572, 0.0
    %1577 = vadd.xlane.f32.xlu0 %v1576
    %v1578 = vpop.xlane.xlu0 %1577
    %v1579 = vrcp.pop %v1575
    %v1580 = vmul.f32 %v1570, %v1579
    %v1581 = vrcp.pop %v1578
    %v1582 = vmul.f32 %v1572, %v1581
    %v1583 = vlaneseq
    %v1584 = vshrl.u32 %v1583, 7
    %v1585 = vsub.s32 3, %v1584
    %v1586 = vrot.slane %v210, %v1585
    %v1588 = vsel %vm118, %v1580, 0
    %v1591 = vsel %vm118, %v1582, 0
    %1593 = vmatprep.subr.mxu0 0.0
    %1594 = vmatpush1.msra.mxu0 %v1450
    %1595 = vmatprep.subr.mxu0 0.0
    %1596 = vmatpush1.msra.mxu0 %v1455
    %1597 = vmatprep.subr.mxu0 0.0
    %1598 = vmatpush1.msra.mxu0 0.0
    %1599 = vmatprep.subr.mxu0 0.0
    %1600 = vmatpush1.msra.mxu0 0.0
    %1601 = vmatprep.subr.mxu0 0.0
    %1602 = vmatpush1.msra.mxu0 0.0
    %1603 = vmatprep.subr.mxu0 0.0
    %1604 = vmatpush1.msra.mxu0 0.0
    %1605 = vmatprep.subr.mxu0 0.0
    %1606 = vmatpush1.msra.mxu0 0.0
    %1607 = vmatprep.subr.mxu0 0.0
    %1608 = vmatpush1.msra.mxu0 0.0
    %1609 = vmatprep.subr.mxu0 0.0
    %1610 = vmatpush1.msra.mxu0 0.0
    %1611 = vmatprep.subr.mxu0 0.0
    %1612 = vmatpush1.msra.mxu0 0.0
    %1613 = vmatprep.subr.mxu0 0.0
    %1614 = vmatpush1.msra.mxu0 0.0
    %1615 = vmatprep.subr.mxu0 0.0
    %1616 = vmatpush1.msra.mxu0 0.0
    %1617 = vmatprep.subr.mxu0 0.0
    %1618 = vmatpush1.msra.mxu0 0.0
    %1619 = vmatprep.subr.mxu0 0.0
    %1620 = vmatpush1.msra.mxu0 0.0
    %1621 = vmatprep.subr.mxu0 0.0
    %1622 = vmatpush1.msra.mxu0 0.0
    %1623 = vmatprep.subr.mxu0 0.0
    %1624 = vmatpush1.msra.mxu0 0.0
    %1625 = vmatprep.subr.mxu0 0.0
    %1626 = vmatpush1.msra.mxu0 0.0
    %1627 = vmatprep.subr.mxu0 0.0
    %1628 = vmatpush1.msra.mxu0 0.0
    %1629 = vmatprep.subr.mxu0 0.0
    %1630 = vmatpush1.msra.mxu0 0.0
    %1631 = vmatprep.subr.mxu0 0.0
    %1632 = vmatpush1.msra.mxu0 0.0
    %1633 = vmatprep.subr.mxu0 0.0
    %1634 = vmatpush1.msra.mxu0 0.0
    %1635 = vmatprep.subr.mxu0 0.0
    %1636 = vmatpush1.msra.mxu0 0.0
    %1637 = vmatprep.subr.mxu0 0.0
    %1638 = vmatpush1.msra.mxu0 0.0
    %1639 = vmatprep.subr.mxu0 0.0
    %1640 = vmatpush1.msra.mxu0 0.0
    %1641 = vmatprep.subr.mxu0 0.0
    %1642 = vmatpush1.msra.mxu0 0.0
    %1643 = vmatprep.subr.mxu0 0.0
    %1644 = vmatpush1.msra.mxu0 0.0
    %1645 = vmatprep.subr.mxu0 0.0
    %1646 = vmatpush1.msra.mxu0 0.0
    %1647 = vmatprep.subr.mxu0 0.0
    %1648 = vmatpush1.msra.mxu0 0.0
    %1649 = vmatprep.subr.mxu0 0.0
    %1650 = vmatpush1.msra.mxu0 0.0
    %1651 = vmatprep.subr.mxu0 0.0
    %1652 = vmatpush1.msra.mxu0 0.0
    %1653 = vmatprep.subr.mxu0 0.0
    %1654 = vmatpush1.msra.mxu0 0.0
    %1655 = vmatprep.subr.mxu0 0.0
    %1656 = vmatpush1.msra.mxu0 0.0
    %1657 = vmatprep.mubr.f32.mxu0 0.0
    %1658 = vmatmul.mubr.f32.gmra.mrb[0].mxu0 %v1588
    %v1659 = vpop.f32.mrb[0].mxu0
    %v1660 = vadd.f32 %v1586, %v1659
    %v1661 = vpop.f32.mrb[0].mxu0
    %1662 = vmatprep.mubr.f32.mxu0 0.0
    %1663 = vmatmul.mubr.f32.gmra.mrb[0].mxu0 %v1591
    %v1664 = vpop.f32.mrb[0].mxu0
    %v1665 = vadd.f32 %v1586, %v1664
    %v1666 = vpop.f32.mrb[0].mxu0
    %1667 = vdwg.mxu0
    %vm1668 = vcmp.gt.f32.partialorder %v1660, 0.0
    %vm1669 = vcmp.gt.f32.partialorder %v1665, 0.0
    %v1670 = vmul.f32 %v1660, 1.442695
    %v1671 = vpow.pop %v1670
    %v1672 = vmul.f32 %v1665, 1.442695
    %v1673 = vpow.pop %v1672
    %v1674 = vsub.f32 %v1671, 1.0
    %v1675 = vsub.f32 %v1673, 1.0
    %v1676 = vsel %vm1668, %v1660, %v1674
    %v1677 = vsel %vm1669, %v1665, %v1675
    %s1678 = scalar_lea.vmem [#allocation2], 96
    %v1679 = vld [vmem:[%s1678] sm:$0xff]
    %v1680 = vld [vmem:[%s1678 + $0x8] sm:$0xff]
    %v1681 = vld [vmem:[%s1678 + $0x10] sm:$0xff]
    %v1682 = vld [vmem:[%s1678 + $0x18] sm:$0xff]
    %v1684 = vsel %vm304, %v1676, 0
    %v1687 = vsel %vm304, %v1677, 0
    %1689 = vmatprep.subr.mxu0 0.0
    %1690 = vmatpush1.msra.mxu0 %v1679
    %1691 = vmatprep.subr.mxu0 0.0
    %1692 = vmatpush1.msra.mxu0 %v1680
    %1693 = vmatprep.subr.mxu0 0.0
    %1694 = vmatpush1.msra.mxu0 %v1681
    %1695 = vmatprep.subr.mxu0 0.0
    %1696 = vmatpush1.msra.mxu0 %v1682
    %1697 = vmatprep.subr.mxu0 0.0
    %1698 = vmatpush1.msra.mxu0 0.0
    %1699 = vmatprep.subr.mxu0 0.0
    %1700 = vmatpush1.msra.mxu0 0.0
    %1701 = vmatprep.subr.mxu0 0.0
    %1702 = vmatpush1.msra.mxu0 0.0
    %1703 = vmatprep.subr.mxu0 0.0
    %1704 = vmatpush1.msra.mxu0 0.0
    %1705 = vmatprep.subr.mxu0 0.0
    %1706 = vmatpush1.msra.mxu0 0.0
    %1707 = vmatprep.subr.mxu0 0.0
    %1708 = vmatpush1.msra.mxu0 0.0
    %1709 = vmatprep.subr.mxu0 0.0
    %1710 = vmatpush1.msra.mxu0 0.0
    %1711 = vmatprep.subr.mxu0 0.0
    %1712 = vmatpush1.msra.mxu0 0.0
    %1713 = vmatprep.subr.mxu0 0.0
    %1714 = vmatpush1.msra.mxu0 0.0
    %1715 = vmatprep.subr.mxu0 0.0
    %1716 = vmatpush1.msra.mxu0 0.0
    %1717 = vmatprep.subr.mxu0 0.0
    %1718 = vmatpush1.msra.mxu0 0.0
    %1719 = vmatprep.subr.mxu0 0.0
    %1720 = vmatpush1.msra.mxu0 0.0
    %1721 = vmatprep.subr.mxu0 0.0
    %1722 = vmatpush1.msra.mxu0 0.0
    %1723 = vmatprep.subr.mxu0 0.0
    %1724 = vmatpush1.msra.mxu0 0.0
    %1725 = vmatprep.subr.mxu0 0.0
    %1726 = vmatpush1.msra.mxu0 0.0
    %1727 = vmatprep.subr.mxu0 0.0
    %1728 = vmatpush1.msra.mxu0 0.0
    %1729 = vmatprep.subr.mxu0 0.0
    %1730 = vmatpush1.msra.mxu0 0.0
    %1731 = vmatprep.subr.mxu0 0.0
    %1732 = vmatpush1.msra.mxu0 0.0
    %1733 = vmatprep.subr.mxu0 0.0
    %1734 = vmatpush1.msra.mxu0 0.0
    %1735 = vmatprep.subr.mxu0 0.0
    %1736 = vmatpush1.msra.mxu0 0.0
    %1737 = vmatprep.subr.mxu0 0.0
    %1738 = vmatpush1.msra.mxu0 0.0
    %1739 = vmatprep.subr.mxu0 0.0
    %1740 = vmatpush1.msra.mxu0 0.0
    %1741 = vmatprep.subr.mxu0 0.0
    %1742 = vmatpush1.msra.mxu0 0.0
    %1743 = vmatprep.subr.mxu0 0.0
    %1744 = vmatpush1.msra.mxu0 0.0
    %1745 = vmatprep.subr.mxu0 0.0
    %1746 = vmatpush1.msra.mxu0 0.0
    %1747 = vmatprep.subr.mxu0 0.0
    %1748 = vmatpush1.msra.mxu0 0.0
    %1749 = vmatprep.subr.mxu0 0.0
    %1750 = vmatpush1.msra.mxu0 0.0
    %1751 = vmatprep.subr.mxu0 0.0
    %1752 = vmatpush1.msra.mxu0 0.0
    %1753 = vmatprep.mubr.f32.mxu0 0.0
    %1754 = vmatmul.mubr.f32.gmra.mrb[0].mxu0 %v1684
    %v1755 = vpop.f32.mrb[0].mxu0
    %v1756 = vadd.f32 0.0, %v1755
    %v1757 = vpop.f32.mrb[0].mxu0
    %1758 = vmatprep.mubr.f32.mxu0 0.0
    %1759 = vmatmul.mubr.f32.gmra.mrb[0].mxu0 %v1687
    %v1760 = vpop.f32.mrb[0].mxu0
    %v1761 = vadd.f32 0.0, %v1760
    %v1762 = vpop.f32.mrb[0].mxu0
    %1763 = vdwg.mxu0
    %v1764 = vadd.f32 %v1376, %v1756
    %v1765 = vadd.f32 %v1377, %v1761
    %s1766 = scalar_lea.vmem %s3, 16
    %v1767 = vld [vmem:[%s1766] sm:$0x7]
    %v1769 = vsel %vm219, %v1767, 0
    %1771 = vmatprep.subr.mxu0 0.0
    %1772 = vmatpush1.msra.mxu0 %v1769
    %1773 = vmatprep.subr.mxu0 0.0
    %1774 = vmatpush1.msra.mxu0 0.0
    %1775 = vmatprep.subr.mxu0 0.0
    %1776 = vmatpush1.msra.mxu0 0.0
    %1777 = vmatprep.subr.mxu0 0.0
    %1778 = vmatpush1.msra.mxu0 0.0
    %1779 = vmatprep.subr.mxu0 0.0
    %1780 = vmatpush1.msra.mxu0 0.0
    %1781 = vmatprep.subr.mxu0 0.0
    %1782 = vmatpush1.msra.mxu0 0.0
    %1783 = vmatprep.subr.mxu0 0.0
    %1784 = vmatpush1.msra.mxu0 0.0
    %1785 = vmatprep.subr.mxu0 0.0
    %1786 = vmatpush1.msra.mxu0 0.0
    %1787 = vmatprep.subr.mxu0 0.0
    %1788 = vmatpush1.msra.mxu0 0.0
    %1789 = vmatprep.subr.mxu0 0.0
    %1790 = vmatpush1.msra.mxu0 0.0
    %1791 = vmatprep.subr.mxu0 0.0
    %1792 = vmatpush1.msra.mxu0 0.0
    %1793 = vmatprep.subr.mxu0 0.0
    %1794 = vmatpush1.msra.mxu0 0.0
    %1795 = vmatprep.subr.mxu0 0.0
    %1796 = vmatpush1.msra.mxu0 0.0
    %1797 = vmatprep.subr.mxu0 0.0
    %1798 = vmatpush1.msra.mxu0 0.0
    %1799 = vmatprep.subr.mxu0 0.0
    %1800 = vmatpush1.msra.mxu0 0.0
    %1801 = vmatprep.subr.mxu0 0.0
    %1802 = vmatpush1.msra.mxu0 0.0
    %1803 = vmatprep.subr.mxu0 0.0
    %1804 = vmatpush1.msra.mxu0 0.0
    %1805 = vmatprep.subr.mxu0 0.0
    %1806 = vmatpush1.msra.mxu0 0.0
    %1807 = vmatprep.subr.mxu0 0.0
    %1808 = vmatpush1.msra.mxu0 0.0
    %1809 = vmatprep.subr.mxu0 0.0
    %1810 = vmatpush1.msra.mxu0 0.0
    %1811 = vmatprep.subr.mxu0 0.0
    %1812 = vmatpush1.msra.mxu0 0.0
    %1813 = vmatprep.subr.mxu0 0.0
    %1814 = vmatpush1.msra.mxu0 0.0
    %1815 = vmatprep.subr.mxu0 0.0
    %1816 = vmatpush1.msra.mxu0 0.0
    %1817 = vmatprep.subr.mxu0 0.0
    %1818 = vmatpush1.msra.mxu0 0.0
    %1819 = vmatprep.subr.mxu0 0.0
    %1820 = vmatpush1.msra.mxu0 0.0
    %1821 = vmatprep.subr.mxu0 0.0
    %1822 = vmatpush1.msra.mxu0 0.0
    %1823 = vmatprep.subr.mxu0 0.0
    %1824 = vmatpush1.msra.mxu0 0.0
    %1825 = vmatprep.subr.mxu0 0.0
    %1826 = vmatpush1.msra.mxu0 0.0
    %1827 = vmatprep.subr.mxu0 0.0
    %1828 = vmatpush1.msra.mxu0 0.0
    %1829 = vmatprep.subr.mxu0 0.0
    %1830 = vmatpush1.msra.mxu0 0.0
    %1831 = vmatprep.subr.mxu0 0.0
    %1832 = vmatpush1.msra.mxu0 0.0
    %1833 = vmatprep.subr.mxu0 0.0
    %1834 = vmatpush1.msra.mxu0 0.0
    %1835 = vmatprep.mubr.f32.mxu0 0.0
    %1836 = vmatmul.mubr.f32.gmra.mrb[0].mxu0 %v214
    %v1837 = vpop.f32.mrb[0].mxu0
    %v1838 = vadd.f32 0.0, %v1837
    %v1839 = vpop.f32.mrb[0].mxu0
    %1840 = vmatprep.mubr.f32.mxu0 0.0
    %1841 = vmatmul.mubr.f32.gmra.mrb[0].mxu0 %v217
    %v1842 = vpop.f32.mrb[0].mxu0
    %v1843 = vadd.f32 0.0, %v1842
    %v1844 = vpop.f32.mrb[0].mxu0
    %1845 = vdwg.mxu0
    %v1846 = vlaneseq
    %v1847 = vshrl.u32 %v1846, 7
    %v1848 = vsub.s32 4, %v1847
    %v1849 = vrot.slane %v209, %v1848
    %v1850 = vmul.f32 %v1838, %v1849
    %v1851 = vmul.f32 %v1843, %v1849
    %v1852 = vsel %vm304, %v1850, 0.0
    %1853 = vadd.xlane.f32.xlu0 %v1852
    %v1854 = vpop.xlane.xlu0 %1853
    %v1855 = vsel %vm304, %v1851, 0.0
    %1856 = vadd.xlane.f32.xlu0 %v1855
    %v1857 = vpop.xlane.xlu0 %1856
    %v1858 = vrot.slane %v208, 4
    %v1859 = vsel %vm304, %v1858, 0
    %v1862 = vsel %vm304, %v1838, 0
    %v1865 = vsel %vm304, %v1843, 0
    %1867 = vmatprep.subr.mxu0 0.0
    %1868 = vmatpush1.xpose.msra.mxu0 %v1862
    %1869 = vmatprep.subr.mxu0 0.0
    %1870 = vmatpush1.xpose.msra.mxu0 %v1865
    %1871 = vmatprep.subr.mxu0 0.0
    %1872 = vmatpush1.xpose.msra.mxu0 0.0
    %1873 = vmatprep.subr.mxu0 0.0
    %1874 = vmatpush1.xpose.msra.mxu0 0.0
    %1875 = vmatprep.subr.mxu0 0.0
    %1876 = vmatpush1.xpose.msra.mxu0 0.0
    %1877 = vmatprep.subr.mxu0 0.0
    %1878 = vmatpush1.xpose.msra.mxu0 0.0
    %1879 = vmatprep.subr.mxu0 0.0
    %1880 = vmatpush1.xpose.msra.mxu0 0.0
    %1881 = vmatprep.subr.mxu0 0.0
    %1882 = vmatpush1.xpose.msra.mxu0 0.0
    %1883 = vmatprep.subr.mxu0 0.0
    %1884 = vmatpush1.xpose.msra.mxu0 0.0
    %1885 = vmatprep.subr.mxu0 0.0
    %1886 = vmatpush1.xpose.msra.mxu0 0.0
    %1887 = vmatprep.subr.mxu0 0.0
    %1888 = vmatpush1.xpose.msra.mxu0 0.0
    %1889 = vmatprep.subr.mxu0 0.0
    %1890 = vmatpush1.xpose.msra.mxu0 0.0
    %1891 = vmatprep.subr.mxu0 0.0
    %1892 = vmatpush1.xpose.msra.mxu0 0.0
    %1893 = vmatprep.subr.mxu0 0.0
    %1894 = vmatpush1.xpose.msra.mxu0 0.0
    %1895 = vmatprep.subr.mxu0 0.0
    %1896 = vmatpush1.xpose.msra.mxu0 0.0
    %1897 = vmatprep.subr.mxu0 0.0
    %1898 = vmatpush1.xpose.msra.mxu0 0.0
    %1899 = vmatprep.subr.mxu0 0.0
    %1900 = vmatpush1.xpose.msra.mxu0 0.0
    %1901 = vmatprep.subr.mxu0 0.0
    %1902 = vmatpush1.xpose.msra.mxu0 0.0
    %1903 = vmatprep.subr.mxu0 0.0
    %1904 = vmatpush1.xpose.msra.mxu0 0.0
    %1905 = vmatprep.subr.mxu0 0.0
    %1906 = vmatpush1.xpose.msra.mxu0 0.0
    %1907 = vmatprep.subr.mxu0 0.0
    %1908 = vmatpush1.xpose.msra.mxu0 0.0
    %1909 = vmatprep.subr.mxu0 0.0
    %1910 = vmatpush1.xpose.msra.mxu0 0.0
    %1911 = vmatprep.subr.mxu0 0.0
    %1912 = vmatpush1.xpose.msra.mxu0 0.0
    %1913 = vmatprep.subr.mxu0 0.0
    %1914 = vmatpush1.xpose.msra.mxu0 0.0
    %1915 = vmatprep.subr.mxu0 0.0
    %1916 = vmatpush1.xpose.msra.mxu0 0.0
    %1917 = vmatprep.subr.mxu0 0.0
    %1918 = vmatpush1.xpose.msra.mxu0 0.0
    %1919 = vmatprep.subr.mxu0 0.0
    %1920 = vmatpush1.xpose.msra.mxu0 0.0
    %1921 = vmatprep.subr.mxu0 0.0
    %1922 = vmatpush1.xpose.msra.mxu0 0.0
    %1923 = vmatprep.subr.mxu0 0.0
    %1924 = vmatpush1.xpose.msra.mxu0 0.0
    %1925 = vmatprep.subr.mxu0 0.0
    %1926 = vmatpush1.xpose.msra.mxu0 0.0
    %1927 = vmatprep.subr.mxu0 0.0
    %1928 = vmatpush1.xpose.msra.mxu0 0.0
    %1929 = vmatprep.subr.mxu0 0.0
    %1930 = vmatpush1.xpose.msra.mxu0 0.0
    %1931 = vmatprep.mubr.f32.mxu0 0.0
    %1932 = vmatmul.mubr.f32.gmra.mrb[0].mxu0 %v1859
    %v1933 = vpop.f32.mrb[0].mxu0
    %v1934 = vadd.f32 0.0, %v1933
    %v1935 = vpop.f32.mrb[0].mxu0
    %1936 = vdwg.mxu0
    %v1937 = vlaneseq
    %v1938 = vshrl.u32 %v1937, 7
    %v1939 = vsub.s32 0, %v1938
    %v1940 = vrot.slane %v1934, %v1939
    %v1941 = vadd.f32 %v1854, %v1940
    %v1942 = vadd.f32 %v1857, %v1940
    %v1943 = vmul.f32 %v1941, 0.2
    %v1944 = vmul.f32 %v1942, 0.2
    %v1945 = vmax.f32 %v1941, %v1943
    %v1946 = vmax.f32 %v1942, %v1944
    %v1947 = vsel %vm204, %v1945, -1e+30
    %v1948 = vsel %vm205, %v1946, -1e+30
    %v1949 = vsel %vm118, %v1947, -inf
    %1950 = vmax.xlane.f32.xlu0 %v1949
    %v1951 = vpop.xlane.xlu0 %1950
    %v1952 = vsel %vm118, %v1948, -inf
    %1953 = vmax.xlane.f32.xlu0 %v1952
    %v1954 = vpop.xlane.xlu0 %1953
    %v1955 = vsub.f32 %v1947, %v1951
    %v1956 = vsub.f32 %v1948, %v1954
    %v1957 = vmul.f32 %v1955, 1.442695
    %v1958 = vpow.pop %v1957
    %v1959 = vmul.f32 %v1956, 1.442695
    %v1960 = vpow.pop %v1959
    %v1961 = vsel %vm118, %v1958, 0.0
    %1962 = vadd.xlane.f32.xlu0 %v1961
    %v1963 = vpop.xlane.xlu0 %1962
    %v1964 = vsel %vm118, %v1960, 0.0
    %1965 = vadd.xlane.f32.xlu0 %v1964
    %v1966 = vpop.xlane.xlu0 %1965
    %v1967 = vrcp.pop %v1963
    %v1968 = vmul.f32 %v1958, %v1967
    %v1969 = vrcp.pop %v1966
    %v1970 = vmul.f32 %v1960, %v1969
    %v1971 = vlaneseq
    %v1972 = vshrl.u32 %v1971, 7
    %v1973 = vsub.s32 4, %v1972
    %v1974 = vrot.slane %v210, %v1973
    %v1976 = vsel %vm118, %v1968, 0
    %v1979 = vsel %vm118, %v1970, 0
    %1981 = vmatprep.subr.mxu0 0.0
    %1982 = vmatpush1.msra.mxu0 %v1838
    %1983 = vmatprep.subr.mxu0 0.0
    %1984 = vmatpush1.msra.mxu0 %v1843
    %1985 = vmatprep.subr.mxu0 0.0
    %1986 = vmatpush1.msra.mxu0 0.0
    %1987 = vmatprep.subr.mxu0 0.0
    %1988 = vmatpush1.msra.mxu0 0.0
    %1989 = vmatprep.subr.mxu0 0.0
    %1990 = vmatpush1.msra.mxu0 0.0
    %1991 = vmatprep.subr.mxu0 0.0
    %1992 = vmatpush1.msra.mxu0 0.0
    %1993 = vmatprep.subr.mxu0 0.0
    %1994 = vmatpush1.msra.mxu0 0.0
    %1995 = vmatprep.subr.mxu0 0.0
    %1996 = vmatpush1.msra.mxu0 0.0
    %1997 = vmatprep.subr.mxu0 0.0
    %1998 = vmatpush1.msra.mxu0 0.0
    %1999 = vmatprep.subr.mxu0 0.0
    %2000 = vmatpush1.msra.mxu0 0.0
    %2001 = vmatprep.subr.mxu0 0.0
    %2002 = vmatpush1.msra.mxu0 0.0
    %2003 = vmatprep.subr.mxu0 0.0
    %2004 = vmatpush1.msra.mxu0 0.0
    %2005 = vmatprep.subr.mxu0 0.0
    %2006 = vmatpush1.msra.mxu0 0.0
    %2007 = vmatprep.subr.mxu0 0.0
    %2008 = vmatpush1.msra.mxu0 0.0
    %2009 = vmatprep.subr.mxu0 0.0
    %2010 = vmatpush1.msra.mxu0 0.0
    %2011 = vmatprep.subr.mxu0 0.0
    %2012 = vmatpush1.msra.mxu0 0.0
    %2013 = vmatprep.subr.mxu0 0.0
    %2014 = vmatpush1.msra.mxu0 0.0
    %2015 = vmatprep.subr.mxu0 0.0
    %2016 = vmatpush1.msra.mxu0 0.0
    %2017 = vmatprep.subr.mxu0 0.0
    %2018 = vmatpush1.msra.mxu0 0.0
    %2019 = vmatprep.subr.mxu0 0.0
    %2020 = vmatpush1.msra.mxu0 0.0
    %2021 = vmatprep.subr.mxu0 0.0
    %2022 = vmatpush1.msra.mxu0 0.0
    %2023 = vmatprep.subr.mxu0 0.0
    %2024 = vmatpush1.msra.mxu0 0.0
    %2025 = vmatprep.subr.mxu0 0.0
    %2026 = vmatpush1.msra.mxu0 0.0
    %2027 = vmatprep.subr.mxu0 0.0
    %2028 = vmatpush1.msra.mxu0 0.0
    %2029 = vmatprep.subr.mxu0 0.0
    %2030 = vmatpush1.msra.mxu0 0.0
    %2031 = vmatprep.subr.mxu0 0.0
    %2032 = vmatpush1.msra.mxu0 0.0
    %2033 = vmatprep.subr.mxu0 0.0
    %2034 = vmatpush1.msra.mxu0 0.0
    %2035 = vmatprep.subr.mxu0 0.0
    %2036 = vmatpush1.msra.mxu0 0.0
    %2037 = vmatprep.subr.mxu0 0.0
    %2038 = vmatpush1.msra.mxu0 0.0
    %2039 = vmatprep.subr.mxu0 0.0
    %2040 = vmatpush1.msra.mxu0 0.0
    %2041 = vmatprep.subr.mxu0 0.0
    %2042 = vmatpush1.msra.mxu0 0.0
    %2043 = vmatprep.subr.mxu0 0.0
    %2044 = vmatpush1.msra.mxu0 0.0
    %2045 = vmatprep.mubr.f32.mxu0 0.0
    %2046 = vmatmul.mubr.f32.gmra.mrb[0].mxu0 %v1976
    %v2047 = vpop.f32.mrb[0].mxu0
    %v2048 = vadd.f32 %v1974, %v2047
    %v2049 = vpop.f32.mrb[0].mxu0
    %2050 = vmatprep.mubr.f32.mxu0 0.0
    %2051 = vmatmul.mubr.f32.gmra.mrb[0].mxu0 %v1979
    %v2052 = vpop.f32.mrb[0].mxu0
    %v2053 = vadd.f32 %v1974, %v2052
    %v2054 = vpop.f32.mrb[0].mxu0
    %2055 = vdwg.mxu0
    %vm2056 = vcmp.gt.f32.partialorder %v2048, 0.0
    %vm2057 = vcmp.gt.f32.partialorder %v2053, 0.0
    %v2058 = vmul.f32 %v2048, 1.442695
    %v2059 = vpow.pop %v2058
    %v2060 = vmul.f32 %v2053, 1.442695
    %v2061 = vpow.pop %v2060
    %v2062 = vsub.f32 %v2059, 1.0
    %v2063 = vsub.f32 %v2061, 1.0
    %v2064 = vsel %vm2056, %v2048, %v2062
    %v2065 = vsel %vm2057, %v2053, %v2063
    %s2066 = scalar_lea.vmem [#allocation2], 128
    %v2067 = vld [vmem:[%s2066] sm:$0xff]
    %v2068 = vld [vmem:[%s2066 + $0x8] sm:$0xff]
    %v2069 = vld [vmem:[%s2066 + $0x10] sm:$0xff]
    %v2070 = vld [vmem:[%s2066 + $0x18] sm:$0xff]
    %v2072 = vsel %vm304, %v2064, 0
    %v2075 = vsel %vm304, %v2065, 0
    %2077 = vmatprep.subr.mxu0 0.0
    %2078 = vmatpush1.msra.mxu0 %v2067
    %2079 = vmatprep.subr.mxu0 0.0
    %2080 = vmatpush1.msra.mxu0 %v2068
    %2081 = vmatprep.subr.mxu0 0.0
    %2082 = vmatpush1.msra.mxu0 %v2069
    %2083 = vmatprep.subr.mxu0 0.0
    %2084 = vmatpush1.msra.mxu0 %v2070
    %2085 = vmatprep.subr.mxu0 0.0
    %2086 = vmatpush1.msra.mxu0 0.0
    %2087 = vmatprep.subr.mxu0 0.0
    %2088 = vmatpush1.msra.mxu0 0.0
    %2089 = vmatprep.subr.mxu0 0.0
    %2090 = vmatpush1.msra.mxu0 0.0
    %2091 = vmatprep.subr.mxu0 0.0
    %2092 = vmatpush1.msra.mxu0 0.0
    %2093 = vmatprep.subr.mxu0 0.0
    %2094 = vmatpush1.msra.mxu0 0.0
    %2095 = vmatprep.subr.mxu0 0.0
    %2096 = vmatpush1.msra.mxu0 0.0
    %2097 = vmatprep.subr.mxu0 0.0
    %2098 = vmatpush1.msra.mxu0 0.0
    %2099 = vmatprep.subr.mxu0 0.0
    %2100 = vmatpush1.msra.mxu0 0.0
    %2101 = vmatprep.subr.mxu0 0.0
    %2102 = vmatpush1.msra.mxu0 0.0
    %2103 = vmatprep.subr.mxu0 0.0
    %2104 = vmatpush1.msra.mxu0 0.0
    %2105 = vmatprep.subr.mxu0 0.0
    %2106 = vmatpush1.msra.mxu0 0.0
    %2107 = vmatprep.subr.mxu0 0.0
    %2108 = vmatpush1.msra.mxu0 0.0
    %2109 = vmatprep.subr.mxu0 0.0
    %2110 = vmatpush1.msra.mxu0 0.0
    %2111 = vmatprep.subr.mxu0 0.0
    %2112 = vmatpush1.msra.mxu0 0.0
    %2113 = vmatprep.subr.mxu0 0.0
    %2114 = vmatpush1.msra.mxu0 0.0
    %2115 = vmatprep.subr.mxu0 0.0
    %2116 = vmatpush1.msra.mxu0 0.0
    %2117 = vmatprep.subr.mxu0 0.0
    %2118 = vmatpush1.msra.mxu0 0.0
    %2119 = vmatprep.subr.mxu0 0.0
    %2120 = vmatpush1.msra.mxu0 0.0
    %2121 = vmatprep.subr.mxu0 0.0
    %2122 = vmatpush1.msra.mxu0 0.0
    %2123 = vmatprep.subr.mxu0 0.0
    %2124 = vmatpush1.msra.mxu0 0.0
    %2125 = vmatprep.subr.mxu0 0.0
    %2126 = vmatpush1.msra.mxu0 0.0
    %2127 = vmatprep.subr.mxu0 0.0
    %2128 = vmatpush1.msra.mxu0 0.0
    %2129 = vmatprep.subr.mxu0 0.0
    %2130 = vmatpush1.msra.mxu0 0.0
    %2131 = vmatprep.subr.mxu0 0.0
    %2132 = vmatpush1.msra.mxu0 0.0
    %2133 = vmatprep.subr.mxu0 0.0
    %2134 = vmatpush1.msra.mxu0 0.0
    %2135 = vmatprep.subr.mxu0 0.0
    %2136 = vmatpush1.msra.mxu0 0.0
    %2137 = vmatprep.subr.mxu0 0.0
    %2138 = vmatpush1.msra.mxu0 0.0
    %2139 = vmatprep.subr.mxu0 0.0
    %2140 = vmatpush1.msra.mxu0 0.0
    %2141 = vmatprep.mubr.f32.mxu0 0.0
    %2142 = vmatmul.mubr.f32.gmra.mrb[0].mxu0 %v2072
    %v2143 = vpop.f32.mrb[0].mxu0
    %v2144 = vadd.f32 0.0, %v2143
    %v2145 = vpop.f32.mrb[0].mxu0
    %2146 = vmatprep.mubr.f32.mxu0 0.0
    %2147 = vmatmul.mubr.f32.gmra.mrb[0].mxu0 %v2075
    %v2148 = vpop.f32.mrb[0].mxu0
    %v2149 = vadd.f32 0.0, %v2148
    %v2150 = vpop.f32.mrb[0].mxu0
    %2151 = vdwg.mxu0
    %v2152 = vadd.f32 %v1764, %v2144
    %v2153 = vadd.f32 %v1765, %v2149
    %s2154 = scalar_lea.vmem %s3, 20
    %v2155 = vld [vmem:[%s2154] sm:$0x7]
    %v2157 = vsel %vm219, %v2155, 0
    %2159 = vmatprep.subr.mxu0 0.0
    %2160 = vmatpush1.msra.mxu0 %v2157
    %2161 = vmatprep.subr.mxu0 0.0
    %2162 = vmatpush1.msra.mxu0 0.0
    %2163 = vmatprep.subr.mxu0 0.0
    %2164 = vmatpush1.msra.mxu0 0.0
    %2165 = vmatprep.subr.mxu0 0.0
    %2166 = vmatpush1.msra.mxu0 0.0
    %2167 = vmatprep.subr.mxu0 0.0
    %2168 = vmatpush1.msra.mxu0 0.0
    %2169 = vmatprep.subr.mxu0 0.0
    %2170 = vmatpush1.msra.mxu0 0.0
    %2171 = vmatprep.subr.mxu0 0.0
    %2172 = vmatpush1.msra.mxu0 0.0
    %2173 = vmatprep.subr.mxu0 0.0
    %2174 = vmatpush1.msra.mxu0 0.0
    %2175 = vmatprep.subr.mxu0 0.0
    %2176 = vmatpush1.msra.mxu0 0.0
    %2177 = vmatprep.subr.mxu0 0.0
    %2178 = vmatpush1.msra.mxu0 0.0
    %2179 = vmatprep.subr.mxu0 0.0
    %2180 = vmatpush1.msra.mxu0 0.0
    %2181 = vmatprep.subr.mxu0 0.0
    %2182 = vmatpush1.msra.mxu0 0.0
    %2183 = vmatprep.subr.mxu0 0.0
    %2184 = vmatpush1.msra.mxu0 0.0
    %2185 = vmatprep.subr.mxu0 0.0
    %2186 = vmatpush1.msra.mxu0 0.0
    %2187 = vmatprep.subr.mxu0 0.0
    %2188 = vmatpush1.msra.mxu0 0.0
    %2189 = vmatprep.subr.mxu0 0.0
    %2190 = vmatpush1.msra.mxu0 0.0
    %2191 = vmatprep.subr.mxu0 0.0
    %2192 = vmatpush1.msra.mxu0 0.0
    %2193 = vmatprep.subr.mxu0 0.0
    %2194 = vmatpush1.msra.mxu0 0.0
    %2195 = vmatprep.subr.mxu0 0.0
    %2196 = vmatpush1.msra.mxu0 0.0
    %2197 = vmatprep.subr.mxu0 0.0
    %2198 = vmatpush1.msra.mxu0 0.0
    %2199 = vmatprep.subr.mxu0 0.0
    %2200 = vmatpush1.msra.mxu0 0.0
    %2201 = vmatprep.subr.mxu0 0.0
    %2202 = vmatpush1.msra.mxu0 0.0
    %2203 = vmatprep.subr.mxu0 0.0
    %2204 = vmatpush1.msra.mxu0 0.0
    %2205 = vmatprep.subr.mxu0 0.0
    %2206 = vmatpush1.msra.mxu0 0.0
    %2207 = vmatprep.subr.mxu0 0.0
    %2208 = vmatpush1.msra.mxu0 0.0
    %2209 = vmatprep.subr.mxu0 0.0
    %2210 = vmatpush1.msra.mxu0 0.0
    %2211 = vmatprep.subr.mxu0 0.0
    %2212 = vmatpush1.msra.mxu0 0.0
    %2213 = vmatprep.subr.mxu0 0.0
    %2214 = vmatpush1.msra.mxu0 0.0
    %2215 = vmatprep.subr.mxu0 0.0
    %2216 = vmatpush1.msra.mxu0 0.0
    %2217 = vmatprep.subr.mxu0 0.0
    %2218 = vmatpush1.msra.mxu0 0.0
    %2219 = vmatprep.subr.mxu0 0.0
    %2220 = vmatpush1.msra.mxu0 0.0
    %2221 = vmatprep.subr.mxu0 0.0
    %2222 = vmatpush1.msra.mxu0 0.0
    %2223 = vmatprep.mubr.f32.mxu0 0.0
    %2224 = vmatmul.mubr.f32.gmra.mrb[0].mxu0 %v214
    %v2225 = vpop.f32.mrb[0].mxu0
    %v2226 = vadd.f32 0.0, %v2225
    %v2227 = vpop.f32.mrb[0].mxu0
    %2228 = vmatprep.mubr.f32.mxu0 0.0
    %2229 = vmatmul.mubr.f32.gmra.mrb[0].mxu0 %v217
    %v2230 = vpop.f32.mrb[0].mxu0
    %v2231 = vadd.f32 0.0, %v2230
    %v2232 = vpop.f32.mrb[0].mxu0
    %2233 = vdwg.mxu0
    %v2234 = vlaneseq
    %v2235 = vshrl.u32 %v2234, 7
    %v2236 = vsub.s32 5, %v2235
    %v2237 = vrot.slane %v209, %v2236
    %v2238 = vmul.f32 %v2226, %v2237
    %v2239 = vmul.f32 %v2231, %v2237
    %v2240 = vsel %vm304, %v2238, 0.0
    %2241 = vadd.xlane.f32.xlu0 %v2240
    %v2242 = vpop.xlane.xlu0 %2241
    %v2243 = vsel %vm304, %v2239, 0.0
    %2244 = vadd.xlane.f32.xlu0 %v2243
    %v2245 = vpop.xlane.xlu0 %2244
    %v2246 = vrot.slane %v208, 5
    %v2247 = vsel %vm304, %v2246, 0
    %v2250 = vsel %vm304, %v2226, 0
    %v2253 = vsel %vm304, %v2231, 0
    %2255 = vmatprep.subr.mxu0 0.0
    %2256 = vmatpush1.xpose.msra.mxu0 %v2250
    %2257 = vmatprep.subr.mxu0 0.0
    %2258 = vmatpush1.xpose.msra.mxu0 %v2253
    %2259 = vmatprep.subr.mxu0 0.0
    %2260 = vmatpush1.xpose.msra.mxu0 0.0
    %2261 = vmatprep.subr.mxu0 0.0
    %2262 = vmatpush1.xpose.msra.mxu0 0.0
    %2263 = vmatprep.subr.mxu0 0.0
    %2264 = vmatpush1.xpose.msra.mxu0 0.0
    %2265 = vmatprep.subr.mxu0 0.0
    %2266 = vmatpush1.xpose.msra.mxu0 0.0
    %2267 = vmatprep.subr.mxu0 0.0
    %2268 = vmatpush1.xpose.msra.mxu0 0.0
    %2269 = vmatprep.subr.mxu0 0.0
    %2270 = vmatpush1.xpose.msra.mxu0 0.0
    %2271 = vmatprep.subr.mxu0 0.0
    %2272 = vmatpush1.xpose.msra.mxu0 0.0
    %2273 = vmatprep.subr.mxu0 0.0
    %2274 = vmatpush1.xpose.msra.mxu0 0.0
    %2275 = vmatprep.subr.mxu0 0.0
    %2276 = vmatpush1.xpose.msra.mxu0 0.0
    %2277 = vmatprep.subr.mxu0 0.0
    %2278 = vmatpush1.xpose.msra.mxu0 0.0
    %2279 = vmatprep.subr.mxu0 0.0
    %2280 = vmatpush1.xpose.msra.mxu0 0.0
    %2281 = vmatprep.subr.mxu0 0.0
    %2282 = vmatpush1.xpose.msra.mxu0 0.0
    %2283 = vmatprep.subr.mxu0 0.0
    %2284 = vmatpush1.xpose.msra.mxu0 0.0
    %2285 = vmatprep.subr.mxu0 0.0
    %2286 = vmatpush1.xpose.msra.mxu0 0.0
    %2287 = vmatprep.subr.mxu0 0.0
    %2288 = vmatpush1.xpose.msra.mxu0 0.0
    %2289 = vmatprep.subr.mxu0 0.0
    %2290 = vmatpush1.xpose.msra.mxu0 0.0
    %2291 = vmatprep.subr.mxu0 0.0
    %2292 = vmatpush1.xpose.msra.mxu0 0.0
    %2293 = vmatprep.subr.mxu0 0.0
    %2294 = vmatpush1.xpose.msra.mxu0 0.0
    %2295 = vmatprep.subr.mxu0 0.0
    %2296 = vmatpush1.xpose.msra.mxu0 0.0
    %2297 = vmatprep.subr.mxu0 0.0
    %2298 = vmatpush1.xpose.msra.mxu0 0.0
    %2299 = vmatprep.subr.mxu0 0.0
    %2300 = vmatpush1.xpose.msra.mxu0 0.0
    %2301 = vmatprep.subr.mxu0 0.0
    %2302 = vmatpush1.xpose.msra.mxu0 0.0
    %2303 = vmatprep.subr.mxu0 0.0
    %2304 = vmatpush1.xpose.msra.mxu0 0.0
    %2305 = vmatprep.subr.mxu0 0.0
    %2306 = vmatpush1.xpose.msra.mxu0 0.0
    %2307 = vmatprep.subr.mxu0 0.0
    %2308 = vmatpush1.xpose.msra.mxu0 0.0
    %2309 = vmatprep.subr.mxu0 0.0
    %2310 = vmatpush1.xpose.msra.mxu0 0.0
    %2311 = vmatprep.subr.mxu0 0.0
    %2312 = vmatpush1.xpose.msra.mxu0 0.0
    %2313 = vmatprep.subr.mxu0 0.0
    %2314 = vmatpush1.xpose.msra.mxu0 0.0
    %2315 = vmatprep.subr.mxu0 0.0
    %2316 = vmatpush1.xpose.msra.mxu0 0.0
    %2317 = vmatprep.subr.mxu0 0.0
    %2318 = vmatpush1.xpose.msra.mxu0 0.0
    %2319 = vmatprep.mubr.f32.mxu0 0.0
    %2320 = vmatmul.mubr.f32.gmra.mrb[0].mxu0 %v2247
    %v2321 = vpop.f32.mrb[0].mxu0
    %v2322 = vadd.f32 0.0, %v2321
    %v2323 = vpop.f32.mrb[0].mxu0
    %2324 = vdwg.mxu0
    %v2325 = vlaneseq
    %v2326 = vshrl.u32 %v2325, 7
    %v2327 = vsub.s32 0, %v2326
    %v2328 = vrot.slane %v2322, %v2327
    %v2329 = vadd.f32 %v2242, %v2328
    %v2330 = vadd.f32 %v2245, %v2328
    %v2331 = vmul.f32 %v2329, 0.2
    %v2332 = vmul.f32 %v2330, 0.2
    %v2333 = vmax.f32 %v2329, %v2331
    %v2334 = vmax.f32 %v2330, %v2332
    %v2335 = vsel %vm204, %v2333, -1e+30
    %v2336 = vsel %vm205, %v2334, -1e+30
    %v2337 = vsel %vm118, %v2335, -inf
    %2338 = vmax.xlane.f32.xlu0 %v2337
    %v2339 = vpop.xlane.xlu0 %2338
    %v2340 = vsel %vm118, %v2336, -inf
    %2341 = vmax.xlane.f32.xlu0 %v2340
    %v2342 = vpop.xlane.xlu0 %2341
    %v2343 = vsub.f32 %v2335, %v2339
    %v2344 = vsub.f32 %v2336, %v2342
    %v2345 = vmul.f32 %v2343, 1.442695
    %v2346 = vpow.pop %v2345
    %v2347 = vmul.f32 %v2344, 1.442695
    %v2348 = vpow.pop %v2347
    %v2349 = vsel %vm118, %v2346, 0.0
    %2350 = vadd.xlane.f32.xlu0 %v2349
    %v2351 = vpop.xlane.xlu0 %2350
    %v2352 = vsel %vm118, %v2348, 0.0
    %2353 = vadd.xlane.f32.xlu0 %v2352
    %v2354 = vpop.xlane.xlu0 %2353
    %v2355 = vrcp.pop %v2351
    %v2356 = vmul.f32 %v2346, %v2355
    %v2357 = vrcp.pop %v2354
    %v2358 = vmul.f32 %v2348, %v2357
    %v2359 = vlaneseq
    %v2360 = vshrl.u32 %v2359, 7
    %v2361 = vsub.s32 5, %v2360
    %v2362 = vrot.slane %v210, %v2361
    %v2364 = vsel %vm118, %v2356, 0
    %v2367 = vsel %vm118, %v2358, 0
    %2369 = vmatprep.subr.mxu0 0.0
    %2370 = vmatpush1.msra.mxu0 %v2226
    %2371 = vmatprep.subr.mxu0 0.0
    %2372 = vmatpush1.msra.mxu0 %v2231
    %2373 = vmatprep.subr.mxu0 0.0
    %2374 = vmatpush1.msra.mxu0 0.0
    %2375 = vmatprep.subr.mxu0 0.0
    %2376 = vmatpush1.msra.mxu0 0.0
    %2377 = vmatprep.subr.mxu0 0.0
    %2378 = vmatpush1.msra.mxu0 0.0
    %2379 = vmatprep.subr.mxu0 0.0
    %2380 = vmatpush1.msra.mxu0 0.0
    %2381 = vmatprep.subr.mxu0 0.0
    %2382 = vmatpush1.msra.mxu0 0.0
    %2383 = vmatprep.subr.mxu0 0.0
    %2384 = vmatpush1.msra.mxu0 0.0
    %2385 = vmatprep.subr.mxu0 0.0
    %2386 = vmatpush1.msra.mxu0 0.0
    %2387 = vmatprep.subr.mxu0 0.0
    %2388 = vmatpush1.msra.mxu0 0.0
    %2389 = vmatprep.subr.mxu0 0.0
    %2390 = vmatpush1.msra.mxu0 0.0
    %2391 = vmatprep.subr.mxu0 0.0
    %2392 = vmatpush1.msra.mxu0 0.0
    %2393 = vmatprep.subr.mxu0 0.0
    %2394 = vmatpush1.msra.mxu0 0.0
    %2395 = vmatprep.subr.mxu0 0.0
    %2396 = vmatpush1.msra.mxu0 0.0
    %2397 = vmatprep.subr.mxu0 0.0
    %2398 = vmatpush1.msra.mxu0 0.0
    %2399 = vmatprep.subr.mxu0 0.0
    %2400 = vmatpush1.msra.mxu0 0.0
    %2401 = vmatprep.subr.mxu0 0.0
    %2402 = vmatpush1.msra.mxu0 0.0
    %2403 = vmatprep.subr.mxu0 0.0
    %2404 = vmatpush1.msra.mxu0 0.0
    %2405 = vmatprep.subr.mxu0 0.0
    %2406 = vmatpush1.msra.mxu0 0.0
    %2407 = vmatprep.subr.mxu0 0.0
    %2408 = vmatpush1.msra.mxu0 0.0
    %2409 = vmatprep.subr.mxu0 0.0
    %2410 = vmatpush1.msra.mxu0 0.0
    %2411 = vmatprep.subr.mxu0 0.0
    %2412 = vmatpush1.msra.mxu0 0.0
    %2413 = vmatprep.subr.mxu0 0.0
    %2414 = vmatpush1.msra.mxu0 0.0
    %2415 = vmatprep.subr.mxu0 0.0
    %2416 = vmatpush1.msra.mxu0 0.0
    %2417 = vmatprep.subr.mxu0 0.0
    %2418 = vmatpush1.msra.mxu0 0.0
    %2419 = vmatprep.subr.mxu0 0.0
    %2420 = vmatpush1.msra.mxu0 0.0
    %2421 = vmatprep.subr.mxu0 0.0
    %2422 = vmatpush1.msra.mxu0 0.0
    %2423 = vmatprep.subr.mxu0 0.0
    %2424 = vmatpush1.msra.mxu0 0.0
    %2425 = vmatprep.subr.mxu0 0.0
    %2426 = vmatpush1.msra.mxu0 0.0
    %2427 = vmatprep.subr.mxu0 0.0
    %2428 = vmatpush1.msra.mxu0 0.0
    %2429 = vmatprep.subr.mxu0 0.0
    %2430 = vmatpush1.msra.mxu0 0.0
    %2431 = vmatprep.subr.mxu0 0.0
    %2432 = vmatpush1.msra.mxu0 0.0
    %2433 = vmatprep.mubr.f32.mxu0 0.0
    %2434 = vmatmul.mubr.f32.gmra.mrb[0].mxu0 %v2364
    %v2435 = vpop.f32.mrb[0].mxu0
    %v2436 = vadd.f32 %v2362, %v2435
    %v2437 = vpop.f32.mrb[0].mxu0
    %2438 = vmatprep.mubr.f32.mxu0 0.0
    %2439 = vmatmul.mubr.f32.gmra.mrb[0].mxu0 %v2367
    %v2440 = vpop.f32.mrb[0].mxu0
    %v2441 = vadd.f32 %v2362, %v2440
    %v2442 = vpop.f32.mrb[0].mxu0
    %2443 = vdwg.mxu0
    %vm2444 = vcmp.gt.f32.partialorder %v2436, 0.0
    %vm2445 = vcmp.gt.f32.partialorder %v2441, 0.0
    %v2446 = vmul.f32 %v2436, 1.442695
    %v2447 = vpow.pop %v2446
    %v2448 = vmul.f32 %v2441, 1.442695
    %v2449 = vpow.pop %v2448
    %v2450 = vsub.f32 %v2447, 1.0
    %v2451 = vsub.f32 %v2449, 1.0
    %v2452 = vsel %vm2444, %v2436, %v2450
    %v2453 = vsel %vm2445, %v2441, %v2451
    %s2454 = scalar_lea.vmem [#allocation2], 160
    %v2455 = vld [vmem:[%s2454] sm:$0xff]
    %v2456 = vld [vmem:[%s2454 + $0x8] sm:$0xff]
    %v2457 = vld [vmem:[%s2454 + $0x10] sm:$0xff]
    %v2458 = vld [vmem:[%s2454 + $0x18] sm:$0xff]
    %v2460 = vsel %vm304, %v2452, 0
    %v2463 = vsel %vm304, %v2453, 0
    %2465 = vmatprep.subr.mxu0 0.0
    %2466 = vmatpush1.msra.mxu0 %v2455
    %2467 = vmatprep.subr.mxu0 0.0
    %2468 = vmatpush1.msra.mxu0 %v2456
    %2469 = vmatprep.subr.mxu0 0.0
    %2470 = vmatpush1.msra.mxu0 %v2457
    %2471 = vmatprep.subr.mxu0 0.0
    %2472 = vmatpush1.msra.mxu0 %v2458
    %2473 = vmatprep.subr.mxu0 0.0
    %2474 = vmatpush1.msra.mxu0 0.0
    %2475 = vmatprep.subr.mxu0 0.0
    %2476 = vmatpush1.msra.mxu0 0.0
    %2477 = vmatprep.subr.mxu0 0.0
    %2478 = vmatpush1.msra.mxu0 0.0
    %2479 = vmatprep.subr.mxu0 0.0
    %2480 = vmatpush1.msra.mxu0 0.0
    %2481 = vmatprep.subr.mxu0 0.0
    %2482 = vmatpush1.msra.mxu0 0.0
    %2483 = vmatprep.subr.mxu0 0.0
    %2484 = vmatpush1.msra.mxu0 0.0
    %2485 = vmatprep.subr.mxu0 0.0
    %2486 = vmatpush1.msra.mxu0 0.0
    %2487 = vmatprep.subr.mxu0 0.0
    %2488 = vmatpush1.msra.mxu0 0.0
    %2489 = vmatprep.subr.mxu0 0.0
    %2490 = vmatpush1.msra.mxu0 0.0
    %2491 = vmatprep.subr.mxu0 0.0
    %2492 = vmatpush1.msra.mxu0 0.0
    %2493 = vmatprep.subr.mxu0 0.0
    %2494 = vmatpush1.msra.mxu0 0.0
    %2495 = vmatprep.subr.mxu0 0.0
    %2496 = vmatpush1.msra.mxu0 0.0
    %2497 = vmatprep.subr.mxu0 0.0
    %2498 = vmatpush1.msra.mxu0 0.0
    %2499 = vmatprep.subr.mxu0 0.0
    %2500 = vmatpush1.msra.mxu0 0.0
    %2501 = vmatprep.subr.mxu0 0.0
    %2502 = vmatpush1.msra.mxu0 0.0
    %2503 = vmatprep.subr.mxu0 0.0
    %2504 = vmatpush1.msra.mxu0 0.0
    %2505 = vmatprep.subr.mxu0 0.0
    %2506 = vmatpush1.msra.mxu0 0.0
    %2507 = vmatprep.subr.mxu0 0.0
    %2508 = vmatpush1.msra.mxu0 0.0
    %2509 = vmatprep.subr.mxu0 0.0
    %2510 = vmatpush1.msra.mxu0 0.0
    %2511 = vmatprep.subr.mxu0 0.0
    %2512 = vmatpush1.msra.mxu0 0.0
    %2513 = vmatprep.subr.mxu0 0.0
    %2514 = vmatpush1.msra.mxu0 0.0
    %2515 = vmatprep.subr.mxu0 0.0
    %2516 = vmatpush1.msra.mxu0 0.0
    %2517 = vmatprep.subr.mxu0 0.0
    %2518 = vmatpush1.msra.mxu0 0.0
    %2519 = vmatprep.subr.mxu0 0.0
    %2520 = vmatpush1.msra.mxu0 0.0
    %2521 = vmatprep.subr.mxu0 0.0
    %2522 = vmatpush1.msra.mxu0 0.0
    %2523 = vmatprep.subr.mxu0 0.0
    %2524 = vmatpush1.msra.mxu0 0.0
    %2525 = vmatprep.subr.mxu0 0.0
    %2526 = vmatpush1.msra.mxu0 0.0
    %2527 = vmatprep.subr.mxu0 0.0
    %2528 = vmatpush1.msra.mxu0 0.0
    %2529 = vmatprep.mubr.f32.mxu0 0.0
    %2530 = vmatmul.mubr.f32.gmra.mrb[0].mxu0 %v2460
    %v2531 = vpop.f32.mrb[0].mxu0
    %v2532 = vadd.f32 0.0, %v2531
    %v2533 = vpop.f32.mrb[0].mxu0
    %2534 = vmatprep.mubr.f32.mxu0 0.0
    %2535 = vmatmul.mubr.f32.gmra.mrb[0].mxu0 %v2463
    %v2536 = vpop.f32.mrb[0].mxu0
    %v2537 = vadd.f32 0.0, %v2536
    %v2538 = vpop.f32.mrb[0].mxu0
    %2539 = vdwg.mxu0
    %v2540 = vadd.f32 %v2152, %v2532
    %v2541 = vadd.f32 %v2153, %v2537
    %s2542 = scalar_lea.vmem %s3, 24
    %v2543 = vld [vmem:[%s2542] sm:$0x7]
    %v2545 = vsel %vm219, %v2543, 0
    %2547 = vmatprep.subr.mxu0 0.0
    %2548 = vmatpush1.msra.mxu0 %v2545
    %2549 = vmatprep.subr.mxu0 0.0
    %2550 = vmatpush1.msra.mxu0 0.0
    %2551 = vmatprep.subr.mxu0 0.0
    %2552 = vmatpush1.msra.mxu0 0.0
    %2553 = vmatprep.subr.mxu0 0.0
    %2554 = vmatpush1.msra.mxu0 0.0
    %2555 = vmatprep.subr.mxu0 0.0
    %2556 = vmatpush1.msra.mxu0 0.0
    %2557 = vmatprep.subr.mxu0 0.0
    %2558 = vmatpush1.msra.mxu0 0.0
    %2559 = vmatprep.subr.mxu0 0.0
    %2560 = vmatpush1.msra.mxu0 0.0
    %2561 = vmatprep.subr.mxu0 0.0
    %2562 = vmatpush1.msra.mxu0 0.0
    %2563 = vmatprep.subr.mxu0 0.0
    %2564 = vmatpush1.msra.mxu0 0.0
    %2565 = vmatprep.subr.mxu0 0.0
    %2566 = vmatpush1.msra.mxu0 0.0
    %2567 = vmatprep.subr.mxu0 0.0
    %2568 = vmatpush1.msra.mxu0 0.0
    %2569 = vmatprep.subr.mxu0 0.0
    %2570 = vmatpush1.msra.mxu0 0.0
    %2571 = vmatprep.subr.mxu0 0.0
    %2572 = vmatpush1.msra.mxu0 0.0
    %2573 = vmatprep.subr.mxu0 0.0
    %2574 = vmatpush1.msra.mxu0 0.0
    %2575 = vmatprep.subr.mxu0 0.0
    %2576 = vmatpush1.msra.mxu0 0.0
    %2577 = vmatprep.subr.mxu0 0.0
    %2578 = vmatpush1.msra.mxu0 0.0
    %2579 = vmatprep.subr.mxu0 0.0
    %2580 = vmatpush1.msra.mxu0 0.0
    %2581 = vmatprep.subr.mxu0 0.0
    %2582 = vmatpush1.msra.mxu0 0.0
    %2583 = vmatprep.subr.mxu0 0.0
    %2584 = vmatpush1.msra.mxu0 0.0
    %2585 = vmatprep.subr.mxu0 0.0
    %2586 = vmatpush1.msra.mxu0 0.0
    %2587 = vmatprep.subr.mxu0 0.0
    %2588 = vmatpush1.msra.mxu0 0.0
    %2589 = vmatprep.subr.mxu0 0.0
    %2590 = vmatpush1.msra.mxu0 0.0
    %2591 = vmatprep.subr.mxu0 0.0
    %2592 = vmatpush1.msra.mxu0 0.0
    %2593 = vmatprep.subr.mxu0 0.0
    %2594 = vmatpush1.msra.mxu0 0.0
    %2595 = vmatprep.subr.mxu0 0.0
    %2596 = vmatpush1.msra.mxu0 0.0
    %2597 = vmatprep.subr.mxu0 0.0
    %2598 = vmatpush1.msra.mxu0 0.0
    %2599 = vmatprep.subr.mxu0 0.0
    %2600 = vmatpush1.msra.mxu0 0.0
    %2601 = vmatprep.subr.mxu0 0.0
    %2602 = vmatpush1.msra.mxu0 0.0
    %2603 = vmatprep.subr.mxu0 0.0
    %2604 = vmatpush1.msra.mxu0 0.0
    %2605 = vmatprep.subr.mxu0 0.0
    %2606 = vmatpush1.msra.mxu0 0.0
    %2607 = vmatprep.subr.mxu0 0.0
    %2608 = vmatpush1.msra.mxu0 0.0
    %2609 = vmatprep.subr.mxu0 0.0
    %2610 = vmatpush1.msra.mxu0 0.0
    %2611 = vmatprep.mubr.f32.mxu0 0.0
    %2612 = vmatmul.mubr.f32.gmra.mrb[0].mxu0 %v214
    %v2613 = vpop.f32.mrb[0].mxu0
    %v2614 = vadd.f32 0.0, %v2613
    %v2615 = vpop.f32.mrb[0].mxu0
    %2616 = vmatprep.mubr.f32.mxu0 0.0
    %2617 = vmatmul.mubr.f32.gmra.mrb[0].mxu0 %v217
    %v2618 = vpop.f32.mrb[0].mxu0
    %v2619 = vadd.f32 0.0, %v2618
    %v2620 = vpop.f32.mrb[0].mxu0
    %2621 = vdwg.mxu0
    %v2622 = vlaneseq
    %v2623 = vshrl.u32 %v2622, 7
    %v2624 = vsub.s32 6, %v2623
    %v2625 = vrot.slane %v209, %v2624
    %v2626 = vmul.f32 %v2614, %v2625
    %v2627 = vmul.f32 %v2619, %v2625
    %v2628 = vsel %vm304, %v2626, 0.0
    %2629 = vadd.xlane.f32.xlu0 %v2628
    %v2630 = vpop.xlane.xlu0 %2629
    %v2631 = vsel %vm304, %v2627, 0.0
    %2632 = vadd.xlane.f32.xlu0 %v2631
    %v2633 = vpop.xlane.xlu0 %2632
    %v2634 = vrot.slane %v208, 6
    %v2635 = vsel %vm304, %v2634, 0
    %v2638 = vsel %vm304, %v2614, 0
    %v2641 = vsel %vm304, %v2619, 0
    %2643 = vmatprep.subr.mxu0 0.0
    %2644 = vmatpush1.xpose.msra.mxu0 %v2638
    %2645 = vmatprep.subr.mxu0 0.0
    %2646 = vmatpush1.xpose.msra.mxu0 %v2641
    %2647 = vmatprep.subr.mxu0 0.0
    %2648 = vmatpush1.xpose.msra.mxu0 0.0
    %2649 = vmatprep.subr.mxu0 0.0
    %2650 = vmatpush1.xpose.msra.mxu0 0.0
    %2651 = vmatprep.subr.mxu0 0.0
    %2652 = vmatpush1.xpose.msra.mxu0 0.0
    %2653 = vmatprep.subr.mxu0 0.0
    %2654 = vmatpush1.xpose.msra.mxu0 0.0
    %2655 = vmatprep.subr.mxu0 0.0
    %2656 = vmatpush1.xpose.msra.mxu0 0.0
    %2657 = vmatprep.subr.mxu0 0.0
    %2658 = vmatpush1.xpose.msra.mxu0 0.0
    %2659 = vmatprep.subr.mxu0 0.0
    %2660 = vmatpush1.xpose.msra.mxu0 0.0
    %2661 = vmatprep.subr.mxu0 0.0
    %2662 = vmatpush1.xpose.msra.mxu0 0.0
    %2663 = vmatprep.subr.mxu0 0.0
    %2664 = vmatpush1.xpose.msra.mxu0 0.0
    %2665 = vmatprep.subr.mxu0 0.0
    %2666 = vmatpush1.xpose.msra.mxu0 0.0
    %2667 = vmatprep.subr.mxu0 0.0
    %2668 = vmatpush1.xpose.msra.mxu0 0.0
    %2669 = vmatprep.subr.mxu0 0.0
    %2670 = vmatpush1.xpose.msra.mxu0 0.0
    %2671 = vmatprep.subr.mxu0 0.0
    %2672 = vmatpush1.xpose.msra.mxu0 0.0
    %2673 = vmatprep.subr.mxu0 0.0
    %2674 = vmatpush1.xpose.msra.mxu0 0.0
    %2675 = vmatprep.subr.mxu0 0.0
    %2676 = vmatpush1.xpose.msra.mxu0 0.0
    %2677 = vmatprep.subr.mxu0 0.0
    %2678 = vmatpush1.xpose.msra.mxu0 0.0
    %2679 = vmatprep.subr.mxu0 0.0
    %2680 = vmatpush1.xpose.msra.mxu0 0.0
    %2681 = vmatprep.subr.mxu0 0.0
    %2682 = vmatpush1.xpose.msra.mxu0 0.0
    %2683 = vmatprep.subr.mxu0 0.0
    %2684 = vmatpush1.xpose.msra.mxu0 0.0
    %2685 = vmatprep.subr.mxu0 0.0
    %2686 = vmatpush1.xpose.msra.mxu0 0.0
    %2687 = vmatprep.subr.mxu0 0.0
    %2688 = vmatpush1.xpose.msra.mxu0 0.0
    %2689 = vmatprep.subr.mxu0 0.0
    %2690 = vmatpush1.xpose.msra.mxu0 0.0
    %2691 = vmatprep.subr.mxu0 0.0
    %2692 = vmatpush1.xpose.msra.mxu0 0.0
    %2693 = vmatprep.subr.mxu0 0.0
    %2694 = vmatpush1.xpose.msra.mxu0 0.0
    %2695 = vmatprep.subr.mxu0 0.0
    %2696 = vmatpush1.xpose.msra.mxu0 0.0
    %2697 = vmatprep.subr.mxu0 0.0
    %2698 = vmatpush1.xpose.msra.mxu0 0.0
    %2699 = vmatprep.subr.mxu0 0.0
    %2700 = vmatpush1.xpose.msra.mxu0 0.0
    %2701 = vmatprep.subr.mxu0 0.0
    %2702 = vmatpush1.xpose.msra.mxu0 0.0
    %2703 = vmatprep.subr.mxu0 0.0
    %2704 = vmatpush1.xpose.msra.mxu0 0.0
    %2705 = vmatprep.subr.mxu0 0.0
    %2706 = vmatpush1.xpose.msra.mxu0 0.0
    %2707 = vmatprep.mubr.f32.mxu0 0.0
    %2708 = vmatmul.mubr.f32.gmra.mrb[0].mxu0 %v2635
    %v2709 = vpop.f32.mrb[0].mxu0
    %v2710 = vadd.f32 0.0, %v2709
    %v2711 = vpop.f32.mrb[0].mxu0
    %2712 = vdwg.mxu0
    %v2713 = vlaneseq
    %v2714 = vshrl.u32 %v2713, 7
    %v2715 = vsub.s32 0, %v2714
    %v2716 = vrot.slane %v2710, %v2715
    %v2717 = vadd.f32 %v2630, %v2716
    %v2718 = vadd.f32 %v2633, %v2716
    %v2719 = vmul.f32 %v2717, 0.2
    %v2720 = vmul.f32 %v2718, 0.2
    %v2721 = vmax.f32 %v2717, %v2719
    %v2722 = vmax.f32 %v2718, %v2720
    %v2723 = vsel %vm204, %v2721, -1e+30
    %v2724 = vsel %vm205, %v2722, -1e+30
    %v2725 = vsel %vm118, %v2723, -inf
    %2726 = vmax.xlane.f32.xlu0 %v2725
    %v2727 = vpop.xlane.xlu0 %2726
    %v2728 = vsel %vm118, %v2724, -inf
    %2729 = vmax.xlane.f32.xlu0 %v2728
    %v2730 = vpop.xlane.xlu0 %2729
    %v2731 = vsub.f32 %v2723, %v2727
    %v2732 = vsub.f32 %v2724, %v2730
    %v2733 = vmul.f32 %v2731, 1.442695
    %v2734 = vpow.pop %v2733
    %v2735 = vmul.f32 %v2732, 1.442695
    %v2736 = vpow.pop %v2735
    %v2737 = vsel %vm118, %v2734, 0.0
    %2738 = vadd.xlane.f32.xlu0 %v2737
    %v2739 = vpop.xlane.xlu0 %2738
    %v2740 = vsel %vm118, %v2736, 0.0
    %2741 = vadd.xlane.f32.xlu0 %v2740
    %v2742 = vpop.xlane.xlu0 %2741
    %v2743 = vrcp.pop %v2739
    %v2744 = vmul.f32 %v2734, %v2743
    %v2745 = vrcp.pop %v2742
    %v2746 = vmul.f32 %v2736, %v2745
    %v2747 = vlaneseq
    %v2748 = vshrl.u32 %v2747, 7
    %v2749 = vsub.s32 6, %v2748
    %v2750 = vrot.slane %v210, %v2749
    %v2752 = vsel %vm118, %v2744, 0
    %v2755 = vsel %vm118, %v2746, 0
    %2757 = vmatprep.subr.mxu0 0.0
    %2758 = vmatpush1.msra.mxu0 %v2614
    %2759 = vmatprep.subr.mxu0 0.0
    %2760 = vmatpush1.msra.mxu0 %v2619
    %2761 = vmatprep.subr.mxu0 0.0
    %2762 = vmatpush1.msra.mxu0 0.0
    %2763 = vmatprep.subr.mxu0 0.0
    %2764 = vmatpush1.msra.mxu0 0.0
    %2765 = vmatprep.subr.mxu0 0.0
    %2766 = vmatpush1.msra.mxu0 0.0
    %2767 = vmatprep.subr.mxu0 0.0
    %2768 = vmatpush1.msra.mxu0 0.0
    %2769 = vmatprep.subr.mxu0 0.0
    %2770 = vmatpush1.msra.mxu0 0.0
    %2771 = vmatprep.subr.mxu0 0.0
    %2772 = vmatpush1.msra.mxu0 0.0
    %2773 = vmatprep.subr.mxu0 0.0
    %2774 = vmatpush1.msra.mxu0 0.0
    %2775 = vmatprep.subr.mxu0 0.0
    %2776 = vmatpush1.msra.mxu0 0.0
    %2777 = vmatprep.subr.mxu0 0.0
    %2778 = vmatpush1.msra.mxu0 0.0
    %2779 = vmatprep.subr.mxu0 0.0
    %2780 = vmatpush1.msra.mxu0 0.0
    %2781 = vmatprep.subr.mxu0 0.0
    %2782 = vmatpush1.msra.mxu0 0.0
    %2783 = vmatprep.subr.mxu0 0.0
    %2784 = vmatpush1.msra.mxu0 0.0
    %2785 = vmatprep.subr.mxu0 0.0
    %2786 = vmatpush1.msra.mxu0 0.0
    %2787 = vmatprep.subr.mxu0 0.0
    %2788 = vmatpush1.msra.mxu0 0.0
    %2789 = vmatprep.subr.mxu0 0.0
    %2790 = vmatpush1.msra.mxu0 0.0
    %2791 = vmatprep.subr.mxu0 0.0
    %2792 = vmatpush1.msra.mxu0 0.0
    %2793 = vmatprep.subr.mxu0 0.0
    %2794 = vmatpush1.msra.mxu0 0.0
    %2795 = vmatprep.subr.mxu0 0.0
    %2796 = vmatpush1.msra.mxu0 0.0
    %2797 = vmatprep.subr.mxu0 0.0
    %2798 = vmatpush1.msra.mxu0 0.0
    %2799 = vmatprep.subr.mxu0 0.0
    %2800 = vmatpush1.msra.mxu0 0.0
    %2801 = vmatprep.subr.mxu0 0.0
    %2802 = vmatpush1.msra.mxu0 0.0
    %2803 = vmatprep.subr.mxu0 0.0
    %2804 = vmatpush1.msra.mxu0 0.0
    %2805 = vmatprep.subr.mxu0 0.0
    %2806 = vmatpush1.msra.mxu0 0.0
    %2807 = vmatprep.subr.mxu0 0.0
    %2808 = vmatpush1.msra.mxu0 0.0
    %2809 = vmatprep.subr.mxu0 0.0
    %2810 = vmatpush1.msra.mxu0 0.0
    %2811 = vmatprep.subr.mxu0 0.0
    %2812 = vmatpush1.msra.mxu0 0.0
    %2813 = vmatprep.subr.mxu0 0.0
    %2814 = vmatpush1.msra.mxu0 0.0
    %2815 = vmatprep.subr.mxu0 0.0
    %2816 = vmatpush1.msra.mxu0 0.0
    %2817 = vmatprep.subr.mxu0 0.0
    %2818 = vmatpush1.msra.mxu0 0.0
    %2819 = vmatprep.subr.mxu0 0.0
    %2820 = vmatpush1.msra.mxu0 0.0
    %2821 = vmatprep.mubr.f32.mxu0 0.0
    %2822 = vmatmul.mubr.f32.gmra.mrb[0].mxu0 %v2752
    %v2823 = vpop.f32.mrb[0].mxu0
    %v2824 = vadd.f32 %v2750, %v2823
    %v2825 = vpop.f32.mrb[0].mxu0
    %2826 = vmatprep.mubr.f32.mxu0 0.0
    %2827 = vmatmul.mubr.f32.gmra.mrb[0].mxu0 %v2755
    %v2828 = vpop.f32.mrb[0].mxu0
    %v2829 = vadd.f32 %v2750, %v2828
    %v2830 = vpop.f32.mrb[0].mxu0
    %2831 = vdwg.mxu0
    %vm2832 = vcmp.gt.f32.partialorder %v2824, 0.0
    %vm2833 = vcmp.gt.f32.partialorder %v2829, 0.0
    %v2834 = vmul.f32 %v2824, 1.442695
    %v2835 = vpow.pop %v2834
    %v2836 = vmul.f32 %v2829, 1.442695
    %v2837 = vpow.pop %v2836
    %v2838 = vsub.f32 %v2835, 1.0
    %v2839 = vsub.f32 %v2837, 1.0
    %v2840 = vsel %vm2832, %v2824, %v2838
    %v2841 = vsel %vm2833, %v2829, %v2839
    %s2842 = scalar_lea.vmem [#allocation2], 192
    %v2843 = vld [vmem:[%s2842] sm:$0xff]
    %v2844 = vld [vmem:[%s2842 + $0x8] sm:$0xff]
    %v2845 = vld [vmem:[%s2842 + $0x10] sm:$0xff]
    %v2846 = vld [vmem:[%s2842 + $0x18] sm:$0xff]
    %v2848 = vsel %vm304, %v2840, 0
    %v2851 = vsel %vm304, %v2841, 0
    %2853 = vmatprep.subr.mxu0 0.0
    %2854 = vmatpush1.msra.mxu0 %v2843
    %2855 = vmatprep.subr.mxu0 0.0
    %2856 = vmatpush1.msra.mxu0 %v2844
    %2857 = vmatprep.subr.mxu0 0.0
    %2858 = vmatpush1.msra.mxu0 %v2845
    %2859 = vmatprep.subr.mxu0 0.0
    %2860 = vmatpush1.msra.mxu0 %v2846
    %2861 = vmatprep.subr.mxu0 0.0
    %2862 = vmatpush1.msra.mxu0 0.0
    %2863 = vmatprep.subr.mxu0 0.0
    %2864 = vmatpush1.msra.mxu0 0.0
    %2865 = vmatprep.subr.mxu0 0.0
    %2866 = vmatpush1.msra.mxu0 0.0
    %2867 = vmatprep.subr.mxu0 0.0
    %2868 = vmatpush1.msra.mxu0 0.0
    %2869 = vmatprep.subr.mxu0 0.0
    %2870 = vmatpush1.msra.mxu0 0.0
    %2871 = vmatprep.subr.mxu0 0.0
    %2872 = vmatpush1.msra.mxu0 0.0
    %2873 = vmatprep.subr.mxu0 0.0
    %2874 = vmatpush1.msra.mxu0 0.0
    %2875 = vmatprep.subr.mxu0 0.0
    %2876 = vmatpush1.msra.mxu0 0.0
    %2877 = vmatprep.subr.mxu0 0.0
    %2878 = vmatpush1.msra.mxu0 0.0
    %2879 = vmatprep.subr.mxu0 0.0
    %2880 = vmatpush1.msra.mxu0 0.0
    %2881 = vmatprep.subr.mxu0 0.0
    %2882 = vmatpush1.msra.mxu0 0.0
    %2883 = vmatprep.subr.mxu0 0.0
    %2884 = vmatpush1.msra.mxu0 0.0
    %2885 = vmatprep.subr.mxu0 0.0
    %2886 = vmatpush1.msra.mxu0 0.0
    %2887 = vmatprep.subr.mxu0 0.0
    %2888 = vmatpush1.msra.mxu0 0.0
    %2889 = vmatprep.subr.mxu0 0.0
    %2890 = vmatpush1.msra.mxu0 0.0
    %2891 = vmatprep.subr.mxu0 0.0
    %2892 = vmatpush1.msra.mxu0 0.0
    %2893 = vmatprep.subr.mxu0 0.0
    %2894 = vmatpush1.msra.mxu0 0.0
    %2895 = vmatprep.subr.mxu0 0.0
    %2896 = vmatpush1.msra.mxu0 0.0
    %2897 = vmatprep.subr.mxu0 0.0
    %2898 = vmatpush1.msra.mxu0 0.0
    %2899 = vmatprep.subr.mxu0 0.0
    %2900 = vmatpush1.msra.mxu0 0.0
    %2901 = vmatprep.subr.mxu0 0.0
    %2902 = vmatpush1.msra.mxu0 0.0
    %2903 = vmatprep.subr.mxu0 0.0
    %2904 = vmatpush1.msra.mxu0 0.0
    %2905 = vmatprep.subr.mxu0 0.0
    %2906 = vmatpush1.msra.mxu0 0.0
    %2907 = vmatprep.subr.mxu0 0.0
    %2908 = vmatpush1.msra.mxu0 0.0
    %2909 = vmatprep.subr.mxu0 0.0
    %2910 = vmatpush1.msra.mxu0 0.0
    %2911 = vmatprep.subr.mxu0 0.0
    %2912 = vmatpush1.msra.mxu0 0.0
    %2913 = vmatprep.subr.mxu0 0.0
    %2914 = vmatpush1.msra.mxu0 0.0
    %2915 = vmatprep.subr.mxu0 0.0
    %2916 = vmatpush1.msra.mxu0 0.0
    %2917 = vmatprep.mubr.f32.mxu0 0.0
    %2918 = vmatmul.mubr.f32.gmra.mrb[0].mxu0 %v2848
    %v2919 = vpop.f32.mrb[0].mxu0
    %v2920 = vadd.f32 0.0, %v2919
    %v2921 = vpop.f32.mrb[0].mxu0
    %2922 = vmatprep.mubr.f32.mxu0 0.0
    %2923 = vmatmul.mubr.f32.gmra.mrb[0].mxu0 %v2851
    %v2924 = vpop.f32.mrb[0].mxu0
    %v2925 = vadd.f32 0.0, %v2924
    %v2926 = vpop.f32.mrb[0].mxu0
    %2927 = vdwg.mxu0
    %v2928 = vadd.f32 %v2540, %v2920
    %v2929 = vadd.f32 %v2541, %v2925
    %s2930 = scalar_lea.vmem %s3, 28
    %v2931 = vld [vmem:[%s2930] sm:$0x7]
    %v2933 = vsel %vm219, %v2931, 0
    %2935 = vmatprep.subr.mxu0 0.0
    %2936 = vmatpush1.msra.mxu0 %v2933
    %2937 = vmatprep.subr.mxu0 0.0
    %2938 = vmatpush1.msra.mxu0 0.0
    %2939 = vmatprep.subr.mxu0 0.0
    %2940 = vmatpush1.msra.mxu0 0.0
    %2941 = vmatprep.subr.mxu0 0.0
    %2942 = vmatpush1.msra.mxu0 0.0
    %2943 = vmatprep.subr.mxu0 0.0
    %2944 = vmatpush1.msra.mxu0 0.0
    %2945 = vmatprep.subr.mxu0 0.0
    %2946 = vmatpush1.msra.mxu0 0.0
    %2947 = vmatprep.subr.mxu0 0.0
    %2948 = vmatpush1.msra.mxu0 0.0
    %2949 = vmatprep.subr.mxu0 0.0
    %2950 = vmatpush1.msra.mxu0 0.0
    %2951 = vmatprep.subr.mxu0 0.0
    %2952 = vmatpush1.msra.mxu0 0.0
    %2953 = vmatprep.subr.mxu0 0.0
    %2954 = vmatpush1.msra.mxu0 0.0
    %2955 = vmatprep.subr.mxu0 0.0
    %2956 = vmatpush1.msra.mxu0 0.0
    %2957 = vmatprep.subr.mxu0 0.0
    %2958 = vmatpush1.msra.mxu0 0.0
    %2959 = vmatprep.subr.mxu0 0.0
    %2960 = vmatpush1.msra.mxu0 0.0
    %2961 = vmatprep.subr.mxu0 0.0
    %2962 = vmatpush1.msra.mxu0 0.0
    %2963 = vmatprep.subr.mxu0 0.0
    %2964 = vmatpush1.msra.mxu0 0.0
    %2965 = vmatprep.subr.mxu0 0.0
    %2966 = vmatpush1.msra.mxu0 0.0
    %2967 = vmatprep.subr.mxu0 0.0
    %2968 = vmatpush1.msra.mxu0 0.0
    %2969 = vmatprep.subr.mxu0 0.0
    %2970 = vmatpush1.msra.mxu0 0.0
    %2971 = vmatprep.subr.mxu0 0.0
    %2972 = vmatpush1.msra.mxu0 0.0
    %2973 = vmatprep.subr.mxu0 0.0
    %2974 = vmatpush1.msra.mxu0 0.0
    %2975 = vmatprep.subr.mxu0 0.0
    %2976 = vmatpush1.msra.mxu0 0.0
    %2977 = vmatprep.subr.mxu0 0.0
    %2978 = vmatpush1.msra.mxu0 0.0
    %2979 = vmatprep.subr.mxu0 0.0
    %2980 = vmatpush1.msra.mxu0 0.0
    %2981 = vmatprep.subr.mxu0 0.0
    %2982 = vmatpush1.msra.mxu0 0.0
    %2983 = vmatprep.subr.mxu0 0.0
    %2984 = vmatpush1.msra.mxu0 0.0
    %2985 = vmatprep.subr.mxu0 0.0
    %2986 = vmatpush1.msra.mxu0 0.0
    %2987 = vmatprep.subr.mxu0 0.0
    %2988 = vmatpush1.msra.mxu0 0.0
    %2989 = vmatprep.subr.mxu0 0.0
    %2990 = vmatpush1.msra.mxu0 0.0
    %2991 = vmatprep.subr.mxu0 0.0
    %2992 = vmatpush1.msra.mxu0 0.0
    %2993 = vmatprep.subr.mxu0 0.0
    %2994 = vmatpush1.msra.mxu0 0.0
    %2995 = vmatprep.subr.mxu0 0.0
    %2996 = vmatpush1.msra.mxu0 0.0
    %2997 = vmatprep.subr.mxu0 0.0
    %2998 = vmatpush1.msra.mxu0 0.0
    %2999 = vmatprep.mubr.f32.mxu0 0.0
    %3000 = vmatmul.mubr.f32.gmra.mrb[0].mxu0 %v214
    %v3001 = vpop.f32.mrb[0].mxu0
    %v3002 = vadd.f32 0.0, %v3001
    %v3003 = vpop.f32.mrb[0].mxu0
    %3004 = vmatprep.mubr.f32.mxu0 0.0
    %3005 = vmatmul.mubr.f32.gmra.mrb[0].mxu0 %v217
    %v3006 = vpop.f32.mrb[0].mxu0
    %v3007 = vadd.f32 0.0, %v3006
    %v3008 = vpop.f32.mrb[0].mxu0
    %3009 = vdwg.mxu0
    %v3010 = vlaneseq
    %v3011 = vshrl.u32 %v3010, 7
    %v3012 = vsub.s32 7, %v3011
    %v3013 = vrot.slane %v209, %v3012
    %v3014 = vmul.f32 %v3002, %v3013
    %v3015 = vmul.f32 %v3007, %v3013
    %v3016 = vsel %vm304, %v3014, 0.0
    %3017 = vadd.xlane.f32.xlu0 %v3016
    %v3018 = vpop.xlane.xlu0 %3017
    %v3019 = vsel %vm304, %v3015, 0.0
    %3020 = vadd.xlane.f32.xlu0 %v3019
    %v3021 = vpop.xlane.xlu0 %3020
    %v3022 = vrot.slane %v208, 7
    %v3023 = vsel %vm304, %v3022, 0
    %v3026 = vsel %vm304, %v3002, 0
    %v3029 = vsel %vm304, %v3007, 0
    %3031 = vmatprep.subr.mxu0 0.0
    %3032 = vmatpush1.xpose.msra.mxu0 %v3026
    %3033 = vmatprep.subr.mxu0 0.0
    %3034 = vmatpush1.xpose.msra.mxu0 %v3029
    %3035 = vmatprep.subr.mxu0 0.0
    %3036 = vmatpush1.xpose.msra.mxu0 0.0
    %3037 = vmatprep.subr.mxu0 0.0
    %3038 = vmatpush1.xpose.msra.mxu0 0.0
    %3039 = vmatprep.subr.mxu0 0.0
    %3040 = vmatpush1.xpose.msra.mxu0 0.0
    %3041 = vmatprep.subr.mxu0 0.0
    %3042 = vmatpush1.xpose.msra.mxu0 0.0
    %3043 = vmatprep.subr.mxu0 0.0
    %3044 = vmatpush1.xpose.msra.mxu0 0.0
    %3045 = vmatprep.subr.mxu0 0.0
    %3046 = vmatpush1.xpose.msra.mxu0 0.0
    %3047 = vmatprep.subr.mxu0 0.0
    %3048 = vmatpush1.xpose.msra.mxu0 0.0
    %3049 = vmatprep.subr.mxu0 0.0
    %3050 = vmatpush1.xpose.msra.mxu0 0.0
    %3051 = vmatprep.subr.mxu0 0.0
    %3052 = vmatpush1.xpose.msra.mxu0 0.0
    %3053 = vmatprep.subr.mxu0 0.0
    %3054 = vmatpush1.xpose.msra.mxu0 0.0
    %3055 = vmatprep.subr.mxu0 0.0
    %3056 = vmatpush1.xpose.msra.mxu0 0.0
    %3057 = vmatprep.subr.mxu0 0.0
    %3058 = vmatpush1.xpose.msra.mxu0 0.0
    %3059 = vmatprep.subr.mxu0 0.0
    %3060 = vmatpush1.xpose.msra.mxu0 0.0
    %3061 = vmatprep.subr.mxu0 0.0
    %3062 = vmatpush1.xpose.msra.mxu0 0.0
    %3063 = vmatprep.subr.mxu0 0.0
    %3064 = vmatpush1.xpose.msra.mxu0 0.0
    %3065 = vmatprep.subr.mxu0 0.0
    %3066 = vmatpush1.xpose.msra.mxu0 0.0
    %3067 = vmatprep.subr.mxu0 0.0
    %3068 = vmatpush1.xpose.msra.mxu0 0.0
    %3069 = vmatprep.subr.mxu0 0.0
    %3070 = vmatpush1.xpose.msra.mxu0 0.0
    %3071 = vmatprep.subr.mxu0 0.0
    %3072 = vmatpush1.xpose.msra.mxu0 0.0
    %3073 = vmatprep.subr.mxu0 0.0
    %3074 = vmatpush1.xpose.msra.mxu0 0.0
    %3075 = vmatprep.subr.mxu0 0.0
    %3076 = vmatpush1.xpose.msra.mxu0 0.0
    %3077 = vmatprep.subr.mxu0 0.0
    %3078 = vmatpush1.xpose.msra.mxu0 0.0
    %3079 = vmatprep.subr.mxu0 0.0
    %3080 = vmatpush1.xpose.msra.mxu0 0.0
    %3081 = vmatprep.subr.mxu0 0.0
    %3082 = vmatpush1.xpose.msra.mxu0 0.0
    %3083 = vmatprep.subr.mxu0 0.0
    %3084 = vmatpush1.xpose.msra.mxu0 0.0
    %3085 = vmatprep.subr.mxu0 0.0
    %3086 = vmatpush1.xpose.msra.mxu0 0.0
    %3087 = vmatprep.subr.mxu0 0.0
    %3088 = vmatpush1.xpose.msra.mxu0 0.0
    %3089 = vmatprep.subr.mxu0 0.0
    %3090 = vmatpush1.xpose.msra.mxu0 0.0
    %3091 = vmatprep.subr.mxu0 0.0
    %3092 = vmatpush1.xpose.msra.mxu0 0.0
    %3093 = vmatprep.subr.mxu0 0.0
    %3094 = vmatpush1.xpose.msra.mxu0 0.0
    %3095 = vmatprep.mubr.f32.mxu0 0.0
    %3096 = vmatmul.mubr.f32.gmra.mrb[0].mxu0 %v3023
    %v3097 = vpop.f32.mrb[0].mxu0
    %v3098 = vadd.f32 0.0, %v3097
    %v3099 = vpop.f32.mrb[0].mxu0
    %3100 = vdwg.mxu0
    %v3101 = vlaneseq
    %v3102 = vshrl.u32 %v3101, 7
    %v3103 = vsub.s32 0, %v3102
    %v3104 = vrot.slane %v3098, %v3103
    %v3105 = vadd.f32 %v3018, %v3104
    %v3106 = vadd.f32 %v3021, %v3104
    %v3107 = vmul.f32 %v3105, 0.2
    %v3108 = vmul.f32 %v3106, 0.2
    %v3109 = vmax.f32 %v3105, %v3107
    %v3110 = vmax.f32 %v3106, %v3108
    %v3111 = vsel %vm204, %v3109, -1e+30
    %v3112 = vsel %vm205, %v3110, -1e+30
    %v3113 = vsel %vm118, %v3111, -inf
    %3114 = vmax.xlane.f32.xlu0 %v3113
    %v3115 = vpop.xlane.xlu0 %3114
    %v3116 = vsel %vm118, %v3112, -inf
    %3117 = vmax.xlane.f32.xlu0 %v3116
    %v3118 = vpop.xlane.xlu0 %3117
    %v3119 = vsub.f32 %v3111, %v3115
    %v3120 = vsub.f32 %v3112, %v3118
    %v3121 = vmul.f32 %v3119, 1.442695
    %v3122 = vpow.pop %v3121
    %v3123 = vmul.f32 %v3120, 1.442695
    %v3124 = vpow.pop %v3123
    %v3125 = vsel %vm118, %v3122, 0.0
    %3126 = vadd.xlane.f32.xlu0 %v3125
    %v3127 = vpop.xlane.xlu0 %3126
    %v3128 = vsel %vm118, %v3124, 0.0
    %3129 = vadd.xlane.f32.xlu0 %v3128
    %v3130 = vpop.xlane.xlu0 %3129
    %v3131 = vrcp.pop %v3127
    %v3132 = vmul.f32 %v3122, %v3131
    %v3133 = vrcp.pop %v3130
    %v3134 = vmul.f32 %v3124, %v3133
    %v3135 = vlaneseq
    %v3136 = vshrl.u32 %v3135, 7
    %v3137 = vsub.s32 7, %v3136
    %v3138 = vrot.slane %v210, %v3137
    %v3140 = vsel %vm118, %v3132, 0
    %v3143 = vsel %vm118, %v3134, 0
    %3145 = vmatprep.subr.mxu0 0.0
    %3146 = vmatpush1.msra.mxu0 %v3002
    %3147 = vmatprep.subr.mxu0 0.0
    %3148 = vmatpush1.msra.mxu0 %v3007
    %3149 = vmatprep.subr.mxu0 0.0
    %3150 = vmatpush1.msra.mxu0 0.0
    %3151 = vmatprep.subr.mxu0 0.0
    %3152 = vmatpush1.msra.mxu0 0.0
    %3153 = vmatprep.subr.mxu0 0.0
    %3154 = vmatpush1.msra.mxu0 0.0
    %3155 = vmatprep.subr.mxu0 0.0
    %3156 = vmatpush1.msra.mxu0 0.0
    %3157 = vmatprep.subr.mxu0 0.0
    %3158 = vmatpush1.msra.mxu0 0.0
    %3159 = vmatprep.subr.mxu0 0.0
    %3160 = vmatpush1.msra.mxu0 0.0
    %3161 = vmatprep.subr.mxu0 0.0
    %3162 = vmatpush1.msra.mxu0 0.0
    %3163 = vmatprep.subr.mxu0 0.0
    %3164 = vmatpush1.msra.mxu0 0.0
    %3165 = vmatprep.subr.mxu0 0.0
    %3166 = vmatpush1.msra.mxu0 0.0
    %3167 = vmatprep.subr.mxu0 0.0
    %3168 = vmatpush1.msra.mxu0 0.0
    %3169 = vmatprep.subr.mxu0 0.0
    %3170 = vmatpush1.msra.mxu0 0.0
    %3171 = vmatprep.subr.mxu0 0.0
    %3172 = vmatpush1.msra.mxu0 0.0
    %3173 = vmatprep.subr.mxu0 0.0
    %3174 = vmatpush1.msra.mxu0 0.0
    %3175 = vmatprep.subr.mxu0 0.0
    %3176 = vmatpush1.msra.mxu0 0.0
    %3177 = vmatprep.subr.mxu0 0.0
    %3178 = vmatpush1.msra.mxu0 0.0
    %3179 = vmatprep.subr.mxu0 0.0
    %3180 = vmatpush1.msra.mxu0 0.0
    %3181 = vmatprep.subr.mxu0 0.0
    %3182 = vmatpush1.msra.mxu0 0.0
    %3183 = vmatprep.subr.mxu0 0.0
    %3184 = vmatpush1.msra.mxu0 0.0
    %3185 = vmatprep.subr.mxu0 0.0
    %3186 = vmatpush1.msra.mxu0 0.0
    %3187 = vmatprep.subr.mxu0 0.0
    %3188 = vmatpush1.msra.mxu0 0.0
    %3189 = vmatprep.subr.mxu0 0.0
    %3190 = vmatpush1.msra.mxu0 0.0
    %3191 = vmatprep.subr.mxu0 0.0
    %3192 = vmatpush1.msra.mxu0 0.0
    %3193 = vmatprep.subr.mxu0 0.0
    %3194 = vmatpush1.msra.mxu0 0.0
    %3195 = vmatprep.subr.mxu0 0.0
    %3196 = vmatpush1.msra.mxu0 0.0
    %3197 = vmatprep.subr.mxu0 0.0
    %3198 = vmatpush1.msra.mxu0 0.0
    %3199 = vmatprep.subr.mxu0 0.0
    %3200 = vmatpush1.msra.mxu0 0.0
    %3201 = vmatprep.subr.mxu0 0.0
    %3202 = vmatpush1.msra.mxu0 0.0
    %3203 = vmatprep.subr.mxu0 0.0
    %3204 = vmatpush1.msra.mxu0 0.0
    %3205 = vmatprep.subr.mxu0 0.0
    %3206 = vmatpush1.msra.mxu0 0.0
    %3207 = vmatprep.subr.mxu0 0.0
    %3208 = vmatpush1.msra.mxu0 0.0
    %3209 = vmatprep.mubr.f32.mxu0 0.0
    %3210 = vmatmul.mubr.f32.gmra.mrb[0].mxu0 %v3140
    %v3211 = vpop.f32.mrb[0].mxu0
    %v3212 = vadd.f32 %v3138, %v3211
    %v3213 = vpop.f32.mrb[0].mxu0
    %3214 = vmatprep.mubr.f32.mxu0 0.0
    %3215 = vmatmul.mubr.f32.gmra.mrb[0].mxu0 %v3143
    %v3216 = vpop.f32.mrb[0].mxu0
    %v3217 = vadd.f32 %v3138, %v3216
    %v3218 = vpop.f32.mrb[0].mxu0
    %3219 = vdwg.mxu0
    %vm3220 = vcmp.gt.f32.partialorder %v3212, 0.0
    %vm3221 = vcmp.gt.f32.partialorder %v3217, 0.0
    %v3222 = vmul.f32 %v3212, 1.442695
    %v3223 = vpow.pop %v3222
    %v3224 = vmul.f32 %v3217, 1.442695
    %v3225 = vpow.pop %v3224
    %v3226 = vsub.f32 %v3223, 1.0
    %v3227 = vsub.f32 %v3225, 1.0
    %v3228 = vsel %vm3220, %v3212, %v3226
    %v3229 = vsel %vm3221, %v3217, %v3227
    %s3230 = scalar_lea.vmem [#allocation2], 224
    %v3231 = vld [vmem:[%s3230] sm:$0xff]
    %v3232 = vld [vmem:[%s3230 + $0x8] sm:$0xff]
    %v3233 = vld [vmem:[%s3230 + $0x10] sm:$0xff]
    %v3234 = vld [vmem:[%s3230 + $0x18] sm:$0xff]
    %v3236 = vsel %vm304, %v3228, 0
    %v3239 = vsel %vm304, %v3229, 0
    %3241 = vmatprep.subr.mxu0 0.0
    %3242 = vmatpush1.msra.mxu0 %v3231
    %3243 = vmatprep.subr.mxu0 0.0
    %3244 = vmatpush1.msra.mxu0 %v3232
    %3245 = vmatprep.subr.mxu0 0.0
    %3246 = vmatpush1.msra.mxu0 %v3233
    %3247 = vmatprep.subr.mxu0 0.0
    %3248 = vmatpush1.msra.mxu0 %v3234
    %3249 = vmatprep.subr.mxu0 0.0
    %3250 = vmatpush1.msra.mxu0 0.0
    %3251 = vmatprep.subr.mxu0 0.0
    %3252 = vmatpush1.msra.mxu0 0.0
    %3253 = vmatprep.subr.mxu0 0.0
    %3254 = vmatpush1.msra.mxu0 0.0
    %3255 = vmatprep.subr.mxu0 0.0
    %3256 = vmatpush1.msra.mxu0 0.0
    %3257 = vmatprep.subr.mxu0 0.0
    %3258 = vmatpush1.msra.mxu0 0.0
    %3259 = vmatprep.subr.mxu0 0.0
    %3260 = vmatpush1.msra.mxu0 0.0
    %3261 = vmatprep.subr.mxu0 0.0
    %3262 = vmatpush1.msra.mxu0 0.0
    %3263 = vmatprep.subr.mxu0 0.0
    %3264 = vmatpush1.msra.mxu0 0.0
    %3265 = vmatprep.subr.mxu0 0.0
    %3266 = vmatpush1.msra.mxu0 0.0
    %3267 = vmatprep.subr.mxu0 0.0
    %3268 = vmatpush1.msra.mxu0 0.0
    %3269 = vmatprep.subr.mxu0 0.0
    %3270 = vmatpush1.msra.mxu0 0.0
    %3271 = vmatprep.subr.mxu0 0.0
    %3272 = vmatpush1.msra.mxu0 0.0
    %3273 = vmatprep.subr.mxu0 0.0
    %3274 = vmatpush1.msra.mxu0 0.0
    %3275 = vmatprep.subr.mxu0 0.0
    %3276 = vmatpush1.msra.mxu0 0.0
    %3277 = vmatprep.subr.mxu0 0.0
    %3278 = vmatpush1.msra.mxu0 0.0
    %3279 = vmatprep.subr.mxu0 0.0
    %3280 = vmatpush1.msra.mxu0 0.0
    %3281 = vmatprep.subr.mxu0 0.0
    %3282 = vmatpush1.msra.mxu0 0.0
    %3283 = vmatprep.subr.mxu0 0.0
    %3284 = vmatpush1.msra.mxu0 0.0
    %3285 = vmatprep.subr.mxu0 0.0
    %3286 = vmatpush1.msra.mxu0 0.0
    %3287 = vmatprep.subr.mxu0 0.0
    %3288 = vmatpush1.msra.mxu0 0.0
    %3289 = vmatprep.subr.mxu0 0.0
    %3290 = vmatpush1.msra.mxu0 0.0
    %3291 = vmatprep.subr.mxu0 0.0
    %3292 = vmatpush1.msra.mxu0 0.0
    %3293 = vmatprep.subr.mxu0 0.0
    %3294 = vmatpush1.msra.mxu0 0.0
    %3295 = vmatprep.subr.mxu0 0.0
    %3296 = vmatpush1.msra.mxu0 0.0
    %3297 = vmatprep.subr.mxu0 0.0
    %3298 = vmatpush1.msra.mxu0 0.0
    %3299 = vmatprep.subr.mxu0 0.0
    %3300 = vmatpush1.msra.mxu0 0.0
    %3301 = vmatprep.subr.mxu0 0.0
    %3302 = vmatpush1.msra.mxu0 0.0
    %3303 = vmatprep.subr.mxu0 0.0
    %3304 = vmatpush1.msra.mxu0 0.0
    %3305 = vmatprep.mubr.f32.mxu0 0.0
    %3306 = vmatmul.mubr.f32.gmra.mrb[0].mxu0 %v3236
    %v3307 = vpop.f32.mrb[0].mxu0
    %v3308 = vadd.f32 0.0, %v3307
    %v3309 = vpop.f32.mrb[0].mxu0
    %3310 = vmatprep.mubr.f32.mxu0 0.0
    %3311 = vmatmul.mubr.f32.gmra.mrb[0].mxu0 %v3239
    %v3312 = vpop.f32.mrb[0].mxu0
    %v3313 = vadd.f32 0.0, %v3312
    %v3314 = vpop.f32.mrb[0].mxu0
    %3315 = vdwg.mxu0
    %v3316 = vadd.f32 %v2928, %v3308
    %v3317 = vadd.f32 %v2929, %v3313
    %v3318 = vld [vmem:[%s9] sm:$0x1]
    %v3320 = vlaneseq
    %v3321 = vshrl.u32 %v3320, 7
    %v3322 = vsub.s32 0, %v3321
    %v3323 = vrot.slane %v3318, %v3322
    %v3325 = vmul.f32 %v3316, %v3323
    %v3326 = vmul.f32 %v3317, %v3323
    %v3327 = vsel %vm304, %v3325, 0.0
    %3328 = vadd.xlane.f32.xlu0 %v3327
    %v3329 = vpop.xlane.xlu0 %3328
    %v3330 = vsel %vm304, %v3326, 0.0
    %3331 = vadd.xlane.f32.xlu0 %v3330
    %v3332 = vpop.xlane.xlu0 %3331
    %v3333 = vld [vmem:[%s8] sm:$0x1]
    %v3335 = vsel %vm304, %v3333, 0
    %v3338 = vsel %vm304, %v3316, 0
    %v3341 = vsel %vm304, %v3317, 0
    %3343 = vmatprep.subr.mxu0 0.0
    %3344 = vmatpush1.xpose.msra.mxu0 %v3338
    %3345 = vmatprep.subr.mxu0 0.0
    %3346 = vmatpush1.xpose.msra.mxu0 %v3341
    %3347 = vmatprep.subr.mxu0 0.0
    %3348 = vmatpush1.xpose.msra.mxu0 0.0
    %3349 = vmatprep.subr.mxu0 0.0
    %3350 = vmatpush1.xpose.msra.mxu0 0.0
    %3351 = vmatprep.subr.mxu0 0.0
    %3352 = vmatpush1.xpose.msra.mxu0 0.0
    %3353 = vmatprep.subr.mxu0 0.0
    %3354 = vmatpush1.xpose.msra.mxu0 0.0
    %3355 = vmatprep.subr.mxu0 0.0
    %3356 = vmatpush1.xpose.msra.mxu0 0.0
    %3357 = vmatprep.subr.mxu0 0.0
    %3358 = vmatpush1.xpose.msra.mxu0 0.0
    %3359 = vmatprep.subr.mxu0 0.0
    %3360 = vmatpush1.xpose.msra.mxu0 0.0
    %3361 = vmatprep.subr.mxu0 0.0
    %3362 = vmatpush1.xpose.msra.mxu0 0.0
    %3363 = vmatprep.subr.mxu0 0.0
    %3364 = vmatpush1.xpose.msra.mxu0 0.0
    %3365 = vmatprep.subr.mxu0 0.0
    %3366 = vmatpush1.xpose.msra.mxu0 0.0
    %3367 = vmatprep.subr.mxu0 0.0
    %3368 = vmatpush1.xpose.msra.mxu0 0.0
    %3369 = vmatprep.subr.mxu0 0.0
    %3370 = vmatpush1.xpose.msra.mxu0 0.0
    %3371 = vmatprep.subr.mxu0 0.0
    %3372 = vmatpush1.xpose.msra.mxu0 0.0
    %3373 = vmatprep.subr.mxu0 0.0
    %3374 = vmatpush1.xpose.msra.mxu0 0.0
    %3375 = vmatprep.subr.mxu0 0.0
    %3376 = vmatpush1.xpose.msra.mxu0 0.0
    %3377 = vmatprep.subr.mxu0 0.0
    %3378 = vmatpush1.xpose.msra.mxu0 0.0
    %3379 = vmatprep.subr.mxu0 0.0
    %3380 = vmatpush1.xpose.msra.mxu0 0.0
    %3381 = vmatprep.subr.mxu0 0.0
    %3382 = vmatpush1.xpose.msra.mxu0 0.0
    %3383 = vmatprep.subr.mxu0 0.0
    %3384 = vmatpush1.xpose.msra.mxu0 0.0
    %3385 = vmatprep.subr.mxu0 0.0
    %3386 = vmatpush1.xpose.msra.mxu0 0.0
    %3387 = vmatprep.subr.mxu0 0.0
    %3388 = vmatpush1.xpose.msra.mxu0 0.0
    %3389 = vmatprep.subr.mxu0 0.0
    %3390 = vmatpush1.xpose.msra.mxu0 0.0
    %3391 = vmatprep.subr.mxu0 0.0
    %3392 = vmatpush1.xpose.msra.mxu0 0.0
    %3393 = vmatprep.subr.mxu0 0.0
    %3394 = vmatpush1.xpose.msra.mxu0 0.0
    %3395 = vmatprep.subr.mxu0 0.0
    %3396 = vmatpush1.xpose.msra.mxu0 0.0
    %3397 = vmatprep.subr.mxu0 0.0
    %3398 = vmatpush1.xpose.msra.mxu0 0.0
    %3399 = vmatprep.subr.mxu0 0.0
    %3400 = vmatpush1.xpose.msra.mxu0 0.0
    %3401 = vmatprep.subr.mxu0 0.0
    %3402 = vmatpush1.xpose.msra.mxu0 0.0
    %3403 = vmatprep.subr.mxu0 0.0
    %3404 = vmatpush1.xpose.msra.mxu0 0.0
    %3405 = vmatprep.subr.mxu0 0.0
    %3406 = vmatpush1.xpose.msra.mxu0 0.0
    %3407 = vmatprep.mubr.f32.mxu0 0.0
    %3408 = vmatmul.mubr.f32.gmra.mrb[0].mxu0 %v3335
    %v3409 = vpop.f32.mrb[0].mxu0
    %v3410 = vadd.f32 0.0, %v3409
    %v3411 = vpop.f32.mrb[0].mxu0
    %3412 = vdwg.mxu0
    %v3413 = vlaneseq
    %v3414 = vshrl.u32 %v3413, 7
    %v3415 = vsub.s32 0, %v3414
    %v3416 = vrot.slane %v3410, %v3415
    %v3417 = vadd.f32 %v3329, %v3416
    %v3418 = vadd.f32 %v3332, %v3416
    %v3419 = vmul.f32 %v3417, 0.2
    %v3420 = vmul.f32 %v3418, 0.2
    %v3421 = vmax.f32 %v3417, %v3419
    %v3422 = vmax.f32 %v3418, %v3420
    %v3423 = vsel %vm204, %v3421, -1e+30
    %v3424 = vsel %vm205, %v3422, -1e+30
    %v3425 = vsel %vm118, %v3423, -inf
    %3426 = vmax.xlane.f32.xlu0 %v3425
    %v3427 = vpop.xlane.xlu0 %3426
    %v3428 = vsel %vm118, %v3424, -inf
    %3429 = vmax.xlane.f32.xlu0 %v3428
    %v3430 = vpop.xlane.xlu0 %3429
    %v3431 = vsub.f32 %v3423, %v3427
    %v3432 = vsub.f32 %v3424, %v3430
    %v3433 = vmul.f32 %v3431, 1.442695
    %v3434 = vpow.pop %v3433
    %v3435 = vmul.f32 %v3432, 1.442695
    %v3436 = vpow.pop %v3435
    %v3437 = vsel %vm118, %v3434, 0.0
    %3438 = vadd.xlane.f32.xlu0 %v3437
    %v3439 = vpop.xlane.xlu0 %3438
    %v3440 = vsel %vm118, %v3436, 0.0
    %3441 = vadd.xlane.f32.xlu0 %v3440
    %v3442 = vpop.xlane.xlu0 %3441
    %v3443 = vrcp.pop %v3439
    %v3444 = vmul.f32 %v3434, %v3443
    %v3445 = vrcp.pop %v3442
    %v3446 = vmul.f32 %v3436, %v3445
    %v3447 = vld [vmem:[%s10] sm:$0x1]
    %v3449 = vlaneseq
    %v3450 = vshrl.u32 %v3449, 7
    %v3451 = vsub.s32 0, %v3450
    %v3452 = vrot.slane %v3447, %v3451
    %v3455 = vsel %vm118, %v3444, 0
    %v3458 = vsel %vm118, %v3446, 0
    %3460 = vmatprep.subr.mxu0 0.0
    %3461 = vmatpush1.msra.mxu0 %v3316
    %3462 = vmatprep.subr.mxu0 0.0
    %3463 = vmatpush1.msra.mxu0 %v3317
    %3464 = vmatprep.subr.mxu0 0.0
    %3465 = vmatpush1.msra.mxu0 0.0
    %3466 = vmatprep.subr.mxu0 0.0
    %3467 = vmatpush1.msra.mxu0 0.0
    %3468 = vmatprep.subr.mxu0 0.0
    %3469 = vmatpush1.msra.mxu0 0.0
    %3470 = vmatprep.subr.mxu0 0.0
    %3471 = vmatpush1.msra.mxu0 0.0
    %3472 = vmatprep.subr.mxu0 0.0
    %3473 = vmatpush1.msra.mxu0 0.0
    %3474 = vmatprep.subr.mxu0 0.0
    %3475 = vmatpush1.msra.mxu0 0.0
    %3476 = vmatprep.subr.mxu0 0.0
    %3477 = vmatpush1.msra.mxu0 0.0
    %3478 = vmatprep.subr.mxu0 0.0
    %3479 = vmatpush1.msra.mxu0 0.0
    %3480 = vmatprep.subr.mxu0 0.0
    %3481 = vmatpush1.msra.mxu0 0.0
    %3482 = vmatprep.subr.mxu0 0.0
    %3483 = vmatpush1.msra.mxu0 0.0
    %3484 = vmatprep.subr.mxu0 0.0
    %3485 = vmatpush1.msra.mxu0 0.0
    %3486 = vmatprep.subr.mxu0 0.0
    %3487 = vmatpush1.msra.mxu0 0.0
    %3488 = vmatprep.subr.mxu0 0.0
    %3489 = vmatpush1.msra.mxu0 0.0
    %3490 = vmatprep.subr.mxu0 0.0
    %3491 = vmatpush1.msra.mxu0 0.0
    %3492 = vmatprep.subr.mxu0 0.0
    %3493 = vmatpush1.msra.mxu0 0.0
    %3494 = vmatprep.subr.mxu0 0.0
    %3495 = vmatpush1.msra.mxu0 0.0
    %3496 = vmatprep.subr.mxu0 0.0
    %3497 = vmatpush1.msra.mxu0 0.0
    %3498 = vmatprep.subr.mxu0 0.0
    %3499 = vmatpush1.msra.mxu0 0.0
    %3500 = vmatprep.subr.mxu0 0.0
    %3501 = vmatpush1.msra.mxu0 0.0
    %3502 = vmatprep.subr.mxu0 0.0
    %3503 = vmatpush1.msra.mxu0 0.0
    %3504 = vmatprep.subr.mxu0 0.0
    %3505 = vmatpush1.msra.mxu0 0.0
    %3506 = vmatprep.subr.mxu0 0.0
    %3507 = vmatpush1.msra.mxu0 0.0
    %3508 = vmatprep.subr.mxu0 0.0
    %3509 = vmatpush1.msra.mxu0 0.0
    %3510 = vmatprep.subr.mxu0 0.0
    %3511 = vmatpush1.msra.mxu0 0.0
    %3512 = vmatprep.subr.mxu0 0.0
    %3513 = vmatpush1.msra.mxu0 0.0
    %3514 = vmatprep.subr.mxu0 0.0
    %3515 = vmatpush1.msra.mxu0 0.0
    %3516 = vmatprep.subr.mxu0 0.0
    %3517 = vmatpush1.msra.mxu0 0.0
    %3518 = vmatprep.subr.mxu0 0.0
    %3519 = vmatpush1.msra.mxu0 0.0
    %3520 = vmatprep.subr.mxu0 0.0
    %3521 = vmatpush1.msra.mxu0 0.0
    %3522 = vmatprep.subr.mxu0 0.0
    %3523 = vmatpush1.msra.mxu0 0.0
    %3524 = vmatprep.mubr.f32.mxu0 0.0
    %3525 = vmatmul.mubr.f32.gmra.mrb[0].mxu0 %v3455
    %v3526 = vpop.f32.mrb[0].mxu0
    %v3527 = vadd.f32 %v3452, %v3526
    %v3528 = vpop.f32.mrb[0].mxu0
    %3529 = vmatprep.mubr.f32.mxu0 0.0
    %3530 = vmatmul.mubr.f32.gmra.mrb[0].mxu0 %v3458
    %v3531 = vpop.f32.mrb[0].mxu0
    %v3532 = vadd.f32 %v3452, %v3531
    %v3533 = vpop.f32.mrb[0].mxu0
    %3534 = vdwg.mxu0
    %vm3535 = vcmp.gt.f32.partialorder %v3527, 0.0
    %vm3536 = vcmp.gt.f32.partialorder %v3532, 0.0
    %v3537 = vmul.f32 %v3527, 1.442695
    %v3538 = vpow.pop %v3537
    %v3539 = vmul.f32 %v3532, 1.442695
    %v3540 = vpow.pop %v3539
    %v3541 = vsub.f32 %v3538, 1.0
    %v3542 = vsub.f32 %v3540, 1.0
    %v3543 = vsel %vm3535, %v3527, %v3541
    %v3544 = vsel %vm3536, %v3532, %v3542
    %v3545 = vld [vmem:[%s13] sm:$0x1]
    %v3547 = vlaneseq
    %v3548 = vshrl.u32 %v3547, 7
    %v3549 = vsub.s32 0, %v3548
    %v3550 = vrot.slane %v3545, %v3549
    %v3552 = vadd.f32 %v3550, 0.0
    %v3553 = vld [vmem:[%s11] sm:$0x3]
    %v3555 = vsel %vm118, %v3553, 0
    %3557 = vmatprep.subr.mxu0 0.0
    %3558 = vmatpush1.msra.mxu0 %v3543
    %3559 = vmatprep.subr.mxu0 0.0
    %3560 = vmatpush1.msra.mxu0 %v3544
    %3561 = vmatprep.subr.mxu0 0.0
    %3562 = vmatpush1.msra.mxu0 0.0
    %3563 = vmatprep.subr.mxu0 0.0
    %3564 = vmatpush1.msra.mxu0 0.0
    %3565 = vmatprep.subr.mxu0 0.0
    %3566 = vmatpush1.msra.mxu0 0.0
    %3567 = vmatprep.subr.mxu0 0.0
    %3568 = vmatpush1.msra.mxu0 0.0
    %3569 = vmatprep.subr.mxu0 0.0
    %3570 = vmatpush1.msra.mxu0 0.0
    %3571 = vmatprep.subr.mxu0 0.0
    %3572 = vmatpush1.msra.mxu0 0.0
    %3573 = vmatprep.subr.mxu0 0.0
    %3574 = vmatpush1.msra.mxu0 0.0
    %3575 = vmatprep.subr.mxu0 0.0
    %3576 = vmatpush1.msra.mxu0 0.0
    %3577 = vmatprep.subr.mxu0 0.0
    %3578 = vmatpush1.msra.mxu0 0.0
    %3579 = vmatprep.subr.mxu0 0.0
    %3580 = vmatpush1.msra.mxu0 0.0
    %3581 = vmatprep.subr.mxu0 0.0
    %3582 = vmatpush1.msra.mxu0 0.0
    %3583 = vmatprep.subr.mxu0 0.0
    %3584 = vmatpush1.msra.mxu0 0.0
    %3585 = vmatprep.subr.mxu0 0.0
    %3586 = vmatpush1.msra.mxu0 0.0
    %3587 = vmatprep.subr.mxu0 0.0
    %3588 = vmatpush1.msra.mxu0 0.0
    %3589 = vmatprep.subr.mxu0 0.0
    %3590 = vmatpush1.msra.mxu0 0.0
    %3591 = vmatprep.subr.mxu0 0.0
    %3592 = vmatpush1.msra.mxu0 0.0
    %3593 = vmatprep.subr.mxu0 0.0
    %3594 = vmatpush1.msra.mxu0 0.0
    %3595 = vmatprep.subr.mxu0 0.0
    %3596 = vmatpush1.msra.mxu0 0.0
    %3597 = vmatprep.subr.mxu0 0.0
    %3598 = vmatpush1.msra.mxu0 0.0
    %3599 = vmatprep.subr.mxu0 0.0
    %3600 = vmatpush1.msra.mxu0 0.0
    %3601 = vmatprep.subr.mxu0 0.0
    %3602 = vmatpush1.msra.mxu0 0.0
    %3603 = vmatprep.subr.mxu0 0.0
    %3604 = vmatpush1.msra.mxu0 0.0
    %3605 = vmatprep.subr.mxu0 0.0
    %3606 = vmatpush1.msra.mxu0 0.0
    %3607 = vmatprep.subr.mxu0 0.0
    %3608 = vmatpush1.msra.mxu0 0.0
    %3609 = vmatprep.subr.mxu0 0.0
    %3610 = vmatpush1.msra.mxu0 0.0
    %3611 = vmatprep.subr.mxu0 0.0
    %3612 = vmatpush1.msra.mxu0 0.0
    %3613 = vmatprep.subr.mxu0 0.0
    %3614 = vmatpush1.msra.mxu0 0.0
    %3615 = vmatprep.subr.mxu0 0.0
    %3616 = vmatpush1.msra.mxu0 0.0
    %3617 = vmatprep.subr.mxu0 0.0
    %3618 = vmatpush1.msra.mxu0 0.0
    %3619 = vmatprep.subr.mxu0 0.0
    %3620 = vmatpush1.msra.mxu0 0.0
    %3621 = vmatprep.mubr.f32.mxu0 0.0
    %3622 = vmatmul.mubr.f32.gmra.mrb[0].mxu0 %v3555
    %v3623 = vpop.f32.mrb[0].mxu0
    %v3624 = vadd.f32 0.0, %v3623
    %v3625 = vpop.f32.mrb[0].mxu0
    %3626 = vdwg.mxu0
    %v3627 = vld [vmem:[#allocation5] sm:$0xff]
    %v3628 = vld [vmem:[#allocation5 + $0x8] sm:$0xff]
    %v3629 = vld [vmem:[#allocation5 + $0x10] sm:$0xff]
    %v3630 = vld [vmem:[#allocation5 + $0x18] sm:$0xff]
    %v3632 = vsel %vm304, %v3624, 0
    %3634 = vmatprep.subr.mxu0 0.0
    %3635 = vmatpush1.msra.mxu0 %v3627
    %3636 = vmatprep.subr.mxu0 0.0
    %3637 = vmatpush1.msra.mxu0 %v3628
    %3638 = vmatprep.subr.mxu0 0.0
    %3639 = vmatpush1.msra.mxu0 %v3629
    %3640 = vmatprep.subr.mxu0 0.0
    %3641 = vmatpush1.msra.mxu0 %v3630
    %3642 = vmatprep.subr.mxu0 0.0
    %3643 = vmatpush1.msra.mxu0 0.0
    %3644 = vmatprep.subr.mxu0 0.0
    %3645 = vmatpush1.msra.mxu0 0.0
    %3646 = vmatprep.subr.mxu0 0.0
    %3647 = vmatpush1.msra.mxu0 0.0
    %3648 = vmatprep.subr.mxu0 0.0
    %3649 = vmatpush1.msra.mxu0 0.0
    %3650 = vmatprep.subr.mxu0 0.0
    %3651 = vmatpush1.msra.mxu0 0.0
    %3652 = vmatprep.subr.mxu0 0.0
    %3653 = vmatpush1.msra.mxu0 0.0
    %3654 = vmatprep.subr.mxu0 0.0
    %3655 = vmatpush1.msra.mxu0 0.0
    %3656 = vmatprep.subr.mxu0 0.0
    %3657 = vmatpush1.msra.mxu0 0.0
    %3658 = vmatprep.subr.mxu0 0.0
    %3659 = vmatpush1.msra.mxu0 0.0
    %3660 = vmatprep.subr.mxu0 0.0
    %3661 = vmatpush1.msra.mxu0 0.0
    %3662 = vmatprep.subr.mxu0 0.0
    %3663 = vmatpush1.msra.mxu0 0.0
    %3664 = vmatprep.subr.mxu0 0.0
    %3665 = vmatpush1.msra.mxu0 0.0
    %3666 = vmatprep.subr.mxu0 0.0
    %3667 = vmatpush1.msra.mxu0 0.0
    %3668 = vmatprep.subr.mxu0 0.0
    %3669 = vmatpush1.msra.mxu0 0.0
    %3670 = vmatprep.subr.mxu0 0.0
    %3671 = vmatpush1.msra.mxu0 0.0
    %3672 = vmatprep.subr.mxu0 0.0
    %3673 = vmatpush1.msra.mxu0 0.0
    %3674 = vmatprep.subr.mxu0 0.0
    %3675 = vmatpush1.msra.mxu0 0.0
    %3676 = vmatprep.subr.mxu0 0.0
    %3677 = vmatpush1.msra.mxu0 0.0
    %3678 = vmatprep.subr.mxu0 0.0
    %3679 = vmatpush1.msra.mxu0 0.0
    %3680 = vmatprep.subr.mxu0 0.0
    %3681 = vmatpush1.msra.mxu0 0.0
    %3682 = vmatprep.subr.mxu0 0.0
    %3683 = vmatpush1.msra.mxu0 0.0
    %3684 = vmatprep.subr.mxu0 0.0
    %3685 = vmatpush1.msra.mxu0 0.0
    %3686 = vmatprep.subr.mxu0 0.0
    %3687 = vmatpush1.msra.mxu0 0.0
    %3688 = vmatprep.subr.mxu0 0.0
    %3689 = vmatpush1.msra.mxu0 0.0
    %3690 = vmatprep.subr.mxu0 0.0
    %3691 = vmatpush1.msra.mxu0 0.0
    %3692 = vmatprep.subr.mxu0 0.0
    %3693 = vmatpush1.msra.mxu0 0.0
    %3694 = vmatprep.subr.mxu0 0.0
    %3695 = vmatpush1.msra.mxu0 0.0
    %3696 = vmatprep.subr.mxu0 0.0
    %3697 = vmatpush1.msra.mxu0 0.0
    %3698 = vmatprep.mubr.f32.mxu0 0.0
    %3699 = vmatmul.mubr.f32.gmra.mrb[0].mxu0 %v3632
    %v3700 = vpop.f32.mrb[0].mxu0
    %v3701 = vadd.f32 0.0, %v3700
    %v3702 = vpop.f32.mrb[0].mxu0
    %3703 = vdwg.mxu0
    %v3704 = vadd.f32 %v3552, %v3701
    %s3705 = scalar_lea.vmem %s11, 2
    %v3706 = vld [vmem:[%s3705] sm:$0x3]
    %v3708 = vsel %vm118, %v3706, 0
    %3710 = vmatprep.subr.mxu0 0.0
    %3711 = vmatpush1.msra.mxu0 %v3543
    %3712 = vmatprep.subr.mxu0 0.0
    %3713 = vmatpush1.msra.mxu0 %v3544
    %3714 = vmatprep.subr.mxu0 0.0
    %3715 = vmatpush1.msra.mxu0 0.0
    %3716 = vmatprep.subr.mxu0 0.0
    %3717 = vmatpush1.msra.mxu0 0.0
    %3718 = vmatprep.subr.mxu0 0.0
    %3719 = vmatpush1.msra.mxu0 0.0
    %3720 = vmatprep.subr.mxu0 0.0
    %3721 = vmatpush1.msra.mxu0 0.0
    %3722 = vmatprep.subr.mxu0 0.0
    %3723 = vmatpush1.msra.mxu0 0.0
    %3724 = vmatprep.subr.mxu0 0.0
    %3725 = vmatpush1.msra.mxu0 0.0
    %3726 = vmatprep.subr.mxu0 0.0
    %3727 = vmatpush1.msra.mxu0 0.0
    %3728 = vmatprep.subr.mxu0 0.0
    %3729 = vmatpush1.msra.mxu0 0.0
    %3730 = vmatprep.subr.mxu0 0.0
    %3731 = vmatpush1.msra.mxu0 0.0
    %3732 = vmatprep.subr.mxu0 0.0
    %3733 = vmatpush1.msra.mxu0 0.0
    %3734 = vmatprep.subr.mxu0 0.0
    %3735 = vmatpush1.msra.mxu0 0.0
    %3736 = vmatprep.subr.mxu0 0.0
    %3737 = vmatpush1.msra.mxu0 0.0
    %3738 = vmatprep.subr.mxu0 0.0
    %3739 = vmatpush1.msra.mxu0 0.0
    %3740 = vmatprep.subr.mxu0 0.0
    %3741 = vmatpush1.msra.mxu0 0.0
    %3742 = vmatprep.subr.mxu0 0.0
    %3743 = vmatpush1.msra.mxu0 0.0
    %3744 = vmatprep.subr.mxu0 0.0
    %3745 = vmatpush1.msra.mxu0 0.0
    %3746 = vmatprep.subr.mxu0 0.0
    %3747 = vmatpush1.msra.mxu0 0.0
    %3748 = vmatprep.subr.mxu0 0.0
    %3749 = vmatpush1.msra.mxu0 0.0
    %3750 = vmatprep.subr.mxu0 0.0
    %3751 = vmatpush1.msra.mxu0 0.0
    %3752 = vmatprep.subr.mxu0 0.0
    %3753 = vmatpush1.msra.mxu0 0.0
    %3754 = vmatprep.subr.mxu0 0.0
    %3755 = vmatpush1.msra.mxu0 0.0
    %3756 = vmatprep.subr.mxu0 0.0
    %3757 = vmatpush1.msra.mxu0 0.0
    %3758 = vmatprep.subr.mxu0 0.0
    %3759 = vmatpush1.msra.mxu0 0.0
    %3760 = vmatprep.subr.mxu0 0.0
    %3761 = vmatpush1.msra.mxu0 0.0
    %3762 = vmatprep.subr.mxu0 0.0
    %3763 = vmatpush1.msra.mxu0 0.0
    %3764 = vmatprep.subr.mxu0 0.0
    %3765 = vmatpush1.msra.mxu0 0.0
    %3766 = vmatprep.subr.mxu0 0.0
    %3767 = vmatpush1.msra.mxu0 0.0
    %3768 = vmatprep.subr.mxu0 0.0
    %3769 = vmatpush1.msra.mxu0 0.0
    %3770 = vmatprep.subr.mxu0 0.0
    %3771 = vmatpush1.msra.mxu0 0.0
    %3772 = vmatprep.subr.mxu0 0.0
    %3773 = vmatpush1.msra.mxu0 0.0
    %3774 = vmatprep.mubr.f32.mxu0 0.0
    %3775 = vmatmul.mubr.f32.gmra.mrb[0].mxu0 %v3708
    %v3776 = vpop.f32.mrb[0].mxu0
    %v3777 = vadd.f32 0.0, %v3776
    %v3778 = vpop.f32.mrb[0].mxu0
    %3779 = vdwg.mxu0
    %s3780 = scalar_lea.vmem [#allocation5], 32
    %v3781 = vld [vmem:[%s3780] sm:$0xff]
    %v3782 = vld [vmem:[%s3780 + $0x8] sm:$0xff]
    %v3783 = vld [vmem:[%s3780 + $0x10] sm:$0xff]
    %v3784 = vld [vmem:[%s3780 + $0x18] sm:$0xff]
    %v3786 = vsel %vm304, %v3777, 0
    %3788 = vmatprep.subr.mxu0 0.0
    %3789 = vmatpush1.msra.mxu0 %v3781
    %3790 = vmatprep.subr.mxu0 0.0
    %3791 = vmatpush1.msra.mxu0 %v3782
    %3792 = vmatprep.subr.mxu0 0.0
    %3793 = vmatpush1.msra.mxu0 %v3783
    %3794 = vmatprep.subr.mxu0 0.0
    %3795 = vmatpush1.msra.mxu0 %v3784
    %3796 = vmatprep.subr.mxu0 0.0
    %3797 = vmatpush1.msra.mxu0 0.0
    %3798 = vmatprep.subr.mxu0 0.0
    %3799 = vmatpush1.msra.mxu0 0.0
    %3800 = vmatprep.subr.mxu0 0.0
    %3801 = vmatpush1.msra.mxu0 0.0
    %3802 = vmatprep.subr.mxu0 0.0
    %3803 = vmatpush1.msra.mxu0 0.0
    %3804 = vmatprep.subr.mxu0 0.0
    %3805 = vmatpush1.msra.mxu0 0.0
    %3806 = vmatprep.subr.mxu0 0.0
    %3807 = vmatpush1.msra.mxu0 0.0
    %3808 = vmatprep.subr.mxu0 0.0
    %3809 = vmatpush1.msra.mxu0 0.0
    %3810 = vmatprep.subr.mxu0 0.0
    %3811 = vmatpush1.msra.mxu0 0.0
    %3812 = vmatprep.subr.mxu0 0.0
    %3813 = vmatpush1.msra.mxu0 0.0
    %3814 = vmatprep.subr.mxu0 0.0
    %3815 = vmatpush1.msra.mxu0 0.0
    %3816 = vmatprep.subr.mxu0 0.0
    %3817 = vmatpush1.msra.mxu0 0.0
    %3818 = vmatprep.subr.mxu0 0.0
    %3819 = vmatpush1.msra.mxu0 0.0
    %3820 = vmatprep.subr.mxu0 0.0
    %3821 = vmatpush1.msra.mxu0 0.0
    %3822 = vmatprep.subr.mxu0 0.0
    %3823 = vmatpush1.msra.mxu0 0.0
    %3824 = vmatprep.subr.mxu0 0.0
    %3825 = vmatpush1.msra.mxu0 0.0
    %3826 = vmatprep.subr.mxu0 0.0
    %3827 = vmatpush1.msra.mxu0 0.0
    %3828 = vmatprep.subr.mxu0 0.0
    %3829 = vmatpush1.msra.mxu0 0.0
    %3830 = vmatprep.subr.mxu0 0.0
    %3831 = vmatpush1.msra.mxu0 0.0
    %3832 = vmatprep.subr.mxu0 0.0
    %3833 = vmatpush1.msra.mxu0 0.0
    %3834 = vmatprep.subr.mxu0 0.0
    %3835 = vmatpush1.msra.mxu0 0.0
    %3836 = vmatprep.subr.mxu0 0.0
    %3837 = vmatpush1.msra.mxu0 0.0
    %3838 = vmatprep.subr.mxu0 0.0
    %3839 = vmatpush1.msra.mxu0 0.0
    %3840 = vmatprep.subr.mxu0 0.0
    %3841 = vmatpush1.msra.mxu0 0.0
    %3842 = vmatprep.subr.mxu0 0.0
    %3843 = vmatpush1.msra.mxu0 0.0
    %3844 = vmatprep.subr.mxu0 0.0
    %3845 = vmatpush1.msra.mxu0 0.0
    %3846 = vmatprep.subr.mxu0 0.0
    %3847 = vmatpush1.msra.mxu0 0.0
    %3848 = vmatprep.subr.mxu0 0.0
    %3849 = vmatpush1.msra.mxu0 0.0
    %3850 = vmatprep.subr.mxu0 0.0
    %3851 = vmatpush1.msra.mxu0 0.0
    %3852 = vmatprep.mubr.f32.mxu0 0.0
    %3853 = vmatmul.mubr.f32.gmra.mrb[0].mxu0 %v3786
    %v3854 = vpop.f32.mrb[0].mxu0
    %v3855 = vadd.f32 0.0, %v3854
    %v3856 = vpop.f32.mrb[0].mxu0
    %3857 = vdwg.mxu0
    %v3858 = vadd.f32 %v3704, %v3855
    %s3859 = scalar_lea.vmem %s11, 4
    %v3860 = vld [vmem:[%s3859] sm:$0x3]
    %v3862 = vsel %vm118, %v3860, 0
    %3864 = vmatprep.subr.mxu0 0.0
    %3865 = vmatpush1.msra.mxu0 %v3543
    %3866 = vmatprep.subr.mxu0 0.0
    %3867 = vmatpush1.msra.mxu0 %v3544
    %3868 = vmatprep.subr.mxu0 0.0
    %3869 = vmatpush1.msra.mxu0 0.0
    %3870 = vmatprep.subr.mxu0 0.0
    %3871 = vmatpush1.msra.mxu0 0.0
    %3872 = vmatprep.subr.mxu0 0.0
    %3873 = vmatpush1.msra.mxu0 0.0
    %3874 = vmatprep.subr.mxu0 0.0
    %3875 = vmatpush1.msra.mxu0 0.0
    %3876 = vmatprep.subr.mxu0 0.0
    %3877 = vmatpush1.msra.mxu0 0.0
    %3878 = vmatprep.subr.mxu0 0.0
    %3879 = vmatpush1.msra.mxu0 0.0
    %3880 = vmatprep.subr.mxu0 0.0
    %3881 = vmatpush1.msra.mxu0 0.0
    %3882 = vmatprep.subr.mxu0 0.0
    %3883 = vmatpush1.msra.mxu0 0.0
    %3884 = vmatprep.subr.mxu0 0.0
    %3885 = vmatpush1.msra.mxu0 0.0
    %3886 = vmatprep.subr.mxu0 0.0
    %3887 = vmatpush1.msra.mxu0 0.0
    %3888 = vmatprep.subr.mxu0 0.0
    %3889 = vmatpush1.msra.mxu0 0.0
    %3890 = vmatprep.subr.mxu0 0.0
    %3891 = vmatpush1.msra.mxu0 0.0
    %3892 = vmatprep.subr.mxu0 0.0
    %3893 = vmatpush1.msra.mxu0 0.0
    %3894 = vmatprep.subr.mxu0 0.0
    %3895 = vmatpush1.msra.mxu0 0.0
    %3896 = vmatprep.subr.mxu0 0.0
    %3897 = vmatpush1.msra.mxu0 0.0
    %3898 = vmatprep.subr.mxu0 0.0
    %3899 = vmatpush1.msra.mxu0 0.0
    %3900 = vmatprep.subr.mxu0 0.0
    %3901 = vmatpush1.msra.mxu0 0.0
    %3902 = vmatprep.subr.mxu0 0.0
    %3903 = vmatpush1.msra.mxu0 0.0
    %3904 = vmatprep.subr.mxu0 0.0
    %3905 = vmatpush1.msra.mxu0 0.0
    %3906 = vmatprep.subr.mxu0 0.0
    %3907 = vmatpush1.msra.mxu0 0.0
    %3908 = vmatprep.subr.mxu0 0.0
    %3909 = vmatpush1.msra.mxu0 0.0
    %3910 = vmatprep.subr.mxu0 0.0
    %3911 = vmatpush1.msra.mxu0 0.0
    %3912 = vmatprep.subr.mxu0 0.0
    %3913 = vmatpush1.msra.mxu0 0.0
    %3914 = vmatprep.subr.mxu0 0.0
    %3915 = vmatpush1.msra.mxu0 0.0
    %3916 = vmatprep.subr.mxu0 0.0
    %3917 = vmatpush1.msra.mxu0 0.0
    %3918 = vmatprep.subr.mxu0 0.0
    %3919 = vmatpush1.msra.mxu0 0.0
    %3920 = vmatprep.subr.mxu0 0.0
    %3921 = vmatpush1.msra.mxu0 0.0
    %3922 = vmatprep.subr.mxu0 0.0
    %3923 = vmatpush1.msra.mxu0 0.0
    %3924 = vmatprep.subr.mxu0 0.0
    %3925 = vmatpush1.msra.mxu0 0.0
    %3926 = vmatprep.subr.mxu0 0.0
    %3927 = vmatpush1.msra.mxu0 0.0
    %3928 = vmatprep.mubr.f32.mxu0 0.0
    %3929 = vmatmul.mubr.f32.gmra.mrb[0].mxu0 %v3862
    %v3930 = vpop.f32.mrb[0].mxu0
    %v3931 = vadd.f32 0.0, %v3930
    %v3932 = vpop.f32.mrb[0].mxu0
    %3933 = vdwg.mxu0
    %s3934 = scalar_lea.vmem [#allocation5], 64
    %v3935 = vld [vmem:[%s3934] sm:$0xff]
    %v3936 = vld [vmem:[%s3934 + $0x8] sm:$0xff]
    %v3937 = vld [vmem:[%s3934 + $0x10] sm:$0xff]
    %v3938 = vld [vmem:[%s3934 + $0x18] sm:$0xff]
    %v3940 = vsel %vm304, %v3931, 0
    %3942 = vmatprep.subr.mxu0 0.0
    %3943 = vmatpush1.msra.mxu0 %v3935
    %3944 = vmatprep.subr.mxu0 0.0
    %3945 = vmatpush1.msra.mxu0 %v3936
    %3946 = vmatprep.subr.mxu0 0.0
    %3947 = vmatpush1.msra.mxu0 %v3937
    %3948 = vmatprep.subr.mxu0 0.0
    %3949 = vmatpush1.msra.mxu0 %v3938
    %3950 = vmatprep.subr.mxu0 0.0
    %3951 = vmatpush1.msra.mxu0 0.0
    %3952 = vmatprep.subr.mxu0 0.0
    %3953 = vmatpush1.msra.mxu0 0.0
    %3954 = vmatprep.subr.mxu0 0.0
    %3955 = vmatpush1.msra.mxu0 0.0
    %3956 = vmatprep.subr.mxu0 0.0
    %3957 = vmatpush1.msra.mxu0 0.0
    %3958 = vmatprep.subr.mxu0 0.0
    %3959 = vmatpush1.msra.mxu0 0.0
    %3960 = vmatprep.subr.mxu0 0.0
    %3961 = vmatpush1.msra.mxu0 0.0
    %3962 = vmatprep.subr.mxu0 0.0
    %3963 = vmatpush1.msra.mxu0 0.0
    %3964 = vmatprep.subr.mxu0 0.0
    %3965 = vmatpush1.msra.mxu0 0.0
    %3966 = vmatprep.subr.mxu0 0.0
    %3967 = vmatpush1.msra.mxu0 0.0
    %3968 = vmatprep.subr.mxu0 0.0
    %3969 = vmatpush1.msra.mxu0 0.0
    %3970 = vmatprep.subr.mxu0 0.0
    %3971 = vmatpush1.msra.mxu0 0.0
    %3972 = vmatprep.subr.mxu0 0.0
    %3973 = vmatpush1.msra.mxu0 0.0
    %3974 = vmatprep.subr.mxu0 0.0
    %3975 = vmatpush1.msra.mxu0 0.0
    %3976 = vmatprep.subr.mxu0 0.0
    %3977 = vmatpush1.msra.mxu0 0.0
    %3978 = vmatprep.subr.mxu0 0.0
    %3979 = vmatpush1.msra.mxu0 0.0
    %3980 = vmatprep.subr.mxu0 0.0
    %3981 = vmatpush1.msra.mxu0 0.0
    %3982 = vmatprep.subr.mxu0 0.0
    %3983 = vmatpush1.msra.mxu0 0.0
    %3984 = vmatprep.subr.mxu0 0.0
    %3985 = vmatpush1.msra.mxu0 0.0
    %3986 = vmatprep.subr.mxu0 0.0
    %3987 = vmatpush1.msra.mxu0 0.0
    %3988 = vmatprep.subr.mxu0 0.0
    %3989 = vmatpush1.msra.mxu0 0.0
    %3990 = vmatprep.subr.mxu0 0.0
    %3991 = vmatpush1.msra.mxu0 0.0
    %3992 = vmatprep.subr.mxu0 0.0
    %3993 = vmatpush1.msra.mxu0 0.0
    %3994 = vmatprep.subr.mxu0 0.0
    %3995 = vmatpush1.msra.mxu0 0.0
    %3996 = vmatprep.subr.mxu0 0.0
    %3997 = vmatpush1.msra.mxu0 0.0
    %3998 = vmatprep.subr.mxu0 0.0
    %3999 = vmatpush1.msra.mxu0 0.0
    %4000 = vmatprep.subr.mxu0 0.0
    %4001 = vmatpush1.msra.mxu0 0.0
    %4002 = vmatprep.subr.mxu0 0.0
    %4003 = vmatpush1.msra.mxu0 0.0
    %4004 = vmatprep.subr.mxu0 0.0
    %4005 = vmatpush1.msra.mxu0 0.0
    %4006 = vmatprep.mubr.f32.mxu0 0.0
    %4007 = vmatmul.mubr.f32.gmra.mrb[0].mxu0 %v3940
    %v4008 = vpop.f32.mrb[0].mxu0
    %v4009 = vadd.f32 0.0, %v4008
    %v4010 = vpop.f32.mrb[0].mxu0
    %4011 = vdwg.mxu0
    %v4012 = vadd.f32 %v3858, %v4009
    %s4013 = scalar_lea.vmem %s11, 6
    %v4014 = vld [vmem:[%s4013] sm:$0x3]
    %v4016 = vsel %vm118, %v4014, 0
    %4018 = vmatprep.subr.mxu0 0.0
    %4019 = vmatpush1.msra.mxu0 %v3543
    %4020 = vmatprep.subr.mxu0 0.0
    %4021 = vmatpush1.msra.mxu0 %v3544
    %4022 = vmatprep.subr.mxu0 0.0
    %4023 = vmatpush1.msra.mxu0 0.0
    %4024 = vmatprep.subr.mxu0 0.0
    %4025 = vmatpush1.msra.mxu0 0.0
    %4026 = vmatprep.subr.mxu0 0.0
    %4027 = vmatpush1.msra.mxu0 0.0
    %4028 = vmatprep.subr.mxu0 0.0
    %4029 = vmatpush1.msra.mxu0 0.0
    %4030 = vmatprep.subr.mxu0 0.0
    %4031 = vmatpush1.msra.mxu0 0.0
    %4032 = vmatprep.subr.mxu0 0.0
    %4033 = vmatpush1.msra.mxu0 0.0
    %4034 = vmatprep.subr.mxu0 0.0
    %4035 = vmatpush1.msra.mxu0 0.0
    %4036 = vmatprep.subr.mxu0 0.0
    %4037 = vmatpush1.msra.mxu0 0.0
    %4038 = vmatprep.subr.mxu0 0.0
    %4039 = vmatpush1.msra.mxu0 0.0
    %4040 = vmatprep.subr.mxu0 0.0
    %4041 = vmatpush1.msra.mxu0 0.0
    %4042 = vmatprep.subr.mxu0 0.0
    %4043 = vmatpush1.msra.mxu0 0.0
    %4044 = vmatprep.subr.mxu0 0.0
    %4045 = vmatpush1.msra.mxu0 0.0
    %4046 = vmatprep.subr.mxu0 0.0
    %4047 = vmatpush1.msra.mxu0 0.0
    %4048 = vmatprep.subr.mxu0 0.0
    %4049 = vmatpush1.msra.mxu0 0.0
    %4050 = vmatprep.subr.mxu0 0.0
    %4051 = vmatpush1.msra.mxu0 0.0
    %4052 = vmatprep.subr.mxu0 0.0
    %4053 = vmatpush1.msra.mxu0 0.0
    %4054 = vmatprep.subr.mxu0 0.0
    %4055 = vmatpush1.msra.mxu0 0.0
    %4056 = vmatprep.subr.mxu0 0.0
    %4057 = vmatpush1.msra.mxu0 0.0
    %4058 = vmatprep.subr.mxu0 0.0
    %4059 = vmatpush1.msra.mxu0 0.0
    %4060 = vmatprep.subr.mxu0 0.0
    %4061 = vmatpush1.msra.mxu0 0.0
    %4062 = vmatprep.subr.mxu0 0.0
    %4063 = vmatpush1.msra.mxu0 0.0
    %4064 = vmatprep.subr.mxu0 0.0
    %4065 = vmatpush1.msra.mxu0 0.0
    %4066 = vmatprep.subr.mxu0 0.0
    %4067 = vmatpush1.msra.mxu0 0.0
    %4068 = vmatprep.subr.mxu0 0.0
    %4069 = vmatpush1.msra.mxu0 0.0
    %4070 = vmatprep.subr.mxu0 0.0
    %4071 = vmatpush1.msra.mxu0 0.0
    %4072 = vmatprep.subr.mxu0 0.0
    %4073 = vmatpush1.msra.mxu0 0.0
    %4074 = vmatprep.subr.mxu0 0.0
    %4075 = vmatpush1.msra.mxu0 0.0
    %4076 = vmatprep.subr.mxu0 0.0
    %4077 = vmatpush1.msra.mxu0 0.0
    %4078 = vmatprep.subr.mxu0 0.0
    %4079 = vmatpush1.msra.mxu0 0.0
    %4080 = vmatprep.subr.mxu0 0.0
    %4081 = vmatpush1.msra.mxu0 0.0
    %4082 = vmatprep.mubr.f32.mxu0 0.0
    %4083 = vmatmul.mubr.f32.gmra.mrb[0].mxu0 %v4016
    %v4084 = vpop.f32.mrb[0].mxu0
    %v4085 = vadd.f32 0.0, %v4084
    %v4086 = vpop.f32.mrb[0].mxu0
    %4087 = vdwg.mxu0
    %s4088 = scalar_lea.vmem [#allocation5], 96
    %v4089 = vld [vmem:[%s4088] sm:$0xff]
    %v4090 = vld [vmem:[%s4088 + $0x8] sm:$0xff]
    %v4091 = vld [vmem:[%s4088 + $0x10] sm:$0xff]
    %v4092 = vld [vmem:[%s4088 + $0x18] sm:$0xff]
    %v4094 = vsel %vm304, %v4085, 0
    %4096 = vmatprep.subr.mxu0 0.0
    %4097 = vmatpush1.msra.mxu0 %v4089
    %4098 = vmatprep.subr.mxu0 0.0
    %4099 = vmatpush1.msra.mxu0 %v4090
    %4100 = vmatprep.subr.mxu0 0.0
    %4101 = vmatpush1.msra.mxu0 %v4091
    %4102 = vmatprep.subr.mxu0 0.0
    %4103 = vmatpush1.msra.mxu0 %v4092
    %4104 = vmatprep.subr.mxu0 0.0
    %4105 = vmatpush1.msra.mxu0 0.0
    %4106 = vmatprep.subr.mxu0 0.0
    %4107 = vmatpush1.msra.mxu0 0.0
    %4108 = vmatprep.subr.mxu0 0.0
    %4109 = vmatpush1.msra.mxu0 0.0
    %4110 = vmatprep.subr.mxu0 0.0
    %4111 = vmatpush1.msra.mxu0 0.0
    %4112 = vmatprep.subr.mxu0 0.0
    %4113 = vmatpush1.msra.mxu0 0.0
    %4114 = vmatprep.subr.mxu0 0.0
    %4115 = vmatpush1.msra.mxu0 0.0
    %4116 = vmatprep.subr.mxu0 0.0
    %4117 = vmatpush1.msra.mxu0 0.0
    %4118 = vmatprep.subr.mxu0 0.0
    %4119 = vmatpush1.msra.mxu0 0.0
    %4120 = vmatprep.subr.mxu0 0.0
    %4121 = vmatpush1.msra.mxu0 0.0
    %4122 = vmatprep.subr.mxu0 0.0
    %4123 = vmatpush1.msra.mxu0 0.0
    %4124 = vmatprep.subr.mxu0 0.0
    %4125 = vmatpush1.msra.mxu0 0.0
    %4126 = vmatprep.subr.mxu0 0.0
    %4127 = vmatpush1.msra.mxu0 0.0
    %4128 = vmatprep.subr.mxu0 0.0
    %4129 = vmatpush1.msra.mxu0 0.0
    %4130 = vmatprep.subr.mxu0 0.0
    %4131 = vmatpush1.msra.mxu0 0.0
    %4132 = vmatprep.subr.mxu0 0.0
    %4133 = vmatpush1.msra.mxu0 0.0
    %4134 = vmatprep.subr.mxu0 0.0
    %4135 = vmatpush1.msra.mxu0 0.0
    %4136 = vmatprep.subr.mxu0 0.0
    %4137 = vmatpush1.msra.mxu0 0.0
    %4138 = vmatprep.subr.mxu0 0.0
    %4139 = vmatpush1.msra.mxu0 0.0
    %4140 = vmatprep.subr.mxu0 0.0
    %4141 = vmatpush1.msra.mxu0 0.0
    %4142 = vmatprep.subr.mxu0 0.0
    %4143 = vmatpush1.msra.mxu0 0.0
    %4144 = vmatprep.subr.mxu0 0.0
    %4145 = vmatpush1.msra.mxu0 0.0
    %4146 = vmatprep.subr.mxu0 0.0
    %4147 = vmatpush1.msra.mxu0 0.0
    %4148 = vmatprep.subr.mxu0 0.0
    %4149 = vmatpush1.msra.mxu0 0.0
    %4150 = vmatprep.subr.mxu0 0.0
    %4151 = vmatpush1.msra.mxu0 0.0
    %4152 = vmatprep.subr.mxu0 0.0
    %4153 = vmatpush1.msra.mxu0 0.0
    %4154 = vmatprep.subr.mxu0 0.0
    %4155 = vmatpush1.msra.mxu0 0.0
    %4156 = vmatprep.subr.mxu0 0.0
    %4157 = vmatpush1.msra.mxu0 0.0
    %4158 = vmatprep.subr.mxu0 0.0
    %4159 = vmatpush1.msra.mxu0 0.0
    %4160 = vmatprep.mubr.f32.mxu0 0.0
    %4161 = vmatmul.mubr.f32.gmra.mrb[0].mxu0 %v4094
    %v4162 = vpop.f32.mrb[0].mxu0
    %v4163 = vadd.f32 0.0, %v4162
    %v4164 = vpop.f32.mrb[0].mxu0
    %4165 = vdwg.mxu0
    %v4166 = vadd.f32 %v4012, %v4163
    %s4167 = scalar_lea.vmem %s11, 8
    %v4168 = vld [vmem:[%s4167] sm:$0x3]
    %v4170 = vsel %vm118, %v4168, 0
    %4172 = vmatprep.subr.mxu0 0.0
    %4173 = vmatpush1.msra.mxu0 %v3543
    %4174 = vmatprep.subr.mxu0 0.0
    %4175 = vmatpush1.msra.mxu0 %v3544
    %4176 = vmatprep.subr.mxu0 0.0
    %4177 = vmatpush1.msra.mxu0 0.0
    %4178 = vmatprep.subr.mxu0 0.0
    %4179 = vmatpush1.msra.mxu0 0.0
    %4180 = vmatprep.subr.mxu0 0.0
    %4181 = vmatpush1.msra.mxu0 0.0
    %4182 = vmatprep.subr.mxu0 0.0
    %4183 = vmatpush1.msra.mxu0 0.0
    %4184 = vmatprep.subr.mxu0 0.0
    %4185 = vmatpush1.msra.mxu0 0.0
    %4186 = vmatprep.subr.mxu0 0.0
    %4187 = vmatpush1.msra.mxu0 0.0
    %4188 = vmatprep.subr.mxu0 0.0
    %4189 = vmatpush1.msra.mxu0 0.0
    %4190 = vmatprep.subr.mxu0 0.0
    %4191 = vmatpush1.msra.mxu0 0.0
    %4192 = vmatprep.subr.mxu0 0.0
    %4193 = vmatpush1.msra.mxu0 0.0
    %4194 = vmatprep.subr.mxu0 0.0
    %4195 = vmatpush1.msra.mxu0 0.0
    %4196 = vmatprep.subr.mxu0 0.0
    %4197 = vmatpush1.msra.mxu0 0.0
    %4198 = vmatprep.subr.mxu0 0.0
    %4199 = vmatpush1.msra.mxu0 0.0
    %4200 = vmatprep.subr.mxu0 0.0
    %4201 = vmatpush1.msra.mxu0 0.0
    %4202 = vmatprep.subr.mxu0 0.0
    %4203 = vmatpush1.msra.mxu0 0.0
    %4204 = vmatprep.subr.mxu0 0.0
    %4205 = vmatpush1.msra.mxu0 0.0
    %4206 = vmatprep.subr.mxu0 0.0
    %4207 = vmatpush1.msra.mxu0 0.0
    %4208 = vmatprep.subr.mxu0 0.0
    %4209 = vmatpush1.msra.mxu0 0.0
    %4210 = vmatprep.subr.mxu0 0.0
    %4211 = vmatpush1.msra.mxu0 0.0
    %4212 = vmatprep.subr.mxu0 0.0
    %4213 = vmatpush1.msra.mxu0 0.0
    %4214 = vmatprep.subr.mxu0 0.0
    %4215 = vmatpush1.msra.mxu0 0.0
    %4216 = vmatprep.subr.mxu0 0.0
    %4217 = vmatpush1.msra.mxu0 0.0
    %4218 = vmatprep.subr.mxu0 0.0
    %4219 = vmatpush1.msra.mxu0 0.0
    %4220 = vmatprep.subr.mxu0 0.0
    %4221 = vmatpush1.msra.mxu0 0.0
    %4222 = vmatprep.subr.mxu0 0.0
    %4223 = vmatpush1.msra.mxu0 0.0
    %4224 = vmatprep.subr.mxu0 0.0
    %4225 = vmatpush1.msra.mxu0 0.0
    %4226 = vmatprep.subr.mxu0 0.0
    %4227 = vmatpush1.msra.mxu0 0.0
    %4228 = vmatprep.subr.mxu0 0.0
    %4229 = vmatpush1.msra.mxu0 0.0
    %4230 = vmatprep.subr.mxu0 0.0
    %4231 = vmatpush1.msra.mxu0 0.0
    %4232 = vmatprep.subr.mxu0 0.0
    %4233 = vmatpush1.msra.mxu0 0.0
    %4234 = vmatprep.subr.mxu0 0.0
    %4235 = vmatpush1.msra.mxu0 0.0
    %4236 = vmatprep.mubr.f32.mxu0 0.0
    %4237 = vmatmul.mubr.f32.gmra.mrb[0].mxu0 %v4170
    %v4238 = vpop.f32.mrb[0].mxu0
    %v4239 = vadd.f32 0.0, %v4238
    %v4240 = vpop.f32.mrb[0].mxu0
    %4241 = vdwg.mxu0
    %s4242 = scalar_lea.vmem [#allocation5], 128
    %v4243 = vld [vmem:[%s4242] sm:$0xff]
    %v4244 = vld [vmem:[%s4242 + $0x8] sm:$0xff]
    %v4245 = vld [vmem:[%s4242 + $0x10] sm:$0xff]
    %v4246 = vld [vmem:[%s4242 + $0x18] sm:$0xff]
    %v4248 = vsel %vm304, %v4239, 0
    %4250 = vmatprep.subr.mxu0 0.0
    %4251 = vmatpush1.msra.mxu0 %v4243
    %4252 = vmatprep.subr.mxu0 0.0
    %4253 = vmatpush1.msra.mxu0 %v4244
    %4254 = vmatprep.subr.mxu0 0.0
    %4255 = vmatpush1.msra.mxu0 %v4245
    %4256 = vmatprep.subr.mxu0 0.0
    %4257 = vmatpush1.msra.mxu0 %v4246
    %4258 = vmatprep.subr.mxu0 0.0
    %4259 = vmatpush1.msra.mxu0 0.0
    %4260 = vmatprep.subr.mxu0 0.0
    %4261 = vmatpush1.msra.mxu0 0.0
    %4262 = vmatprep.subr.mxu0 0.0
    %4263 = vmatpush1.msra.mxu0 0.0
    %4264 = vmatprep.subr.mxu0 0.0
    %4265 = vmatpush1.msra.mxu0 0.0
    %4266 = vmatprep.subr.mxu0 0.0
    %4267 = vmatpush1.msra.mxu0 0.0
    %4268 = vmatprep.subr.mxu0 0.0
    %4269 = vmatpush1.msra.mxu0 0.0
    %4270 = vmatprep.subr.mxu0 0.0
    %4271 = vmatpush1.msra.mxu0 0.0
    %4272 = vmatprep.subr.mxu0 0.0
    %4273 = vmatpush1.msra.mxu0 0.0
    %4274 = vmatprep.subr.mxu0 0.0
    %4275 = vmatpush1.msra.mxu0 0.0
    %4276 = vmatprep.subr.mxu0 0.0
    %4277 = vmatpush1.msra.mxu0 0.0
    %4278 = vmatprep.subr.mxu0 0.0
    %4279 = vmatpush1.msra.mxu0 0.0
    %4280 = vmatprep.subr.mxu0 0.0
    %4281 = vmatpush1.msra.mxu0 0.0
    %4282 = vmatprep.subr.mxu0 0.0
    %4283 = vmatpush1.msra.mxu0 0.0
    %4284 = vmatprep.subr.mxu0 0.0
    %4285 = vmatpush1.msra.mxu0 0.0
    %4286 = vmatprep.subr.mxu0 0.0
    %4287 = vmatpush1.msra.mxu0 0.0
    %4288 = vmatprep.subr.mxu0 0.0
    %4289 = vmatpush1.msra.mxu0 0.0
    %4290 = vmatprep.subr.mxu0 0.0
    %4291 = vmatpush1.msra.mxu0 0.0
    %4292 = vmatprep.subr.mxu0 0.0
    %4293 = vmatpush1.msra.mxu0 0.0
    %4294 = vmatprep.subr.mxu0 0.0
    %4295 = vmatpush1.msra.mxu0 0.0
    %4296 = vmatprep.subr.mxu0 0.0
    %4297 = vmatpush1.msra.mxu0 0.0
    %4298 = vmatprep.subr.mxu0 0.0
    %4299 = vmatpush1.msra.mxu0 0.0
    %4300 = vmatprep.subr.mxu0 0.0
    %4301 = vmatpush1.msra.mxu0 0.0
    %4302 = vmatprep.subr.mxu0 0.0
    %4303 = vmatpush1.msra.mxu0 0.0
    %4304 = vmatprep.subr.mxu0 0.0
    %4305 = vmatpush1.msra.mxu0 0.0
    %4306 = vmatprep.subr.mxu0 0.0
    %4307 = vmatpush1.msra.mxu0 0.0
    %4308 = vmatprep.subr.mxu0 0.0
    %4309 = vmatpush1.msra.mxu0 0.0
    %4310 = vmatprep.subr.mxu0 0.0
    %4311 = vmatpush1.msra.mxu0 0.0
    %4312 = vmatprep.subr.mxu0 0.0
    %4313 = vmatpush1.msra.mxu0 0.0
    %4314 = vmatprep.mubr.f32.mxu0 0.0
    %4315 = vmatmul.mubr.f32.gmra.mrb[0].mxu0 %v4248
    %v4316 = vpop.f32.mrb[0].mxu0
    %v4317 = vadd.f32 0.0, %v4316
    %v4318 = vpop.f32.mrb[0].mxu0
    %4319 = vdwg.mxu0
    %v4320 = vadd.f32 %v4166, %v4317
    %s4321 = scalar_lea.vmem %s11, 10
    %v4322 = vld [vmem:[%s4321] sm:$0x3]
    %v4324 = vsel %vm118, %v4322, 0
    %4326 = vmatprep.subr.mxu0 0.0
    %4327 = vmatpush1.msra.mxu0 %v3543
    %4328 = vmatprep.subr.mxu0 0.0
    %4329 = vmatpush1.msra.mxu0 %v3544
    %4330 = vmatprep.subr.mxu0 0.0
    %4331 = vmatpush1.msra.mxu0 0.0
    %4332 = vmatprep.subr.mxu0 0.0
    %4333 = vmatpush1.msra.mxu0 0.0
    %4334 = vmatprep.subr.mxu0 0.0
    %4335 = vmatpush1.msra.mxu0 0.0
    %4336 = vmatprep.subr.mxu0 0.0
    %4337 = vmatpush1.msra.mxu0 0.0
    %4338 = vmatprep.subr.mxu0 0.0
    %4339 = vmatpush1.msra.mxu0 0.0
    %4340 = vmatprep.subr.mxu0 0.0
    %4341 = vmatpush1.msra.mxu0 0.0
    %4342 = vmatprep.subr.mxu0 0.0
    %4343 = vmatpush1.msra.mxu0 0.0
    %4344 = vmatprep.subr.mxu0 0.0
    %4345 = vmatpush1.msra.mxu0 0.0
    %4346 = vmatprep.subr.mxu0 0.0
    %4347 = vmatpush1.msra.mxu0 0.0
    %4348 = vmatprep.subr.mxu0 0.0
    %4349 = vmatpush1.msra.mxu0 0.0
    %4350 = vmatprep.subr.mxu0 0.0
    %4351 = vmatpush1.msra.mxu0 0.0
    %4352 = vmatprep.subr.mxu0 0.0
    %4353 = vmatpush1.msra.mxu0 0.0
    %4354 = vmatprep.subr.mxu0 0.0
    %4355 = vmatpush1.msra.mxu0 0.0
    %4356 = vmatprep.subr.mxu0 0.0
    %4357 = vmatpush1.msra.mxu0 0.0
    %4358 = vmatprep.subr.mxu0 0.0
    %4359 = vmatpush1.msra.mxu0 0.0
    %4360 = vmatprep.subr.mxu0 0.0
    %4361 = vmatpush1.msra.mxu0 0.0
    %4362 = vmatprep.subr.mxu0 0.0
    %4363 = vmatpush1.msra.mxu0 0.0
    %4364 = vmatprep.subr.mxu0 0.0
    %4365 = vmatpush1.msra.mxu0 0.0
    %4366 = vmatprep.subr.mxu0 0.0
    %4367 = vmatpush1.msra.mxu0 0.0
    %4368 = vmatprep.subr.mxu0 0.0
    %4369 = vmatpush1.msra.mxu0 0.0
    %4370 = vmatprep.subr.mxu0 0.0
    %4371 = vmatpush1.msra.mxu0 0.0
    %4372 = vmatprep.subr.mxu0 0.0
    %4373 = vmatpush1.msra.mxu0 0.0
    %4374 = vmatprep.subr.mxu0 0.0
    %4375 = vmatpush1.msra.mxu0 0.0
    %4376 = vmatprep.subr.mxu0 0.0
    %4377 = vmatpush1.msra.mxu0 0.0
    %4378 = vmatprep.subr.mxu0 0.0
    %4379 = vmatpush1.msra.mxu0 0.0
    %4380 = vmatprep.subr.mxu0 0.0
    %4381 = vmatpush1.msra.mxu0 0.0
    %4382 = vmatprep.subr.mxu0 0.0
    %4383 = vmatpush1.msra.mxu0 0.0
    %4384 = vmatprep.subr.mxu0 0.0
    %4385 = vmatpush1.msra.mxu0 0.0
    %4386 = vmatprep.subr.mxu0 0.0
    %4387 = vmatpush1.msra.mxu0 0.0
    %4388 = vmatprep.subr.mxu0 0.0
    %4389 = vmatpush1.msra.mxu0 0.0
    %4390 = vmatprep.mubr.f32.mxu0 0.0
    %4391 = vmatmul.mubr.f32.gmra.mrb[0].mxu0 %v4324
    %v4392 = vpop.f32.mrb[0].mxu0
    %v4393 = vadd.f32 0.0, %v4392
    %v4394 = vpop.f32.mrb[0].mxu0
    %4395 = vdwg.mxu0
    %s4396 = scalar_lea.vmem [#allocation5], 160
    %v4397 = vld [vmem:[%s4396] sm:$0xff]
    %v4398 = vld [vmem:[%s4396 + $0x8] sm:$0xff]
    %v4399 = vld [vmem:[%s4396 + $0x10] sm:$0xff]
    %v4400 = vld [vmem:[%s4396 + $0x18] sm:$0xff]
    %v4402 = vsel %vm304, %v4393, 0
    %4404 = vmatprep.subr.mxu0 0.0
    %4405 = vmatpush1.msra.mxu0 %v4397
    %4406 = vmatprep.subr.mxu0 0.0
    %4407 = vmatpush1.msra.mxu0 %v4398
    %4408 = vmatprep.subr.mxu0 0.0
    %4409 = vmatpush1.msra.mxu0 %v4399
    %4410 = vmatprep.subr.mxu0 0.0
    %4411 = vmatpush1.msra.mxu0 %v4400
    %4412 = vmatprep.subr.mxu0 0.0
    %4413 = vmatpush1.msra.mxu0 0.0
    %4414 = vmatprep.subr.mxu0 0.0
    %4415 = vmatpush1.msra.mxu0 0.0
    %4416 = vmatprep.subr.mxu0 0.0
    %4417 = vmatpush1.msra.mxu0 0.0
    %4418 = vmatprep.subr.mxu0 0.0
    %4419 = vmatpush1.msra.mxu0 0.0
    %4420 = vmatprep.subr.mxu0 0.0
    %4421 = vmatpush1.msra.mxu0 0.0
    %4422 = vmatprep.subr.mxu0 0.0
    %4423 = vmatpush1.msra.mxu0 0.0
    %4424 = vmatprep.subr.mxu0 0.0
    %4425 = vmatpush1.msra.mxu0 0.0
    %4426 = vmatprep.subr.mxu0 0.0
    %4427 = vmatpush1.msra.mxu0 0.0
    %4428 = vmatprep.subr.mxu0 0.0
    %4429 = vmatpush1.msra.mxu0 0.0
    %4430 = vmatprep.subr.mxu0 0.0
    %4431 = vmatpush1.msra.mxu0 0.0
    %4432 = vmatprep.subr.mxu0 0.0
    %4433 = vmatpush1.msra.mxu0 0.0
    %4434 = vmatprep.subr.mxu0 0.0
    %4435 = vmatpush1.msra.mxu0 0.0
    %4436 = vmatprep.subr.mxu0 0.0
    %4437 = vmatpush1.msra.mxu0 0.0
    %4438 = vmatprep.subr.mxu0 0.0
    %4439 = vmatpush1.msra.mxu0 0.0
    %4440 = vmatprep.subr.mxu0 0.0
    %4441 = vmatpush1.msra.mxu0 0.0
    %4442 = vmatprep.subr.mxu0 0.0
    %4443 = vmatpush1.msra.mxu0 0.0
    %4444 = vmatprep.subr.mxu0 0.0
    %4445 = vmatpush1.msra.mxu0 0.0
    %4446 = vmatprep.subr.mxu0 0.0
    %4447 = vmatpush1.msra.mxu0 0.0
    %4448 = vmatprep.subr.mxu0 0.0
    %4449 = vmatpush1.msra.mxu0 0.0
    %4450 = vmatprep.subr.mxu0 0.0
    %4451 = vmatpush1.msra.mxu0 0.0
    %4452 = vmatprep.subr.mxu0 0.0
    %4453 = vmatpush1.msra.mxu0 0.0
    %4454 = vmatprep.subr.mxu0 0.0
    %4455 = vmatpush1.msra.mxu0 0.0
    %4456 = vmatprep.subr.mxu0 0.0
    %4457 = vmatpush1.msra.mxu0 0.0
    %4458 = vmatprep.subr.mxu0 0.0
    %4459 = vmatpush1.msra.mxu0 0.0
    %4460 = vmatprep.subr.mxu0 0.0
    %4461 = vmatpush1.msra.mxu0 0.0
    %4462 = vmatprep.subr.mxu0 0.0
    %4463 = vmatpush1.msra.mxu0 0.0
    %4464 = vmatprep.subr.mxu0 0.0
    %4465 = vmatpush1.msra.mxu0 0.0
    %4466 = vmatprep.subr.mxu0 0.0
    %4467 = vmatpush1.msra.mxu0 0.0
    %4468 = vmatprep.mubr.f32.mxu0 0.0
    %4469 = vmatmul.mubr.f32.gmra.mrb[0].mxu0 %v4402
    %v4470 = vpop.f32.mrb[0].mxu0
    %v4471 = vadd.f32 0.0, %v4470
    %v4472 = vpop.f32.mrb[0].mxu0
    %4473 = vdwg.mxu0
    %v4474 = vadd.f32 %v4320, %v4471
    %s4475 = scalar_lea.vmem %s11, 12
    %v4476 = vld [vmem:[%s4475] sm:$0x3]
    %v4478 = vsel %vm118, %v4476, 0
    %4480 = vmatprep.subr.mxu0 0.0
    %4481 = vmatpush1.msra.mxu0 %v3543
    %4482 = vmatprep.subr.mxu0 0.0
    %4483 = vmatpush1.msra.mxu0 %v3544
    %4484 = vmatprep.subr.mxu0 0.0
    %4485 = vmatpush1.msra.mxu0 0.0
    %4486 = vmatprep.subr.mxu0 0.0
    %4487 = vmatpush1.msra.mxu0 0.0
    %4488 = vmatprep.subr.mxu0 0.0
    %4489 = vmatpush1.msra.mxu0 0.0
    %4490 = vmatprep.subr.mxu0 0.0
    %4491 = vmatpush1.msra.mxu0 0.0
    %4492 = vmatprep.subr.mxu0 0.0
    %4493 = vmatpush1.msra.mxu0 0.0
    %4494 = vmatprep.subr.mxu0 0.0
    %4495 = vmatpush1.msra.mxu0 0.0
    %4496 = vmatprep.subr.mxu0 0.0
    %4497 = vmatpush1.msra.mxu0 0.0
    %4498 = vmatprep.subr.mxu0 0.0
    %4499 = vmatpush1.msra.mxu0 0.0
    %4500 = vmatprep.subr.mxu0 0.0
    %4501 = vmatpush1.msra.mxu0 0.0
    %4502 = vmatprep.subr.mxu0 0.0
    %4503 = vmatpush1.msra.mxu0 0.0
    %4504 = vmatprep.subr.mxu0 0.0
    %4505 = vmatpush1.msra.mxu0 0.0
    %4506 = vmatprep.subr.mxu0 0.0
    %4507 = vmatpush1.msra.mxu0 0.0
    %4508 = vmatprep.subr.mxu0 0.0
    %4509 = vmatpush1.msra.mxu0 0.0
    %4510 = vmatprep.subr.mxu0 0.0
    %4511 = vmatpush1.msra.mxu0 0.0
    %4512 = vmatprep.subr.mxu0 0.0
    %4513 = vmatpush1.msra.mxu0 0.0
    %4514 = vmatprep.subr.mxu0 0.0
    %4515 = vmatpush1.msra.mxu0 0.0
    %4516 = vmatprep.subr.mxu0 0.0
    %4517 = vmatpush1.msra.mxu0 0.0
    %4518 = vmatprep.subr.mxu0 0.0
    %4519 = vmatpush1.msra.mxu0 0.0
    %4520 = vmatprep.subr.mxu0 0.0
    %4521 = vmatpush1.msra.mxu0 0.0
    %4522 = vmatprep.subr.mxu0 0.0
    %4523 = vmatpush1.msra.mxu0 0.0
    %4524 = vmatprep.subr.mxu0 0.0
    %4525 = vmatpush1.msra.mxu0 0.0
    %4526 = vmatprep.subr.mxu0 0.0
    %4527 = vmatpush1.msra.mxu0 0.0
    %4528 = vmatprep.subr.mxu0 0.0
    %4529 = vmatpush1.msra.mxu0 0.0
    %4530 = vmatprep.subr.mxu0 0.0
    %4531 = vmatpush1.msra.mxu0 0.0
    %4532 = vmatprep.subr.mxu0 0.0
    %4533 = vmatpush1.msra.mxu0 0.0
    %4534 = vmatprep.subr.mxu0 0.0
    %4535 = vmatpush1.msra.mxu0 0.0
    %4536 = vmatprep.subr.mxu0 0.0
    %4537 = vmatpush1.msra.mxu0 0.0
    %4538 = vmatprep.subr.mxu0 0.0
    %4539 = vmatpush1.msra.mxu0 0.0
    %4540 = vmatprep.subr.mxu0 0.0
    %4541 = vmatpush1.msra.mxu0 0.0
    %4542 = vmatprep.subr.mxu0 0.0
    %4543 = vmatpush1.msra.mxu0 0.0
    %4544 = vmatprep.mubr.f32.mxu0 0.0
    %4545 = vmatmul.mubr.f32.gmra.mrb[0].mxu0 %v4478
    %v4546 = vpop.f32.mrb[0].mxu0
    %v4547 = vadd.f32 0.0, %v4546
    %v4548 = vpop.f32.mrb[0].mxu0
    %4549 = vdwg.mxu0
    %s4550 = scalar_lea.vmem [#allocation5], 192
    %v4551 = vld [vmem:[%s4550] sm:$0xff]
    %v4552 = vld [vmem:[%s4550 + $0x8] sm:$0xff]
    %v4553 = vld [vmem:[%s4550 + $0x10] sm:$0xff]
    %v4554 = vld [vmem:[%s4550 + $0x18] sm:$0xff]
    %v4556 = vsel %vm304, %v4547, 0
    %4558 = vmatprep.subr.mxu0 0.0
    %4559 = vmatpush1.msra.mxu0 %v4551
    %4560 = vmatprep.subr.mxu0 0.0
    %4561 = vmatpush1.msra.mxu0 %v4552
    %4562 = vmatprep.subr.mxu0 0.0
    %4563 = vmatpush1.msra.mxu0 %v4553
    %4564 = vmatprep.subr.mxu0 0.0
    %4565 = vmatpush1.msra.mxu0 %v4554
    %4566 = vmatprep.subr.mxu0 0.0
    %4567 = vmatpush1.msra.mxu0 0.0
    %4568 = vmatprep.subr.mxu0 0.0
    %4569 = vmatpush1.msra.mxu0 0.0
    %4570 = vmatprep.subr.mxu0 0.0
    %4571 = vmatpush1.msra.mxu0 0.0
    %4572 = vmatprep.subr.mxu0 0.0
    %4573 = vmatpush1.msra.mxu0 0.0
    %4574 = vmatprep.subr.mxu0 0.0
    %4575 = vmatpush1.msra.mxu0 0.0
    %4576 = vmatprep.subr.mxu0 0.0
    %4577 = vmatpush1.msra.mxu0 0.0
    %4578 = vmatprep.subr.mxu0 0.0
    %4579 = vmatpush1.msra.mxu0 0.0
    %4580 = vmatprep.subr.mxu0 0.0
    %4581 = vmatpush1.msra.mxu0 0.0
    %4582 = vmatprep.subr.mxu0 0.0
    %4583 = vmatpush1.msra.mxu0 0.0
    %4584 = vmatprep.subr.mxu0 0.0
    %4585 = vmatpush1.msra.mxu0 0.0
    %4586 = vmatprep.subr.mxu0 0.0
    %4587 = vmatpush1.msra.mxu0 0.0
    %4588 = vmatprep.subr.mxu0 0.0
    %4589 = vmatpush1.msra.mxu0 0.0
    %4590 = vmatprep.subr.mxu0 0.0
    %4591 = vmatpush1.msra.mxu0 0.0
    %4592 = vmatprep.subr.mxu0 0.0
    %4593 = vmatpush1.msra.mxu0 0.0
    %4594 = vmatprep.subr.mxu0 0.0
    %4595 = vmatpush1.msra.mxu0 0.0
    %4596 = vmatprep.subr.mxu0 0.0
    %4597 = vmatpush1.msra.mxu0 0.0
    %4598 = vmatprep.subr.mxu0 0.0
    %4599 = vmatpush1.msra.mxu0 0.0
    %4600 = vmatprep.subr.mxu0 0.0
    %4601 = vmatpush1.msra.mxu0 0.0
    %4602 = vmatprep.subr.mxu0 0.0
    %4603 = vmatpush1.msra.mxu0 0.0
    %4604 = vmatprep.subr.mxu0 0.0
    %4605 = vmatpush1.msra.mxu0 0.0
    %4606 = vmatprep.subr.mxu0 0.0
    %4607 = vmatpush1.msra.mxu0 0.0
    %4608 = vmatprep.subr.mxu0 0.0
    %4609 = vmatpush1.msra.mxu0 0.0
    %4610 = vmatprep.subr.mxu0 0.0
    %4611 = vmatpush1.msra.mxu0 0.0
    %4612 = vmatprep.subr.mxu0 0.0
    %4613 = vmatpush1.msra.mxu0 0.0
    %4614 = vmatprep.subr.mxu0 0.0
    %4615 = vmatpush1.msra.mxu0 0.0
    %4616 = vmatprep.subr.mxu0 0.0
    %4617 = vmatpush1.msra.mxu0 0.0
    %4618 = vmatprep.subr.mxu0 0.0
    %4619 = vmatpush1.msra.mxu0 0.0
    %4620 = vmatprep.subr.mxu0 0.0
    %4621 = vmatpush1.msra.mxu0 0.0
    %4622 = vmatprep.mubr.f32.mxu0 0.0
    %4623 = vmatmul.mubr.f32.gmra.mrb[0].mxu0 %v4556
    %v4624 = vpop.f32.mrb[0].mxu0
    %v4625 = vadd.f32 0.0, %v4624
    %v4626 = vpop.f32.mrb[0].mxu0
    %4627 = vdwg.mxu0
    %v4628 = vadd.f32 %v4474, %v4625
    %s4629 = scalar_lea.vmem %s11, 14
    %v4630 = vld [vmem:[%s4629] sm:$0x3]
    %v4632 = vsel %vm118, %v4630, 0
    %4634 = vmatprep.subr.mxu0 0.0
    %4635 = vmatpush1.msra.mxu0 %v3543
    %4636 = vmatprep.subr.mxu0 0.0
    %4637 = vmatpush1.msra.mxu0 %v3544
    %4638 = vmatprep.subr.mxu0 0.0
    %4639 = vmatpush1.msra.mxu0 0.0
    %4640 = vmatprep.subr.mxu0 0.0
    %4641 = vmatpush1.msra.mxu0 0.0
    %4642 = vmatprep.subr.mxu0 0.0
    %4643 = vmatpush1.msra.mxu0 0.0
    %4644 = vmatprep.subr.mxu0 0.0
    %4645 = vmatpush1.msra.mxu0 0.0
    %4646 = vmatprep.subr.mxu0 0.0
    %4647 = vmatpush1.msra.mxu0 0.0
    %4648 = vmatprep.subr.mxu0 0.0
    %4649 = vmatpush1.msra.mxu0 0.0
    %4650 = vmatprep.subr.mxu0 0.0
    %4651 = vmatpush1.msra.mxu0 0.0
    %4652 = vmatprep.subr.mxu0 0.0
    %4653 = vmatpush1.msra.mxu0 0.0
    %4654 = vmatprep.subr.mxu0 0.0
    %4655 = vmatpush1.msra.mxu0 0.0
    %4656 = vmatprep.subr.mxu0 0.0
    %4657 = vmatpush1.msra.mxu0 0.0
    %4658 = vmatprep.subr.mxu0 0.0
    %4659 = vmatpush1.msra.mxu0 0.0
    %4660 = vmatprep.subr.mxu0 0.0
    %4661 = vmatpush1.msra.mxu0 0.0
    %4662 = vmatprep.subr.mxu0 0.0
    %4663 = vmatpush1.msra.mxu0 0.0
    %4664 = vmatprep.subr.mxu0 0.0
    %4665 = vmatpush1.msra.mxu0 0.0
    %4666 = vmatprep.subr.mxu0 0.0
    %4667 = vmatpush1.msra.mxu0 0.0
    %4668 = vmatprep.subr.mxu0 0.0
    %4669 = vmatpush1.msra.mxu0 0.0
    %4670 = vmatprep.subr.mxu0 0.0
    %4671 = vmatpush1.msra.mxu0 0.0
    %4672 = vmatprep.subr.mxu0 0.0
    %4673 = vmatpush1.msra.mxu0 0.0
    %4674 = vmatprep.subr.mxu0 0.0
    %4675 = vmatpush1.msra.mxu0 0.0
    %4676 = vmatprep.subr.mxu0 0.0
    %4677 = vmatpush1.msra.mxu0 0.0
    %4678 = vmatprep.subr.mxu0 0.0
    %4679 = vmatpush1.msra.mxu0 0.0
    %4680 = vmatprep.subr.mxu0 0.0
    %4681 = vmatpush1.msra.mxu0 0.0
    %4682 = vmatprep.subr.mxu0 0.0
    %4683 = vmatpush1.msra.mxu0 0.0
    %4684 = vmatprep.subr.mxu0 0.0
    %4685 = vmatpush1.msra.mxu0 0.0
    %4686 = vmatprep.subr.mxu0 0.0
    %4687 = vmatpush1.msra.mxu0 0.0
    %4688 = vmatprep.subr.mxu0 0.0
    %4689 = vmatpush1.msra.mxu0 0.0
    %4690 = vmatprep.subr.mxu0 0.0
    %4691 = vmatpush1.msra.mxu0 0.0
    %4692 = vmatprep.subr.mxu0 0.0
    %4693 = vmatpush1.msra.mxu0 0.0
    %4694 = vmatprep.subr.mxu0 0.0
    %4695 = vmatpush1.msra.mxu0 0.0
    %4696 = vmatprep.subr.mxu0 0.0
    %4697 = vmatpush1.msra.mxu0 0.0
    %4698 = vmatprep.mubr.f32.mxu0 0.0
    %4699 = vmatmul.mubr.f32.gmra.mrb[0].mxu0 %v4632
    %v4700 = vpop.f32.mrb[0].mxu0
    %v4701 = vadd.f32 0.0, %v4700
    %v4702 = vpop.f32.mrb[0].mxu0
    %4703 = vdwg.mxu0
    %s4704 = scalar_lea.vmem [#allocation5], 224
    %v4705 = vld [vmem:[%s4704] sm:$0xff]
    %v4706 = vld [vmem:[%s4704 + $0x8] sm:$0xff]
    %v4707 = vld [vmem:[%s4704 + $0x10] sm:$0xff]
    %v4708 = vld [vmem:[%s4704 + $0x18] sm:$0xff]
    %v4710 = vsel %vm304, %v4701, 0
    %4712 = vmatprep.subr.mxu0 0.0
    %4713 = vmatpush1.msra.mxu0 %v4705
    %4714 = vmatprep.subr.mxu0 0.0
    %4715 = vmatpush1.msra.mxu0 %v4706
    %4716 = vmatprep.subr.mxu0 0.0
    %4717 = vmatpush1.msra.mxu0 %v4707
    %4718 = vmatprep.subr.mxu0 0.0
    %4719 = vmatpush1.msra.mxu0 %v4708
    %4720 = vmatprep.subr.mxu0 0.0
    %4721 = vmatpush1.msra.mxu0 0.0
    %4722 = vmatprep.subr.mxu0 0.0
    %4723 = vmatpush1.msra.mxu0 0.0
    %4724 = vmatprep.subr.mxu0 0.0
    %4725 = vmatpush1.msra.mxu0 0.0
    %4726 = vmatprep.subr.mxu0 0.0
    %4727 = vmatpush1.msra.mxu0 0.0
    %4728 = vmatprep.subr.mxu0 0.0
    %4729 = vmatpush1.msra.mxu0 0.0
    %4730 = vmatprep.subr.mxu0 0.0
    %4731 = vmatpush1.msra.mxu0 0.0
    %4732 = vmatprep.subr.mxu0 0.0
    %4733 = vmatpush1.msra.mxu0 0.0
    %4734 = vmatprep.subr.mxu0 0.0
    %4735 = vmatpush1.msra.mxu0 0.0
    %4736 = vmatprep.subr.mxu0 0.0
    %4737 = vmatpush1.msra.mxu0 0.0
    %4738 = vmatprep.subr.mxu0 0.0
    %4739 = vmatpush1.msra.mxu0 0.0
    %4740 = vmatprep.subr.mxu0 0.0
    %4741 = vmatpush1.msra.mxu0 0.0
    %4742 = vmatprep.subr.mxu0 0.0
    %4743 = vmatpush1.msra.mxu0 0.0
    %4744 = vmatprep.subr.mxu0 0.0
    %4745 = vmatpush1.msra.mxu0 0.0
    %4746 = vmatprep.subr.mxu0 0.0
    %4747 = vmatpush1.msra.mxu0 0.0
    %4748 = vmatprep.subr.mxu0 0.0
    %4749 = vmatpush1.msra.mxu0 0.0
    %4750 = vmatprep.subr.mxu0 0.0
    %4751 = vmatpush1.msra.mxu0 0.0
    %4752 = vmatprep.subr.mxu0 0.0
    %4753 = vmatpush1.msra.mxu0 0.0
    %4754 = vmatprep.subr.mxu0 0.0
    %4755 = vmatpush1.msra.mxu0 0.0
    %4756 = vmatprep.subr.mxu0 0.0
    %4757 = vmatpush1.msra.mxu0 0.0
    %4758 = vmatprep.subr.mxu0 0.0
    %4759 = vmatpush1.msra.mxu0 0.0
    %4760 = vmatprep.subr.mxu0 0.0
    %4761 = vmatpush1.msra.mxu0 0.0
    %4762 = vmatprep.subr.mxu0 0.0
    %4763 = vmatpush1.msra.mxu0 0.0
    %4764 = vmatprep.subr.mxu0 0.0
    %4765 = vmatpush1.msra.mxu0 0.0
    %4766 = vmatprep.subr.mxu0 0.0
    %4767 = vmatpush1.msra.mxu0 0.0
    %4768 = vmatprep.subr.mxu0 0.0
    %4769 = vmatpush1.msra.mxu0 0.0
    %4770 = vmatprep.subr.mxu0 0.0
    %4771 = vmatpush1.msra.mxu0 0.0
    %4772 = vmatprep.subr.mxu0 0.0
    %4773 = vmatpush1.msra.mxu0 0.0
    %4774 = vmatprep.subr.mxu0 0.0
    %4775 = vmatpush1.msra.mxu0 0.0
    %4776 = vmatprep.mubr.f32.mxu0 0.0
    %4777 = vmatmul.mubr.f32.gmra.mrb[0].mxu0 %v4710
    %v4778 = vpop.f32.mrb[0].mxu0
    %v4779 = vadd.f32 0.0, %v4778
    %v4780 = vpop.f32.mrb[0].mxu0
    %4781 = vdwg.mxu0
    %v4782 = vadd.f32 %v4628, %v4779
    %v4783 = vmax.f32 %v4782, 0.0
    %v4784 = vld [vmem:[%s14] sm:$0xff]
    %v4785 = vld [vmem:[%s14 + $0x8] sm:$0xff]
    %v4786 = vld [vmem:[%s14 + $0x10] sm:$0xff]
    %v4787 = vld [vmem:[%s14 + $0x18] sm:$0xff]
    %v4788 = vld [vmem:[%s15] sm:$0x1]
    %v4790 = vlaneseq
    %v4791 = vshrl.u32 %v4790, 7
    %v4792 = vsub.s32 0, %v4791
    %v4793 = vrot.slane %v4788, %v4792
    %v4796 = vsel %vm304, %v4783, 0
    %4798 = vmatprep.subr.mxu0 0.0
    %4799 = vmatpush1.msra.mxu0 %v4784
    %4800 = vmatprep.subr.mxu0 0.0
    %4801 = vmatpush1.msra.mxu0 %v4785
    %4802 = vmatprep.subr.mxu0 0.0
    %4803 = vmatpush1.msra.mxu0 %v4786
    %4804 = vmatprep.subr.mxu0 0.0
    %4805 = vmatpush1.msra.mxu0 %v4787
    %4806 = vmatprep.subr.mxu0 0.0
    %4807 = vmatpush1.msra.mxu0 0.0
    %4808 = vmatprep.subr.mxu0 0.0
    %4809 = vmatpush1.msra.mxu0 0.0
    %4810 = vmatprep.subr.mxu0 0.0
    %4811 = vmatpush1.msra.mxu0 0.0
    %4812 = vmatprep.subr.mxu0 0.0
    %4813 = vmatpush1.msra.mxu0 0.0
    %4814 = vmatprep.subr.mxu0 0.0
    %4815 = vmatpush1.msra.mxu0 0.0
    %4816 = vmatprep.subr.mxu0 0.0
    %4817 = vmatpush1.msra.mxu0 0.0
    %4818 = vmatprep.subr.mxu0 0.0
    %4819 = vmatpush1.msra.mxu0 0.0
    %4820 = vmatprep.subr.mxu0 0.0
    %4821 = vmatpush1.msra.mxu0 0.0
    %4822 = vmatprep.subr.mxu0 0.0
    %4823 = vmatpush1.msra.mxu0 0.0
    %4824 = vmatprep.subr.mxu0 0.0
    %4825 = vmatpush1.msra.mxu0 0.0
    %4826 = vmatprep.subr.mxu0 0.0
    %4827 = vmatpush1.msra.mxu0 0.0
    %4828 = vmatprep.subr.mxu0 0.0
    %4829 = vmatpush1.msra.mxu0 0.0
    %4830 = vmatprep.subr.mxu0 0.0
    %4831 = vmatpush1.msra.mxu0 0.0
    %4832 = vmatprep.subr.mxu0 0.0
    %4833 = vmatpush1.msra.mxu0 0.0
    %4834 = vmatprep.subr.mxu0 0.0
    %4835 = vmatpush1.msra.mxu0 0.0
    %4836 = vmatprep.subr.mxu0 0.0
    %4837 = vmatpush1.msra.mxu0 0.0
    %4838 = vmatprep.subr.mxu0 0.0
    %4839 = vmatpush1.msra.mxu0 0.0
    %4840 = vmatprep.subr.mxu0 0.0
    %4841 = vmatpush1.msra.mxu0 0.0
    %4842 = vmatprep.subr.mxu0 0.0
    %4843 = vmatpush1.msra.mxu0 0.0
    %4844 = vmatprep.subr.mxu0 0.0
    %4845 = vmatpush1.msra.mxu0 0.0
    %4846 = vmatprep.subr.mxu0 0.0
    %4847 = vmatpush1.msra.mxu0 0.0
    %4848 = vmatprep.subr.mxu0 0.0
    %4849 = vmatpush1.msra.mxu0 0.0
    %4850 = vmatprep.subr.mxu0 0.0
    %4851 = vmatpush1.msra.mxu0 0.0
    %4852 = vmatprep.subr.mxu0 0.0
    %4853 = vmatpush1.msra.mxu0 0.0
    %4854 = vmatprep.subr.mxu0 0.0
    %4855 = vmatpush1.msra.mxu0 0.0
    %4856 = vmatprep.subr.mxu0 0.0
    %4857 = vmatpush1.msra.mxu0 0.0
    %4858 = vmatprep.subr.mxu0 0.0
    %4859 = vmatpush1.msra.mxu0 0.0
    %4860 = vmatprep.subr.mxu0 0.0
    %4861 = vmatpush1.msra.mxu0 0.0
    %4862 = vmatprep.mubr.f32.mxu0 0.0
    %4863 = vmatmul.mubr.f32.gmra.mrb[0].mxu0 %v4796
    %v4864 = vpop.f32.mrb[0].mxu0
    %v4865 = vadd.f32 %v4793, %v4864
    %v4866 = vpop.f32.mrb[0].mxu0
    %4867 = vdwg.mxu0
    %v4868 = vmax.f32 %v4865, 0.0
    %v4869 = vld [vmem:[%s16] sm:$0xff]
    %v4870 = vld [vmem:[%s16 + $0x8] sm:$0xff]
    %v4871 = vld [vmem:[%s16 + $0x10] sm:$0xff]
    %v4872 = vld [vmem:[%s16 + $0x18] sm:$0xff]
    %v4873 = vld [vmem:[%s17] sm:$0x1]
    %v4875 = vlaneseq
    %v4876 = vshrl.u32 %v4875, 7
    %v4877 = vsub.s32 0, %v4876
    %v4878 = vrot.slane %v4873, %v4877
    %v4881 = vsel %vm304, %v4868, 0
    %4883 = vmatprep.subr.mxu0 0.0
    %4884 = vmatpush1.msra.mxu0 %v4869
    %4885 = vmatprep.subr.mxu0 0.0
    %4886 = vmatpush1.msra.mxu0 %v4870
    %4887 = vmatprep.subr.mxu0 0.0
    %4888 = vmatpush1.msra.mxu0 %v4871
    %4889 = vmatprep.subr.mxu0 0.0
    %4890 = vmatpush1.msra.mxu0 %v4872
    %4891 = vmatprep.subr.mxu0 0.0
    %4892 = vmatpush1.msra.mxu0 0.0
    %4893 = vmatprep.subr.mxu0 0.0
    %4894 = vmatpush1.msra.mxu0 0.0
    %4895 = vmatprep.subr.mxu0 0.0
    %4896 = vmatpush1.msra.mxu0 0.0
    %4897 = vmatprep.subr.mxu0 0.0
    %4898 = vmatpush1.msra.mxu0 0.0
    %4899 = vmatprep.subr.mxu0 0.0
    %4900 = vmatpush1.msra.mxu0 0.0
    %4901 = vmatprep.subr.mxu0 0.0
    %4902 = vmatpush1.msra.mxu0 0.0
    %4903 = vmatprep.subr.mxu0 0.0
    %4904 = vmatpush1.msra.mxu0 0.0
    %4905 = vmatprep.subr.mxu0 0.0
    %4906 = vmatpush1.msra.mxu0 0.0
    %4907 = vmatprep.subr.mxu0 0.0
    %4908 = vmatpush1.msra.mxu0 0.0
    %4909 = vmatprep.subr.mxu0 0.0
    %4910 = vmatpush1.msra.mxu0 0.0
    %4911 = vmatprep.subr.mxu0 0.0
    %4912 = vmatpush1.msra.mxu0 0.0
    %4913 = vmatprep.subr.mxu0 0.0
    %4914 = vmatpush1.msra.mxu0 0.0
    %4915 = vmatprep.subr.mxu0 0.0
    %4916 = vmatpush1.msra.mxu0 0.0
    %4917 = vmatprep.subr.mxu0 0.0
    %4918 = vmatpush1.msra.mxu0 0.0
    %4919 = vmatprep.subr.mxu0 0.0
    %4920 = vmatpush1.msra.mxu0 0.0
    %4921 = vmatprep.subr.mxu0 0.0
    %4922 = vmatpush1.msra.mxu0 0.0
    %4923 = vmatprep.subr.mxu0 0.0
    %4924 = vmatpush1.msra.mxu0 0.0
    %4925 = vmatprep.subr.mxu0 0.0
    %4926 = vmatpush1.msra.mxu0 0.0
    %4927 = vmatprep.subr.mxu0 0.0
    %4928 = vmatpush1.msra.mxu0 0.0
    %4929 = vmatprep.subr.mxu0 0.0
    %4930 = vmatpush1.msra.mxu0 0.0
    %4931 = vmatprep.subr.mxu0 0.0
    %4932 = vmatpush1.msra.mxu0 0.0
    %4933 = vmatprep.subr.mxu0 0.0
    %4934 = vmatpush1.msra.mxu0 0.0
    %4935 = vmatprep.subr.mxu0 0.0
    %4936 = vmatpush1.msra.mxu0 0.0
    %4937 = vmatprep.subr.mxu0 0.0
    %4938 = vmatpush1.msra.mxu0 0.0
    %4939 = vmatprep.subr.mxu0 0.0
    %4940 = vmatpush1.msra.mxu0 0.0
    %4941 = vmatprep.subr.mxu0 0.0
    %4942 = vmatpush1.msra.mxu0 0.0
    %4943 = vmatprep.subr.mxu0 0.0
    %4944 = vmatpush1.msra.mxu0 0.0
    %4945 = vmatprep.subr.mxu0 0.0
    %4946 = vmatpush1.msra.mxu0 0.0
    %4947 = vmatprep.mubr.f32.mxu0 0.0
    %4948 = vmatmul.mubr.f32.gmra.mrb[0].mxu0 %v4881
    %v4949 = vpop.f32.mrb[0].mxu0
    %v4950 = vadd.f32 %v4878, %v4949
    %v4951 = vpop.f32.mrb[0].mxu0
    %4952 = vdwg.mxu0
    %v4953 = vsub.f32 0.0, %v4950
    %v4954 = vmul.f32 %v4953, 1.442695
    %v4955 = vpow.pop %v4954
    %v4956 = vadd.f32 %v4955, 1.0
    %v4957 = vrcp.pop %v4956
    %v4958 = vmul.f32 1.0, %v4957
    %vm4959 = vcmask 58368
    %4960 = vst.msk [vmem:[#allocation7] sm:$0x3] %vm4959, %v4958
    // Predicated region
    $region82: #{tpu_custom_call.1} parent=1 // pred_check
      _
    $region83: #{tpu_custom_call.1} parent=1 // pred_check_branch
      %4962 = sbr.rel (0) target = $region85
    $region84: #{tpu_custom_call.1} parent=1 // pred_region
      %s4964 = ssub.s32 32, 32
      %4965 = vsyncadd [#allocation4], %s4964
      %s4967 = sshll.u32 [#allocation7], 4
      %s4968 = int_to_ptr.vmem [resolvable:$true] %s4967
      %4970 = dma.vmem_to_hbm [thread:$0]  %s4968, 32, %s18, [#allocation4]
    $region85: #{tpu_custom_call.1} parent=1 // pred_fallthru
      _
    // Predicated region
    $region86: #{tpu_custom_call.1} parent=1 // pred_check
      _
    $region87: #{tpu_custom_call.1} parent=1 // pred_check_branch
      %4972 = sbr.rel (0) target = $region89
    $region88: #{tpu_custom_call.1} parent=1 // pred_region
      %4973 = dma.done [#allocation4], 32
    $region89: #{tpu_custom_call.1} parent=1 // pred_fallthru
      _
    %4974 = vsyncpa [#allocation3], 1
    %4975 = vsyncpa [#allocation6], 1
    %4976 = vsyncpa [#allocation4], 1

</llo_original>
